<compile_context>
chip_gen: v6e
topology: v6e:2x2x1
jax: 0.10.0
libtpu: 0.0.40
codegen_flags: <defaults>
</compile_context>

<pallas_src>
import functools

import jax
import jax.numpy as jnp
from jax.experimental import pallas as pl
from jax.experimental.pallas import tpu as pltpu


def lstm_kernel(*refs, num_layers, hidden, seq, batch):
    """refs = (x2d, h0, c0, [wih_T, whh_T, b] * L, wlin, blin,   # inputs
               out, hn, cn)                                      # outputs

    x2d:  (S*B, I)    time-major input, flattened (row t*B + b <-> timestep t, batch b)
    h0, c0: (L, B, H) initial hidden / cell
    wih_T: (in_l, 4H)  whh_T: (H, 4H)  b: (1, 4H) (= b_ih + b_hh), gate order [i,f,o,g]
    wlin: (H, 1)  blin: (1, 1)
    out: (B, 1)   hn, cn: (L, B, H)
    """
    L, H, B, S = num_layers, hidden, batch, seq
    x_ref, h0_ref, c0_ref = refs[0:3]
    layer_refs = refs[3:3 + 3 * L]
    wlin_ref, blin_ref = refs[3 + 3 * L], refs[4 + 3 * L]
    out_ref, hn_ref, cn_ref = refs[5 + 3 * L], refs[6 + 3 * L], refs[7 + 3 * L]

    wih = [layer_refs[3 * l][...] for l in range(L)]        # (in_l, 4H)
    whh = [layer_refs[3 * l + 1][...] for l in range(L)]    # (H, 4H)
    bias = [layer_refs[3 * l + 2][...] for l in range(L)]   # (1, 4H)

    # ---- layer 0: hoisted input projection, one big MXU pass off the serial path ----
    proj0 = (jnp.dot(x_ref[...], wih[0], preferred_element_type=jnp.float32)
             + bias[0])                                      # (S*B, 4H)

    def cell(gates, c_prev):
        # gate order [i, f, o, g]; sigmoid via tanh => one EUP launch per slab.
        # Per-cell EUP chain: sigmoid(3H) and tanh(g) pipeline, tanh(c) is serial.
        sig = 0.5 * (jnp.tanh(0.5 * gates[:, 0:3 * H]) + 1.0)
        i_g = sig[:, 0:H]
        f_g = sig[:, H:2 * H]
        o_g = sig[:, 2 * H:3 * H]
        g_g = jnp.tanh(gates[:, 3 * H:4 * H])
        c = f_g * c_prev + i_g * g_g
        h = o_g * jnp.tanh(c)
        return h, c

    h_state = [h0_ref[l] for l in range(L)]                  # (B, H) each
    c_state = [c0_ref[l] for l in range(L)]

    # ---- wavefront: S + L - 1 serial steps over the (layer, time) grid ----
    # TODO(synk): for large S, time-chunk with pltpu.emit_pipeline (budget ~48 MiB on
    # v7x incl. double buffering) and park proj0 in a VMEM scratch with per-step vlds
    # instead of holding it live across the unrolled loop.
    for w in range(S + L - 1):
        prev_h = list(h_state)   # snapshot: layer l reads layer l-1's step-(w-1) output
        for l in range(L):
            t = w - l
            if not (0 <= t < S):
                continue
            rec = jnp.dot(prev_h[l], whh[l], preferred_element_type=jnp.float32)
            if l == 0:
                gates = rec + proj0[t * B:(t + 1) * B, :]
            else:
                # two independent (B,H)@(H,4H) dots -> pipeline through the MXU;
                # avoids blocking on a whole-layer hoist for layers > 0.
                gates = (rec
                         + jnp.dot(prev_h[l - 1], wih[l],
                                   preferred_element_type=jnp.float32)
                         + bias[l])
            h_state[l], c_state[l] = cell(gates, c_state[l])

    for l in range(L):
        hn_ref[l] = h_state[l]
        cn_ref[l] = c_state[l]

    # hidden_all_ts[:, -1, :] == hn[-1]  -> Linear(H, 1)
    out_ref[...] = (jnp.dot(h_state[L - 1], wlin_ref[...],
                            preferred_element_type=jnp.float32)
                    + blin_ref[...])


def _reorder_gates(a, H):
    """Permute last-dim gate blocks from PyTorch [i, f, g, o] to [i, f, o, g]."""
    return jnp.concatenate(
        [a[..., :2 * H], a[..., 3 * H:4 * H], a[..., 2 * H:3 * H]], axis=-1)


def lstm_layer_forward(x, h0, c0, torch_params, lin_w, lin_b):
    """x: (B, S, I) batch-first (PyTorch convention).
    torch_params: [(w_ih (4H,in_l), w_hh (4H,H), b_ih (4H,), b_hh (4H,))] * L
    lin_w: (1, H), lin_b: (1,).
    Returns (out (B, 1), (hn (L,B,H), cn (L,B,H)))."""
    B, S, I = x.shape
    L, _, H = h0.shape

    # Pad batch to the 8-sublane granularity: full vregs, better MXU row utilization.
    B_pad = max(8, ((B + 7) // 8) * 8)
    x_p = jnp.zeros((B_pad, S, I), jnp.float32).at[:B].set(x)
    h0_p = jnp.zeros((L, B_pad, H), jnp.float32).at[:, :B].set(h0)
    c0_p = jnp.zeros((L, B_pad, H), jnp.float32).at[:, :B].set(c0)

    # Time-major + flatten so layer 0's input projection is a single matmul.
    x2d = jnp.transpose(x_p, (1, 0, 2)).reshape(S * B_pad, I)

    inputs = [x2d, h0_p, c0_p]
    flops = 0
    for l, (w_ih, w_hh, b_ih, b_hh) in enumerate(torch_params):
        in_l = I if l == 0 else H
        wih_t = _reorder_gates(jnp.transpose(w_ih), H)              # (in_l, 4H)
        whh_t = _reorder_gates(jnp.transpose(w_hh), H)              # (H, 4H)
        bias = _reorder_gates((b_ih + b_hh).reshape(1, 4 * H), H)   # (1, 4H)
        inputs += [wih_t, whh_t, bias]
        flops += 2 * S * B_pad * in_l * 4 * H      # input projection (hoisted or fused)
        flops += 2 * S * B_pad * H * 4 * H         # recurrent matmuls
    flops += 2 * B_pad * H                         # final Linear(H, 1)
    inputs += [jnp.transpose(lin_w), lin_b.reshape(1, 1)]

    out_shapes = (
        jax.ShapeDtypeStruct((B_pad, 1), jnp.float32),
        jax.ShapeDtypeStruct((L, B_pad, H), jnp.float32),
        jax.ShapeDtypeStruct((L, B_pad, H), jnp.float32),
    )

    # Everything is whole-array VMEM-resident (no grid).  HBM traffic only, no scratch.
    io_bytes = 4 * (sum(int(a.size) for a in inputs)
                    + B_pad * 1 + 2 * L * B_pad * H)
    # Guard against scaling past a fully-resident kernel (smallest default scoped
    # limit is v5e's 16 MiB); beyond this, time-chunk with pltpu.emit_pipeline.
    assert io_bytes < 12 * 1024 * 1024, (
        "VMEM budget exceeded; switch to a time-chunked pipelined BlockSpec "
        "(pltpu.emit_pipeline) before scaling S*B*H.")
    # Explicit scoped-VMEM limit: headroom for Mosaic-internal scratch / live proj0,
    # but well under v7x's 64 MiB physical VMEM.
    vmem_limit = int(min(max(4 * io_bytes, 8 * 1024 * 1024), 48 * 1024 * 1024))

    cost = pl.CostEstimate(
        flops=int(flops),
        transcendentals=int(5 * S * B_pad * H * L),
        bytes_accessed=int(io_bytes),
    )

    kernel = functools.partial(lstm_kernel, num_layers=L, hidden=H, seq=S, batch=B_pad)
    vmem = pl.BlockSpec(memory_space=pltpu.MemorySpace.VMEM)

    # TODO(synk): on v7x with large batch, add a leading grid axis over batch tiles
    # with dimension_semantics=("parallel",) so both TensorCores are used.
    out, hn, cn = pl.pallas_call(
        kernel,
        out_shape=out_shapes,
        in_specs=[vmem] * len(inputs),
        out_specs=(vmem, vmem, vmem),
        compiler_params=pltpu.CompilerParams(vmem_limit_bytes=vmem_limit),
        cost_estimate=cost,
    )(*inputs)

    # Strip the batch padding.
    return out[:B], (hn[:, :B], cn[:, :B])


def lstm_layer_reference(x, h0, c0, torch_params, lin_w, lin_b):
    """Pure-JAX reference of the same forward pass (PyTorch LSTM semantics)."""
    B, S, I = x.shape
    L, _, H = h0.shape
    seq_in = x
    hn_list, cn_list = [], []
    for l in range(L):
        w_ih, w_hh, b_ih, b_hh = torch_params[l]
        wih_t, whh_t = jnp.transpose(w_ih), jnp.transpose(w_hh)
        b = (b_ih + b_hh)[None, :]
        h, c = h0[l], c0[l]
        outs = []
        for t in range(S):
            gates = seq_in[:, t, :] @ wih_t + h @ whh_t + b
            i_g = jax.nn.sigmoid(gates[:, 0:H])
            f_g = jax.nn.sigmoid(gates[:, H:2 * H])
            g_g = jnp.tanh(gates[:, 2 * H:3 * H])
            o_g = jax.nn.sigmoid(gates[:, 3 * H:4 * H])
            c = f_g * c + i_g * g_g
            h = o_g * jnp.tanh(c)
            outs.append(h)
        seq_in = jnp.stack(outs, axis=1)
        hn_list.append(h)
        cn_list.append(c)
    out = seq_in[:, -1, :] @ jnp.transpose(lin_w) + lin_b[None, :]
    return out, (jnp.stack(hn_list), jnp.stack(cn_list))


if __name__ == "__main__":
    # Hyperparameters consistent with LSTM_layer.__init__
    batch = 2
    seq_len = 8
    input_size = 16
    hidden_size = 32
    num_layers = 2

    key = jax.random.PRNGKey(0)
    keys = jax.random.split(key, 4 * num_layers + 5)
    ki = iter(keys)

    # Deterministic "synthetic checkpoint" (PyTorch-style uniform(-k, k) init).
    k_scale = 1.0 / jnp.sqrt(hidden_size)

    def uniform(kk, shape):
        return jax.random.uniform(kk, shape, jnp.float32, -k_scale, k_scale)

    torch_params = []
    for l in range(num_layers):
        in_l = input_size if l == 0 else hidden_size
        w_ih = uniform(next(ki), (4 * hidden_size, in_l))        # PyTorch (4H, in)
        w_hh = uniform(next(ki), (4 * hidden_size, hidden_size))
        b_ih = uniform(next(ki), (4 * hidden_size,))
        b_hh = uniform(next(ki), (4 * hidden_size,))
        torch_params.append((w_ih, w_hh, b_ih, b_hh))

    lin_w = uniform(next(ki), (1, hidden_size))                  # PyTorch Linear (1, H)
    lin_b = uniform(next(ki), (1,))

    # Forward inputs: x (B, S, I) batch-first; h0/c0 ~ randn as in module.forward.
    x = jax.random.normal(next(ki), (batch, seq_len, input_size), jnp.float32)
    h0 = jax.random.normal(next(ki), (num_layers, batch, hidden_size), jnp.float32)
    c0 = jax.random.normal(next(ki), (num_layers, batch, hidden_size), jnp.float32)

    out, (hn, cn) = lstm_layer_forward(x, h0, c0, torch_params, lin_w, lin_b)
    jax.block_until_ready((out, hn, cn))

    ref_out, (ref_hn, ref_cn) = lstm_layer_reference(x, h0, c0, torch_params, lin_w, lin_b)

    assert out.shape == (batch, 1)
    assert hn.shape == (num_layers, batch, hidden_size)
    assert cn.shape == (num_layers, batch, hidden_size)
    assert jnp.allclose(out, ref_out, rtol=1e-4, atol=1e-4)
    assert jnp.allclose(hn, ref_hn, rtol=1e-4, atol=1e-4)
    assert jnp.allclose(cn, ref_cn, rtol=1e-4, atol=1e-4)

    # TODO(synk): dropout (on the input and between LSTM layers) is identity here
    # because the reference forward is evaluated in eval/inference mode.
    print("KERNEL_OK")
</pallas_src>

<mosaic_0001>
module attributes {stable_mosaic.version = 11 : i64} {
  func.func @lstm_kernel(%arg0: memref<64x16xf32, #tpu.memory_space<vmem>>, %arg1: memref<2x8x32xf32, #tpu.memory_space<vmem>>, %arg2: memref<2x8x32xf32, #tpu.memory_space<vmem>>, %arg3: memref<16x128xf32, #tpu.memory_space<vmem>>, %arg4: memref<32x128xf32, #tpu.memory_space<vmem>>, %arg5: memref<1x128xf32, #tpu.memory_space<vmem>>, %arg6: memref<32x128xf32, #tpu.memory_space<vmem>>, %arg7: memref<32x128xf32, #tpu.memory_space<vmem>>, %arg8: memref<1x128xf32, #tpu.memory_space<vmem>>, %arg9: memref<32x1xf32, #tpu.memory_space<vmem>>, %arg10: memref<1x1xf32, #tpu.memory_space<vmem>>, %arg11: memref<8x1xf32, #tpu.memory_space<vmem>>, %arg12: memref<2x8x32xf32, #tpu.memory_space<vmem>>, %arg13: memref<2x8x32xf32, #tpu.memory_space<vmem>>) attributes {dimension_semantics = [], scalar_prefetch = 0 : i64, scratch_operands = 0 : i64, tpu.core_type = #tpu.core_type<tc>} {
    %c0 = arith.constant 0 : index
    %c0_0 = arith.constant 0 : index
    %0 = vector.load %arg3[%c0, %c0_0] : memref<16x128xf32, #tpu.memory_space<vmem>>, vector<16x128xf32>
    %c0_1 = arith.constant 0 : index
    %c0_2 = arith.constant 0 : index
    %1 = vector.load %arg6[%c0_1, %c0_2] : memref<32x128xf32, #tpu.memory_space<vmem>>, vector<32x128xf32>
    %c0_3 = arith.constant 0 : index
    %c0_4 = arith.constant 0 : index
    %2 = vector.load %arg4[%c0_3, %c0_4] : memref<32x128xf32, #tpu.memory_space<vmem>>, vector<32x128xf32>
    %c0_5 = arith.constant 0 : index
    %c0_6 = arith.constant 0 : index
    %3 = vector.load %arg7[%c0_5, %c0_6] : memref<32x128xf32, #tpu.memory_space<vmem>>, vector<32x128xf32>
    %c0_7 = arith.constant 0 : index
    %c0_8 = arith.constant 0 : index
    %4 = vector.load %arg5[%c0_7, %c0_8] : memref<1x128xf32, #tpu.memory_space<vmem>>, vector<1x128xf32>
    %c0_9 = arith.constant 0 : index
    %c0_10 = arith.constant 0 : index
    %5 = vector.load %arg8[%c0_9, %c0_10] : memref<1x128xf32, #tpu.memory_space<vmem>>, vector<1x128xf32>
    %c0_11 = arith.constant 0 : index
    %c0_12 = arith.constant 0 : index
    %6 = vector.load %arg0[%c0_11, %c0_12] : memref<64x16xf32, #tpu.memory_space<vmem>>, vector<64x16xf32>
    %cst = arith.constant dense<0.000000e+00> : vector<64x128xf32>
    %7 = tpu.matmul %6, %0, %cst {dimension_numbers = #tpu.dot_dimension_numbers<[1], [0], [0], [1], [0, 0, 1, 1], [], []>} : vector<64x16xf32>, vector<16x128xf32>, vector<64x128xf32> -> vector<64x128xf32>
    %8 = vector.broadcast %4 : vector<1x128xf32> to vector<64x128xf32>
    %9 = arith.addf %7, %8 : vector<64x128xf32>
    %c0_13 = arith.constant 0 : index
    %c0_14 = arith.constant 0 : index
    %c0_15 = arith.constant 0 : index
    %10 = vector.load %arg1[%c0_13, %c0_14, %c0_15] : memref<2x8x32xf32, #tpu.memory_space<vmem>>, vector<1x8x32xf32>
    %11 = vector.shape_cast %10 : vector<1x8x32xf32> to vector<8x32xf32>
    %c1 = arith.constant 1 : index
    %c0_16 = arith.constant 0 : index
    %c0_17 = arith.constant 0 : index
    %12 = vector.load %arg1[%c1, %c0_16, %c0_17] : memref<2x8x32xf32, #tpu.memory_space<vmem>>, vector<1x8x32xf32>
    %13 = vector.shape_cast %12 : vector<1x8x32xf32> to vector<8x32xf32>
    %c0_18 = arith.constant 0 : index
    %c0_19 = arith.constant 0 : index
    %c0_20 = arith.constant 0 : index
    %14 = vector.load %arg2[%c0_18, %c0_19, %c0_20] : memref<2x8x32xf32, #tpu.memory_space<vmem>>, vector<1x8x32xf32>
    %15 = vector.shape_cast %14 : vector<1x8x32xf32> to vector<8x32xf32>
    %c1_21 = arith.constant 1 : index
    %c0_22 = arith.constant 0 : index
    %c0_23 = arith.constant 0 : index
    %16 = vector.load %arg2[%c1_21, %c0_22, %c0_23] : memref<2x8x32xf32, #tpu.memory_space<vmem>>, vector<1x8x32xf32>
    %17 = vector.shape_cast %16 : vector<1x8x32xf32> to vector<8x32xf32>
    %cst_24 = arith.constant dense<0.000000e+00> : vector<8x128xf32>
    %18 = tpu.matmul %11, %2, %cst_24 {dimension_numbers = #tpu.dot_dimension_numbers<[1], [0], [0], [1], [0, 0, 1, 1], [], []>} : vector<8x32xf32>, vector<32x128xf32>, vector<8x128xf32> -> vector<8x128xf32>
    %19 = vector.extract_strided_slice %9 {offsets = [0, 0], sizes = [8, 128], strides = [1, 1]} : vector<64x128xf32> to vector<8x128xf32>
    %20 = arith.addf %18, %19 : vector<8x128xf32>
    %21 = vector.extract_strided_slice %20 {offsets = [0, 0], sizes = [8, 96], strides = [1, 1]} : vector<8x128xf32> to vector<8x96xf32>
    %cst_25 = arith.constant 5.000000e-01 : f32
    %22 = vector.broadcast %cst_25 : f32 to vector<8x96xf32>
    %23 = arith.mulf %22, %21 : vector<8x96xf32>
    %24 = math.tanh %23 : vector<8x96xf32>
    %cst_26 = arith.constant 1.000000e+00 : f32
    %25 = vector.broadcast %cst_26 : f32 to vector<8x96xf32>
    %26 = arith.addf %24, %25 : vector<8x96xf32>
    %cst_27 = arith.constant 5.000000e-01 : f32
    %27 = vector.broadcast %cst_27 : f32 to vector<8x96xf32>
    %28 = arith.mulf %27, %26 : vector<8x96xf32>
    %29 = vector.extract_strided_slice %28 {offsets = [0, 0], sizes = [8, 32], strides = [1, 1]} : vector<8x96xf32> to vector<8x32xf32>
    %30 = vector.extract_strided_slice %28 {offsets = [0, 32], sizes = [8, 32], strides = [1, 1]} : vector<8x96xf32> to vector<8x32xf32>
    %31 = vector.extract_strided_slice %28 {offsets = [0, 64], sizes = [8, 32], strides = [1, 1]} : vector<8x96xf32> to vector<8x32xf32>
    %32 = vector.extract_strided_slice %20 {offsets = [0, 96], sizes = [8, 32], strides = [1, 1]} : vector<8x128xf32> to vector<8x32xf32>
    %33 = math.tanh %32 : vector<8x32xf32>
    %34 = arith.mulf %30, %15 : vector<8x32xf32>
    %35 = arith.mulf %29, %33 : vector<8x32xf32>
    %36 = arith.addf %34, %35 : vector<8x32xf32>
    %37 = math.tanh %36 : vector<8x32xf32>
    %38 = arith.mulf %31, %37 : vector<8x32xf32>
    %cst_28 = arith.constant dense<0.000000e+00> : vector<8x128xf32>
    %39 = tpu.matmul %38, %2, %cst_28 {dimension_numbers = #tpu.dot_dimension_numbers<[1], [0], [0], [1], [0, 0, 1, 1], [], []>} : vector<8x32xf32>, vector<32x128xf32>, vector<8x128xf32> -> vector<8x128xf32>
    %40 = vector.extract_strided_slice %9 {offsets = [8, 0], sizes = [8, 128], strides = [1, 1]} : vector<64x128xf32> to vector<8x128xf32>
    %41 = arith.addf %39, %40 : vector<8x128xf32>
    %42 = vector.extract_strided_slice %41 {offsets = [0, 0], sizes = [8, 96], strides = [1, 1]} : vector<8x128xf32> to vector<8x96xf32>
    %cst_29 = arith.constant 5.000000e-01 : f32
    %43 = vector.broadcast %cst_29 : f32 to vector<8x96xf32>
    %44 = arith.mulf %43, %42 : vector<8x96xf32>
    %45 = math.tanh %44 : vector<8x96xf32>
    %cst_30 = arith.constant 1.000000e+00 : f32
    %46 = vector.broadcast %cst_30 : f32 to vector<8x96xf32>
    %47 = arith.addf %45, %46 : vector<8x96xf32>
    %cst_31 = arith.constant 5.000000e-01 : f32
    %48 = vector.broadcast %cst_31 : f32 to vector<8x96xf32>
    %49 = arith.mulf %48, %47 : vector<8x96xf32>
    %50 = vector.extract_strided_slice %49 {offsets = [0, 0], sizes = [8, 32], strides = [1, 1]} : vector<8x96xf32> to vector<8x32xf32>
    %51 = vector.extract_strided_slice %49 {offsets = [0, 32], sizes = [8, 32], strides = [1, 1]} : vector<8x96xf32> to vector<8x32xf32>
    %52 = vector.extract_strided_slice %49 {offsets = [0, 64], sizes = [8, 32], strides = [1, 1]} : vector<8x96xf32> to vector<8x32xf32>
    %53 = vector.extract_strided_slice %41 {offsets = [0, 96], sizes = [8, 32], strides = [1, 1]} : vector<8x128xf32> to vector<8x32xf32>
    %54 = math.tanh %53 : vector<8x32xf32>
    %55 = arith.mulf %51, %36 : vector<8x32xf32>
    %56 = arith.mulf %50, %54 : vector<8x32xf32>
    %57 = arith.addf %55, %56 : vector<8x32xf32>
    %58 = math.tanh %57 : vector<8x32xf32>
    %59 = arith.mulf %52, %58 : vector<8x32xf32>
    %cst_32 = arith.constant dense<0.000000e+00> : vector<8x128xf32>
    %60 = tpu.matmul %13, %3, %cst_32 {dimension_numbers = #tpu.dot_dimension_numbers<[1], [0], [0], [1], [0, 0, 1, 1], [], []>} : vector<8x32xf32>, vector<32x128xf32>, vector<8x128xf32> -> vector<8x128xf32>
    %cst_33 = arith.constant dense<0.000000e+00> : vector<8x128xf32>
    %61 = tpu.matmul %38, %1, %cst_33 {dimension_numbers = #tpu.dot_dimension_numbers<[1], [0], [0], [1], [0, 0, 1, 1], [], []>} : vector<8x32xf32>, vector<32x128xf32>, vector<8x128xf32> -> vector<8x128xf32>
    %62 = arith.addf %60, %61 : vector<8x128xf32>
    %63 = vector.broadcast %5 : vector<1x128xf32> to vector<8x128xf32>
    %64 = arith.addf %62, %63 : vector<8x128xf32>
    %65 = vector.extract_strided_slice %64 {offsets = [0, 0], sizes = [8, 96], strides = [1, 1]} : vector<8x128xf32> to vector<8x96xf32>
    %cst_34 = arith.constant 5.000000e-01 : f32
    %66 = vector.broadcast %cst_34 : f32 to vector<8x96xf32>
    %67 = arith.mulf %66, %65 : vector<8x96xf32>
    %68 = math.tanh %67 : vector<8x96xf32>
    %cst_35 = arith.constant 1.000000e+00 : f32
    %69 = vector.broadcast %cst_35 : f32 to vector<8x96xf32>
    %70 = arith.addf %68, %69 : vector<8x96xf32>
    %cst_36 = arith.constant 5.000000e-01 : f32
    %71 = vector.broadcast %cst_36 : f32 to vector<8x96xf32>
    %72 = arith.mulf %71, %70 : vector<8x96xf32>
    %73 = vector.extract_strided_slice %72 {offsets = [0, 0], sizes = [8, 32], strides = [1, 1]} : vector<8x96xf32> to vector<8x32xf32>
    %74 = vector.extract_strided_slice %72 {offsets = [0, 32], sizes = [8, 32], strides = [1, 1]} : vector<8x96xf32> to vector<8x32xf32>
    %75 = vector.extract_strided_slice %72 {offsets = [0, 64], sizes = [8, 32], strides = [1, 1]} : vector<8x96xf32> to vector<8x32xf32>
    %76 = vector.extract_strided_slice %64 {offsets = [0, 96], sizes = [8, 32], strides = [1, 1]} : vector<8x128xf32> to vector<8x32xf32>
    %77 = math.tanh %76 : vector<8x32xf32>
    %78 = arith.mulf %74, %17 : vector<8x32xf32>
    %79 = arith.mulf %73, %77 : vector<8x32xf32>
    %80 = arith.addf %78, %79 : vector<8x32xf32>
    %81 = math.tanh %80 : vector<8x32xf32>
    %82 = arith.mulf %75, %81 : vector<8x32xf32>
    %cst_37 = arith.constant dense<0.000000e+00> : vector<8x128xf32>
    %83 = tpu.matmul %59, %2, %cst_37 {dimension_numbers = #tpu.dot_dimension_numbers<[1], [0], [0], [1], [0, 0, 1, 1], [], []>} : vector<8x32xf32>, vector<32x128xf32>, vector<8x128xf32> -> vector<8x128xf32>
    %84 = vector.extract_strided_slice %9 {offsets = [16, 0], sizes = [8, 128], strides = [1, 1]} : vector<64x128xf32> to vector<8x128xf32>
    %85 = arith.addf %83, %84 : vector<8x128xf32>
    %86 = vector.extract_strided_slice %85 {offsets = [0, 0], sizes = [8, 96], strides = [1, 1]} : vector<8x128xf32> to vector<8x96xf32>
    %cst_38 = arith.constant 5.000000e-01 : f32
    %87 = vector.broadcast %cst_38 : f32 to vector<8x96xf32>
    %88 = arith.mulf %87, %86 : vector<8x96xf32>
    %89 = math.tanh %88 : vector<8x96xf32>
    %cst_39 = arith.constant 1.000000e+00 : f32
    %90 = vector.broadcast %cst_39 : f32 to vector<8x96xf32>
    %91 = arith.addf %89, %90 : vector<8x96xf32>
    %cst_40 = arith.constant 5.000000e-01 : f32
    %92 = vector.broadcast %cst_40 : f32 to vector<8x96xf32>
    %93 = arith.mulf %92, %91 : vector<8x96xf32>
    %94 = vector.extract_strided_slice %93 {offsets = [0, 0], sizes = [8, 32], strides = [1, 1]} : vector<8x96xf32> to vector<8x32xf32>
    %95 = vector.extract_strided_slice %93 {offsets = [0, 32], sizes = [8, 32], strides = [1, 1]} : vector<8x96xf32> to vector<8x32xf32>
    %96 = vector.extract_strided_slice %93 {offsets = [0, 64], sizes = [8, 32], strides = [1, 1]} : vector<8x96xf32> to vector<8x32xf32>
    %97 = vector.extract_strided_slice %85 {offsets = [0, 96], sizes = [8, 32], strides = [1, 1]} : vector<8x128xf32> to vector<8x32xf32>
    %98 = math.tanh %97 : vector<8x32xf32>
    %99 = arith.mulf %95, %57 : vector<8x32xf32>
    %100 = arith.mulf %94, %98 : vector<8x32xf32>
    %101 = arith.addf %99, %100 : vector<8x32xf32>
    %102 = math.tanh %101 : vector<8x32xf32>
    %103 = arith.mulf %96, %102 : vector<8x32xf32>
    %cst_41 = arith.constant dense<0.000000e+00> : vector<8x128xf32>
    %104 = tpu.matmul %82, %3, %cst_41 {dimension_numbers = #tpu.dot_dimension_numbers<[1], [0], [0], [1], [0, 0, 1, 1], [], []>} : vector<8x32xf32>, vector<32x128xf32>, vector<8x128xf32> -> vector<8x128xf32>
    %cst_42 = arith.constant dense<0.000000e+00> : vector<8x128xf32>
    %105 = tpu.matmul %59, %1, %cst_42 {dimension_numbers = #tpu.dot_dimension_numbers<[1], [0], [0], [1], [0, 0, 1, 1], [], []>} : vector<8x32xf32>, vector<32x128xf32>, vector<8x128xf32> -> vector<8x128xf32>
    %106 = arith.addf %104, %105 : vector<8x128xf32>
    %107 = vector.broadcast %5 : vector<1x128xf32> to vector<8x128xf32>
    %108 = arith.addf %106, %107 : vector<8x128xf32>
    %109 = vector.extract_strided_slice %108 {offsets = [0, 0], sizes = [8, 96], strides = [1, 1]} : vector<8x128xf32> to vector<8x96xf32>
    %cst_43 = arith.constant 5.000000e-01 : f32
    %110 = vector.broadcast %cst_43 : f32 to vector<8x96xf32>
    %111 = arith.mulf %110, %109 : vector<8x96xf32>
    %112 = math.tanh %111 : vector<8x96xf32>
    %cst_44 = arith.constant 1.000000e+00 : f32
    %113 = vector.broadcast %cst_44 : f32 to vector<8x96xf32>
    %114 = arith.addf %112, %113 : vector<8x96xf32>
    %cst_45 = arith.constant 5.000000e-01 : f32
    %115 = vector.broadcast %cst_45 : f32 to vector<8x96xf32>
    %116 = arith.mulf %115, %114 : vector<8x96xf32>
    %117 = vector.extract_strided_slice %116 {offsets = [0, 0], sizes = [8, 32], strides = [1, 1]} : vector<8x96xf32> to vector<8x32xf32>
    %118 = vector.extract_strided_slice %116 {offsets = [0, 32], sizes = [8, 32], strides = [1, 1]} : vector<8x96xf32> to vector<8x32xf32>
    %119 = vector.extract_strided_slice %116 {offsets = [0, 64], sizes = [8, 32], strides = [1, 1]} : vector<8x96xf32> to vector<8x32xf32>
    %120 = vector.extract_strided_slice %108 {offsets = [0, 96], sizes = [8, 32], strides = [1, 1]} : vector<8x128xf32> to vector<8x32xf32>
    %121 = math.tanh %120 : vector<8x32xf32>
    %122 = arith.mulf %118, %80 : vector<8x32xf32>
    %123 = arith.mulf %117, %121 : vector<8x32xf32>
    %124 = arith.addf %122, %123 : vector<8x32xf32>
    %125 = math.tanh %124 : vector<8x32xf32>
    %126 = arith.mulf %119, %125 : vector<8x32xf32>
    %cst_46 = arith.constant dense<0.000000e+00> : vector<8x128xf32>
    %127 = tpu.matmul %103, %2, %cst_46 {dimension_numbers = #tpu.dot_dimension_numbers<[1], [0], [0], [1], [0, 0, 1, 1], [], []>} : vector<8x32xf32>, vector<32x128xf32>, vector<8x128xf32> -> vector<8x128xf32>
    %128 = vector.extract_strided_slice %9 {offsets = [24, 0], sizes = [8, 128], strides = [1, 1]} : vector<64x128xf32> to vector<8x128xf32>
    %129 = arith.addf %127, %128 : vector<8x128xf32>
    %130 = vector.extract_strided_slice %129 {offsets = [0, 0], sizes = [8, 96], strides = [1, 1]} : vector<8x128xf32> to vector<8x96xf32>
    %cst_47 = arith.constant 5.000000e-01 : f32
    %131 = vector.broadcast %cst_47 : f32 to vector<8x96xf32>
    %132 = arith.mulf %131, %130 : vector<8x96xf32>
    %133 = math.tanh %132 : vector<8x96xf32>
    %cst_48 = arith.constant 1.000000e+00 : f32
    %134 = vector.broadcast %cst_48 : f32 to vector<8x96xf32>
    %135 = arith.addf %133, %134 : vector<8x96xf32>
    %cst_49 = arith.constant 5.000000e-01 : f32
    %136 = vector.broadcast %cst_49 : f32 to vector<8x96xf32>
    %137 = arith.mulf %136, %135 : vector<8x96xf32>
    %138 = vector.extract_strided_slice %137 {offsets = [0, 0], sizes = [8, 32], strides = [1, 1]} : vector<8x96xf32> to vector<8x32xf32>
    %139 = vector.extract_strided_slice %137 {offsets = [0, 32], sizes = [8, 32], strides = [1, 1]} : vector<8x96xf32> to vector<8x32xf32>
    %140 = vector.extract_strided_slice %137 {offsets = [0, 64], sizes = [8, 32], strides = [1, 1]} : vector<8x96xf32> to vector<8x32xf32>
    %141 = vector.extract_strided_slice %129 {offsets = [0, 96], sizes = [8, 32], strides = [1, 1]} : vector<8x128xf32> to vector<8x32xf32>
    %142 = math.tanh %141 : vector<8x32xf32>
    %143 = arith.mulf %139, %101 : vector<8x32xf32>
    %144 = arith.mulf %138, %142 : vector<8x32xf32>
    %145 = arith.addf %143, %144 : vector<8x32xf32>
    %146 = math.tanh %145 : vector<8x32xf32>
    %147 = arith.mulf %140, %146 : vector<8x32xf32>
    %cst_50 = arith.constant dense<0.000000e+00> : vector<8x128xf32>
    %148 = tpu.matmul %126, %3, %cst_50 {dimension_numbers = #tpu.dot_dimension_numbers<[1], [0], [0], [1], [0, 0, 1, 1], [], []>} : vector<8x32xf32>, vector<32x128xf32>, vector<8x128xf32> -> vector<8x128xf32>
    %cst_51 = arith.constant dense<0.000000e+00> : vector<8x128xf32>
    %149 = tpu.matmul %103, %1, %cst_51 {dimension_numbers = #tpu.dot_dimension_numbers<[1], [0], [0], [1], [0, 0, 1, 1], [], []>} : vector<8x32xf32>, vector<32x128xf32>, vector<8x128xf32> -> vector<8x128xf32>
    %150 = arith.addf %148, %149 : vector<8x128xf32>
    %151 = vector.broadcast %5 : vector<1x128xf32> to vector<8x128xf32>
    %152 = arith.addf %150, %151 : vector<8x128xf32>
    %153 = vector.extract_strided_slice %152 {offsets = [0, 0], sizes = [8, 96], strides = [1, 1]} : vector<8x128xf32> to vector<8x96xf32>
    %cst_52 = arith.constant 5.000000e-01 : f32
    %154 = vector.broadcast %cst_52 : f32 to vector<8x96xf32>
    %155 = arith.mulf %154, %153 : vector<8x96xf32>
    %156 = math.tanh %155 : vector<8x96xf32>
    %cst_53 = arith.constant 1.000000e+00 : f32
    %157 = vector.broadcast %cst_53 : f32 to vector<8x96xf32>
    %158 = arith.addf %156, %157 : vector<8x96xf32>
    %cst_54 = arith.constant 5.000000e-01 : f32
    %159 = vector.broadcast %cst_54 : f32 to vector<8x96xf32>
    %160 = arith.mulf %159, %158 : vector<8x96xf32>
    %161 = vector.extract_strided_slice %160 {offsets = [0, 0], sizes = [8, 32], strides = [1, 1]} : vector<8x96xf32> to vector<8x32xf32>
    %162 = vector.extract_strided_slice %160 {offsets = [0, 32], sizes = [8, 32], strides = [1, 1]} : vector<8x96xf32> to vector<8x32xf32>
    %163 = vector.extract_strided_slice %160 {offsets = [0, 64], sizes = [8, 32], strides = [1, 1]} : vector<8x96xf32> to vector<8x32xf32>
    %164 = vector.extract_strided_slice %152 {offsets = [0, 96], sizes = [8, 32], strides = [1, 1]} : vector<8x128xf32> to vector<8x32xf32>
    %165 = math.tanh %164 : vector<8x32xf32>
    %166 = arith.mulf %162, %124 : vector<8x32xf32>
    %167 = arith.mulf %161, %165 : vector<8x32xf32>
    %168 = arith.addf %166, %167 : vector<8x32xf32>
    %169 = math.tanh %168 : vector<8x32xf32>
    %170 = arith.mulf %163, %169 : vector<8x32xf32>
    %cst_55 = arith.constant dense<0.000000e+00> : vector<8x128xf32>
    %171 = tpu.matmul %147, %2, %cst_55 {dimension_numbers = #tpu.dot_dimension_numbers<[1], [0], [0], [1], [0, 0, 1, 1], [], []>} : vector<8x32xf32>, vector<32x128xf32>, vector<8x128xf32> -> vector<8x128xf32>
    %172 = vector.extract_strided_slice %9 {offsets = [32, 0], sizes = [8, 128], strides = [1, 1]} : vector<64x128xf32> to vector<8x128xf32>
    %173 = arith.addf %171, %172 : vector<8x128xf32>
    %174 = vector.extract_strided_slice %173 {offsets = [0, 0], sizes = [8, 96], strides = [1, 1]} : vector<8x128xf32> to vector<8x96xf32>
    %cst_56 = arith.constant 5.000000e-01 : f32
    %175 = vector.broadcast %cst_56 : f32 to vector<8x96xf32>
    %176 = arith.mulf %175, %174 : vector<8x96xf32>
    %177 = math.tanh %176 : vector<8x96xf32>
    %cst_57 = arith.constant 1.000000e+00 : f32
    %178 = vector.broadcast %cst_57 : f32 to vector<8x96xf32>
    %179 = arith.addf %177, %178 : vector<8x96xf32>
    %cst_58 = arith.constant 5.000000e-01 : f32
    %180 = vector.broadcast %cst_58 : f32 to vector<8x96xf32>
    %181 = arith.mulf %180, %179 : vector<8x96xf32>
    %182 = vector.extract_strided_slice %181 {offsets = [0, 0], sizes = [8, 32], strides = [1, 1]} : vector<8x96xf32> to vector<8x32xf32>
    %183 = vector.extract_strided_slice %181 {offsets = [0, 32], sizes = [8, 32], strides = [1, 1]} : vector<8x96xf32> to vector<8x32xf32>
    %184 = vector.extract_strided_slice %181 {offsets = [0, 64], sizes = [8, 32], strides = [1, 1]} : vector<8x96xf32> to vector<8x32xf32>
    %185 = vector.extract_strided_slice %173 {offsets = [0, 96], sizes = [8, 32], strides = [1, 1]} : vector<8x128xf32> to vector<8x32xf32>
    %186 = math.tanh %185 : vector<8x32xf32>
    %187 = arith.mulf %183, %145 : vector<8x32xf32>
    %188 = arith.mulf %182, %186 : vector<8x32xf32>
    %189 = arith.addf %187, %188 : vector<8x32xf32>
    %190 = math.tanh %189 : vector<8x32xf32>
    %191 = arith.mulf %184, %190 : vector<8x32xf32>
    %cst_59 = arith.constant dense<0.000000e+00> : vector<8x128xf32>
    %192 = tpu.matmul %170, %3, %cst_59 {dimension_numbers = #tpu.dot_dimension_numbers<[1], [0], [0], [1], [0, 0, 1, 1], [], []>} : vector<8x32xf32>, vector<32x128xf32>, vector<8x128xf32> -> vector<8x128xf32>
    %cst_60 = arith.constant dense<0.000000e+00> : vector<8x128xf32>
    %193 = tpu.matmul %147, %1, %cst_60 {dimension_numbers = #tpu.dot_dimension_numbers<[1], [0], [0], [1], [0, 0, 1, 1], [], []>} : vector<8x32xf32>, vector<32x128xf32>, vector<8x128xf32> -> vector<8x128xf32>
    %194 = arith.addf %192, %193 : vector<8x128xf32>
    %195 = vector.broadcast %5 : vector<1x128xf32> to vector<8x128xf32>
    %196 = arith.addf %194, %195 : vector<8x128xf32>
    %197 = vector.extract_strided_slice %196 {offsets = [0, 0], sizes = [8, 96], strides = [1, 1]} : vector<8x128xf32> to vector<8x96xf32>
    %cst_61 = arith.constant 5.000000e-01 : f32
    %198 = vector.broadcast %cst_61 : f32 to vector<8x96xf32>
    %199 = arith.mulf %198, %197 : vector<8x96xf32>
    %200 = math.tanh %199 : vector<8x96xf32>
    %cst_62 = arith.constant 1.000000e+00 : f32
    %201 = vector.broadcast %cst_62 : f32 to vector<8x96xf32>
    %202 = arith.addf %200, %201 : vector<8x96xf32>
    %cst_63 = arith.constant 5.000000e-01 : f32
    %203 = vector.broadcast %cst_63 : f32 to vector<8x96xf32>
    %204 = arith.mulf %203, %202 : vector<8x96xf32>
    %205 = vector.extract_strided_slice %204 {offsets = [0, 0], sizes = [8, 32], strides = [1, 1]} : vector<8x96xf32> to vector<8x32xf32>
    %206 = vector.extract_strided_slice %204 {offsets = [0, 32], sizes = [8, 32], strides = [1, 1]} : vector<8x96xf32> to vector<8x32xf32>
    %207 = vector.extract_strided_slice %204 {offsets = [0, 64], sizes = [8, 32], strides = [1, 1]} : vector<8x96xf32> to vector<8x32xf32>
    %208 = vector.extract_strided_slice %196 {offsets = [0, 96], sizes = [8, 32], strides = [1, 1]} : vector<8x128xf32> to vector<8x32xf32>
    %209 = math.tanh %208 : vector<8x32xf32>
    %210 = arith.mulf %206, %168 : vector<8x32xf32>
    %211 = arith.mulf %205, %209 : vector<8x32xf32>
    %212 = arith.addf %210, %211 : vector<8x32xf32>
    %213 = math.tanh %212 : vector<8x32xf32>
    %214 = arith.mulf %207, %213 : vector<8x32xf32>
    %cst_64 = arith.constant dense<0.000000e+00> : vector<8x128xf32>
    %215 = tpu.matmul %191, %2, %cst_64 {dimension_numbers = #tpu.dot_dimension_numbers<[1], [0], [0], [1], [0, 0, 1, 1], [], []>} : vector<8x32xf32>, vector<32x128xf32>, vector<8x128xf32> -> vector<8x128xf32>
    %216 = vector.extract_strided_slice %9 {offsets = [40, 0], sizes = [8, 128], strides = [1, 1]} : vector<64x128xf32> to vector<8x128xf32>
    %217 = arith.addf %215, %216 : vector<8x128xf32>
    %218 = vector.extract_strided_slice %217 {offsets = [0, 0], sizes = [8, 96], strides = [1, 1]} : vector<8x128xf32> to vector<8x96xf32>
    %cst_65 = arith.constant 5.000000e-01 : f32
    %219 = vector.broadcast %cst_65 : f32 to vector<8x96xf32>
    %220 = arith.mulf %219, %218 : vector<8x96xf32>
    %221 = math.tanh %220 : vector<8x96xf32>
    %cst_66 = arith.constant 1.000000e+00 : f32
    %222 = vector.broadcast %cst_66 : f32 to vector<8x96xf32>
    %223 = arith.addf %221, %222 : vector<8x96xf32>
    %cst_67 = arith.constant 5.000000e-01 : f32
    %224 = vector.broadcast %cst_67 : f32 to vector<8x96xf32>
    %225 = arith.mulf %224, %223 : vector<8x96xf32>
    %226 = vector.extract_strided_slice %225 {offsets = [0, 0], sizes = [8, 32], strides = [1, 1]} : vector<8x96xf32> to vector<8x32xf32>
    %227 = vector.extract_strided_slice %225 {offsets = [0, 32], sizes = [8, 32], strides = [1, 1]} : vector<8x96xf32> to vector<8x32xf32>
    %228 = vector.extract_strided_slice %225 {offsets = [0, 64], sizes = [8, 32], strides = [1, 1]} : vector<8x96xf32> to vector<8x32xf32>
    %229 = vector.extract_strided_slice %217 {offsets = [0, 96], sizes = [8, 32], strides = [1, 1]} : vector<8x128xf32> to vector<8x32xf32>
    %230 = math.tanh %229 : vector<8x32xf32>
    %231 = arith.mulf %227, %189 : vector<8x32xf32>
    %232 = arith.mulf %226, %230 : vector<8x32xf32>
    %233 = arith.addf %231, %232 : vector<8x32xf32>
    %234 = math.tanh %233 : vector<8x32xf32>
    %235 = arith.mulf %228, %234 : vector<8x32xf32>
    %cst_68 = arith.constant dense<0.000000e+00> : vector<8x128xf32>
    %236 = tpu.matmul %214, %3, %cst_68 {dimension_numbers = #tpu.dot_dimension_numbers<[1], [0], [0], [1], [0, 0, 1, 1], [], []>} : vector<8x32xf32>, vector<32x128xf32>, vector<8x128xf32> -> vector<8x128xf32>
    %cst_69 = arith.constant dense<0.000000e+00> : vector<8x128xf32>
    %237 = tpu.matmul %191, %1, %cst_69 {dimension_numbers = #tpu.dot_dimension_numbers<[1], [0], [0], [1], [0, 0, 1, 1], [], []>} : vector<8x32xf32>, vector<32x128xf32>, vector<8x128xf32> -> vector<8x128xf32>
    %238 = arith.addf %236, %237 : vector<8x128xf32>
    %239 = vector.broadcast %5 : vector<1x128xf32> to vector<8x128xf32>
    %240 = arith.addf %238, %239 : vector<8x128xf32>
    %241 = vector.extract_strided_slice %240 {offsets = [0, 0], sizes = [8, 96], strides = [1, 1]} : vector<8x128xf32> to vector<8x96xf32>
    %cst_70 = arith.constant 5.000000e-01 : f32
    %242 = vector.broadcast %cst_70 : f32 to vector<8x96xf32>
    %243 = arith.mulf %242, %241 : vector<8x96xf32>
    %244 = math.tanh %243 : vector<8x96xf32>
    %cst_71 = arith.constant 1.000000e+00 : f32
    %245 = vector.broadcast %cst_71 : f32 to vector<8x96xf32>
    %246 = arith.addf %244, %245 : vector<8x96xf32>
    %cst_72 = arith.constant 5.000000e-01 : f32
    %247 = vector.broadcast %cst_72 : f32 to vector<8x96xf32>
    %248 = arith.mulf %247, %246 : vector<8x96xf32>
    %249 = vector.extract_strided_slice %248 {offsets = [0, 0], sizes = [8, 32], strides = [1, 1]} : vector<8x96xf32> to vector<8x32xf32>
    %250 = vector.extract_strided_slice %248 {offsets = [0, 32], sizes = [8, 32], strides = [1, 1]} : vector<8x96xf32> to vector<8x32xf32>
    %251 = vector.extract_strided_slice %248 {offsets = [0, 64], sizes = [8, 32], strides = [1, 1]} : vector<8x96xf32> to vector<8x32xf32>
    %252 = vector.extract_strided_slice %240 {offsets = [0, 96], sizes = [8, 32], strides = [1, 1]} : vector<8x128xf32> to vector<8x32xf32>
    %253 = math.tanh %252 : vector<8x32xf32>
    %254 = arith.mulf %250, %212 : vector<8x32xf32>
    %255 = arith.mulf %249, %253 : vector<8x32xf32>
    %256 = arith.addf %254, %255 : vector<8x32xf32>
    %257 = math.tanh %256 : vector<8x32xf32>
    %258 = arith.mulf %251, %257 : vector<8x32xf32>
    %cst_73 = arith.constant dense<0.000000e+00> : vector<8x128xf32>
    %259 = tpu.matmul %235, %2, %cst_73 {dimension_numbers = #tpu.dot_dimension_numbers<[1], [0], [0], [1], [0, 0, 1, 1], [], []>} : vector<8x32xf32>, vector<32x128xf32>, vector<8x128xf32> -> vector<8x128xf32>
    %260 = vector.extract_strided_slice %9 {offsets = [48, 0], sizes = [8, 128], strides = [1, 1]} : vector<64x128xf32> to vector<8x128xf32>
    %261 = arith.addf %259, %260 : vector<8x128xf32>
    %262 = vector.extract_strided_slice %261 {offsets = [0, 0], sizes = [8, 96], strides = [1, 1]} : vector<8x128xf32> to vector<8x96xf32>
    %cst_74 = arith.constant 5.000000e-01 : f32
    %263 = vector.broadcast %cst_74 : f32 to vector<8x96xf32>
    %264 = arith.mulf %263, %262 : vector<8x96xf32>
    %265 = math.tanh %264 : vector<8x96xf32>
    %cst_75 = arith.constant 1.000000e+00 : f32
    %266 = vector.broadcast %cst_75 : f32 to vector<8x96xf32>
    %267 = arith.addf %265, %266 : vector<8x96xf32>
    %cst_76 = arith.constant 5.000000e-01 : f32
    %268 = vector.broadcast %cst_76 : f32 to vector<8x96xf32>
    %269 = arith.mulf %268, %267 : vector<8x96xf32>
    %270 = vector.extract_strided_slice %269 {offsets = [0, 0], sizes = [8, 32], strides = [1, 1]} : vector<8x96xf32> to vector<8x32xf32>
    %271 = vector.extract_strided_slice %269 {offsets = [0, 32], sizes = [8, 32], strides = [1, 1]} : vector<8x96xf32> to vector<8x32xf32>
    %272 = vector.extract_strided_slice %269 {offsets = [0, 64], sizes = [8, 32], strides = [1, 1]} : vector<8x96xf32> to vector<8x32xf32>
    %273 = vector.extract_strided_slice %261 {offsets = [0, 96], sizes = [8, 32], strides = [1, 1]} : vector<8x128xf32> to vector<8x32xf32>
    %274 = math.tanh %273 : vector<8x32xf32>
    %275 = arith.mulf %271, %233 : vector<8x32xf32>
    %276 = arith.mulf %270, %274 : vector<8x32xf32>
    %277 = arith.addf %275, %276 : vector<8x32xf32>
    %278 = math.tanh %277 : vector<8x32xf32>
    %279 = arith.mulf %272, %278 : vector<8x32xf32>
    %cst_77 = arith.constant dense<0.000000e+00> : vector<8x128xf32>
    %280 = tpu.matmul %258, %3, %cst_77 {dimension_numbers = #tpu.dot_dimension_numbers<[1], [0], [0], [1], [0, 0, 1, 1], [], []>} : vector<8x32xf32>, vector<32x128xf32>, vector<8x128xf32> -> vector<8x128xf32>
    %cst_78 = arith.constant dense<0.000000e+00> : vector<8x128xf32>
    %281 = tpu.matmul %235, %1, %cst_78 {dimension_numbers = #tpu.dot_dimension_numbers<[1], [0], [0], [1], [0, 0, 1, 1], [], []>} : vector<8x32xf32>, vector<32x128xf32>, vector<8x128xf32> -> vector<8x128xf32>
    %282 = arith.addf %280, %281 : vector<8x128xf32>
    %283 = vector.broadcast %5 : vector<1x128xf32> to vector<8x128xf32>
    %284 = arith.addf %282, %283 : vector<8x128xf32>
    %285 = vector.extract_strided_slice %284 {offsets = [0, 0], sizes = [8, 96], strides = [1, 1]} : vector<8x128xf32> to vector<8x96xf32>
    %cst_79 = arith.constant 5.000000e-01 : f32
    %286 = vector.broadcast %cst_79 : f32 to vector<8x96xf32>
    %287 = arith.mulf %286, %285 : vector<8x96xf32>
    %288 = math.tanh %287 : vector<8x96xf32>
    %cst_80 = arith.constant 1.000000e+00 : f32
    %289 = vector.broadcast %cst_80 : f32 to vector<8x96xf32>
    %290 = arith.addf %288, %289 : vector<8x96xf32>
    %cst_81 = arith.constant 5.000000e-01 : f32
    %291 = vector.broadcast %cst_81 : f32 to vector<8x96xf32>
    %292 = arith.mulf %291, %290 : vector<8x96xf32>
    %293 = vector.extract_strided_slice %292 {offsets = [0, 0], sizes = [8, 32], strides = [1, 1]} : vector<8x96xf32> to vector<8x32xf32>
    %294 = vector.extract_strided_slice %292 {offsets = [0, 32], sizes = [8, 32], strides = [1, 1]} : vector<8x96xf32> to vector<8x32xf32>
    %295 = vector.extract_strided_slice %292 {offsets = [0, 64], sizes = [8, 32], strides = [1, 1]} : vector<8x96xf32> to vector<8x32xf32>
    %296 = vector.extract_strided_slice %284 {offsets = [0, 96], sizes = [8, 32], strides = [1, 1]} : vector<8x128xf32> to vector<8x32xf32>
    %297 = math.tanh %296 : vector<8x32xf32>
    %298 = arith.mulf %294, %256 : vector<8x32xf32>
    %299 = arith.mulf %293, %297 : vector<8x32xf32>
    %300 = arith.addf %298, %299 : vector<8x32xf32>
    %301 = math.tanh %300 : vector<8x32xf32>
    %302 = arith.mulf %295, %301 : vector<8x32xf32>
    %cst_82 = arith.constant dense<0.000000e+00> : vector<8x128xf32>
    %303 = tpu.matmul %279, %2, %cst_82 {dimension_numbers = #tpu.dot_dimension_numbers<[1], [0], [0], [1], [0, 0, 1, 1], [], []>} : vector<8x32xf32>, vector<32x128xf32>, vector<8x128xf32> -> vector<8x128xf32>
    %304 = vector.extract_strided_slice %9 {offsets = [56, 0], sizes = [8, 128], strides = [1, 1]} : vector<64x128xf32> to vector<8x128xf32>
    %305 = arith.addf %303, %304 : vector<8x128xf32>
    %306 = vector.extract_strided_slice %305 {offsets = [0, 0], sizes = [8, 96], strides = [1, 1]} : vector<8x128xf32> to vector<8x96xf32>
    %cst_83 = arith.constant 5.000000e-01 : f32
    %307 = vector.broadcast %cst_83 : f32 to vector<8x96xf32>
    %308 = arith.mulf %307, %306 : vector<8x96xf32>
    %309 = math.tanh %308 : vector<8x96xf32>
    %cst_84 = arith.constant 1.000000e+00 : f32
    %310 = vector.broadcast %cst_84 : f32 to vector<8x96xf32>
    %311 = arith.addf %309, %310 : vector<8x96xf32>
    %cst_85 = arith.constant 5.000000e-01 : f32
    %312 = vector.broadcast %cst_85 : f32 to vector<8x96xf32>
    %313 = arith.mulf %312, %311 : vector<8x96xf32>
    %314 = vector.extract_strided_slice %313 {offsets = [0, 0], sizes = [8, 32], strides = [1, 1]} : vector<8x96xf32> to vector<8x32xf32>
    %315 = vector.extract_strided_slice %313 {offsets = [0, 32], sizes = [8, 32], strides = [1, 1]} : vector<8x96xf32> to vector<8x32xf32>
    %316 = vector.extract_strided_slice %313 {offsets = [0, 64], sizes = [8, 32], strides = [1, 1]} : vector<8x96xf32> to vector<8x32xf32>
    %317 = vector.extract_strided_slice %305 {offsets = [0, 96], sizes = [8, 32], strides = [1, 1]} : vector<8x128xf32> to vector<8x32xf32>
    %318 = math.tanh %317 : vector<8x32xf32>
    %319 = arith.mulf %315, %277 : vector<8x32xf32>
    %320 = arith.mulf %314, %318 : vector<8x32xf32>
    %321 = arith.addf %319, %320 : vector<8x32xf32>
    %322 = math.tanh %321 : vector<8x32xf32>
    %323 = arith.mulf %316, %322 : vector<8x32xf32>
    %cst_86 = arith.constant dense<0.000000e+00> : vector<8x128xf32>
    %324 = tpu.matmul %302, %3, %cst_86 {dimension_numbers = #tpu.dot_dimension_numbers<[1], [0], [0], [1], [0, 0, 1, 1], [], []>} : vector<8x32xf32>, vector<32x128xf32>, vector<8x128xf32> -> vector<8x128xf32>
    %cst_87 = arith.constant dense<0.000000e+00> : vector<8x128xf32>
    %325 = tpu.matmul %279, %1, %cst_87 {dimension_numbers = #tpu.dot_dimension_numbers<[1], [0], [0], [1], [0, 0, 1, 1], [], []>} : vector<8x32xf32>, vector<32x128xf32>, vector<8x128xf32> -> vector<8x128xf32>
    %326 = arith.addf %324, %325 : vector<8x128xf32>
    %327 = vector.broadcast %5 : vector<1x128xf32> to vector<8x128xf32>
    %328 = arith.addf %326, %327 : vector<8x128xf32>
    %329 = vector.extract_strided_slice %328 {offsets = [0, 0], sizes = [8, 96], strides = [1, 1]} : vector<8x128xf32> to vector<8x96xf32>
    %cst_88 = arith.constant 5.000000e-01 : f32
    %330 = vector.broadcast %cst_88 : f32 to vector<8x96xf32>
    %331 = arith.mulf %330, %329 : vector<8x96xf32>
    %332 = math.tanh %331 : vector<8x96xf32>
    %cst_89 = arith.constant 1.000000e+00 : f32
    %333 = vector.broadcast %cst_89 : f32 to vector<8x96xf32>
    %334 = arith.addf %332, %333 : vector<8x96xf32>
    %cst_90 = arith.constant 5.000000e-01 : f32
    %335 = vector.broadcast %cst_90 : f32 to vector<8x96xf32>
    %336 = arith.mulf %335, %334 : vector<8x96xf32>
    %337 = vector.extract_strided_slice %336 {offsets = [0, 0], sizes = [8, 32], strides = [1, 1]} : vector<8x96xf32> to vector<8x32xf32>
    %338 = vector.extract_strided_slice %336 {offsets = [0, 32], sizes = [8, 32], strides = [1, 1]} : vector<8x96xf32> to vector<8x32xf32>
    %339 = vector.extract_strided_slice %336 {offsets = [0, 64], sizes = [8, 32], strides = [1, 1]} : vector<8x96xf32> to vector<8x32xf32>
    %340 = vector.extract_strided_slice %328 {offsets = [0, 96], sizes = [8, 32], strides = [1, 1]} : vector<8x128xf32> to vector<8x32xf32>
    %341 = math.tanh %340 : vector<8x32xf32>
    %342 = arith.mulf %338, %300 : vector<8x32xf32>
    %343 = arith.mulf %337, %341 : vector<8x32xf32>
    %344 = arith.addf %342, %343 : vector<8x32xf32>
    %345 = math.tanh %344 : vector<8x32xf32>
    %346 = arith.mulf %339, %345 : vector<8x32xf32>
    %cst_91 = arith.constant dense<0.000000e+00> : vector<8x128xf32>
    %347 = tpu.matmul %346, %3, %cst_91 {dimension_numbers = #tpu.dot_dimension_numbers<[1], [0], [0], [1], [0, 0, 1, 1], [], []>} : vector<8x32xf32>, vector<32x128xf32>, vector<8x128xf32> -> vector<8x128xf32>
    %cst_92 = arith.constant dense<0.000000e+00> : vector<8x128xf32>
    %348 = tpu.matmul %323, %1, %cst_92 {dimension_numbers = #tpu.dot_dimension_numbers<[1], [0], [0], [1], [0, 0, 1, 1], [], []>} : vector<8x32xf32>, vector<32x128xf32>, vector<8x128xf32> -> vector<8x128xf32>
    %349 = arith.addf %347, %348 : vector<8x128xf32>
    %350 = vector.broadcast %5 : vector<1x128xf32> to vector<8x128xf32>
    %351 = arith.addf %349, %350 : vector<8x128xf32>
    %352 = vector.extract_strided_slice %351 {offsets = [0, 0], sizes = [8, 96], strides = [1, 1]} : vector<8x128xf32> to vector<8x96xf32>
    %cst_93 = arith.constant 5.000000e-01 : f32
    %353 = vector.broadcast %cst_93 : f32 to vector<8x96xf32>
    %354 = arith.mulf %353, %352 : vector<8x96xf32>
    %355 = math.tanh %354 : vector<8x96xf32>
    %cst_94 = arith.constant 1.000000e+00 : f32
    %356 = vector.broadcast %cst_94 : f32 to vector<8x96xf32>
    %357 = arith.addf %355, %356 : vector<8x96xf32>
    %cst_95 = arith.constant 5.000000e-01 : f32
    %358 = vector.broadcast %cst_95 : f32 to vector<8x96xf32>
    %359 = arith.mulf %358, %357 : vector<8x96xf32>
    %360 = vector.extract_strided_slice %359 {offsets = [0, 0], sizes = [8, 32], strides = [1, 1]} : vector<8x96xf32> to vector<8x32xf32>
    %361 = vector.extract_strided_slice %359 {offsets = [0, 32], sizes = [8, 32], strides = [1, 1]} : vector<8x96xf32> to vector<8x32xf32>
    %362 = vector.extract_strided_slice %359 {offsets = [0, 64], sizes = [8, 32], strides = [1, 1]} : vector<8x96xf32> to vector<8x32xf32>
    %363 = vector.extract_strided_slice %351 {offsets = [0, 96], sizes = [8, 32], strides = [1, 1]} : vector<8x128xf32> to vector<8x32xf32>
    %364 = math.tanh %363 : vector<8x32xf32>
    %365 = arith.mulf %361, %344 : vector<8x32xf32>
    %366 = arith.mulf %360, %364 : vector<8x32xf32>
    %367 = arith.addf %365, %366 : vector<8x32xf32>
    %368 = math.tanh %367 : vector<8x32xf32>
    %369 = arith.mulf %362, %368 : vector<8x32xf32>
    %c0_96 = arith.constant 0 : index
    %c0_97 = arith.constant 0 : index
    %c0_98 = arith.constant 0 : index
    %370 = vector.load %arg12[%c0_96, %c0_97, %c0_98] : memref<2x8x32xf32, #tpu.memory_space<vmem>>, vector<1x8x32xf32>
    %371 = vector.shape_cast %370 : vector<1x8x32xf32> to vector<8x32xf32>
    %372 = vector.shape_cast %323 : vector<8x32xf32> to vector<1x8x32xf32>
    tpu.vector_store %arg12[%c0_96, %c0_97, %c0_98], %372 {strides = array<i32>} : memref<2x8x32xf32, #tpu.memory_space<vmem>>, vector<1x8x32xf32>,
    %c0_99 = arith.constant 0 : index
    %c0_100 = arith.constant 0 : index
    %c0_101 = arith.constant 0 : index
    %373 = vector.load %arg13[%c0_99, %c0_100, %c0_101] : memref<2x8x32xf32, #tpu.memory_space<vmem>>, vector<1x8x32xf32>
    %374 = vector.shape_cast %373 : vector<1x8x32xf32> to vector<8x32xf32>
    %375 = vector.shape_cast %321 : vector<8x32xf32> to vector<1x8x32xf32>
    tpu.vector_store %arg13[%c0_99, %c0_100, %c0_101], %375 {strides = array<i32>} : memref<2x8x32xf32, #tpu.memory_space<vmem>>, vector<1x8x32xf32>,
    %c1_102 = arith.constant 1 : index
    %c0_103 = arith.constant 0 : index
    %c0_104 = arith.constant 0 : index
    %376 = vector.load %arg12[%c1_102, %c0_103, %c0_104] : memref<2x8x32xf32, #tpu.memory_space<vmem>>, vector<1x8x32xf32>
    %377 = vector.shape_cast %376 : vector<1x8x32xf32> to vector<8x32xf32>
    %378 = vector.shape_cast %369 : vector<8x32xf32> to vector<1x8x32xf32>
    tpu.vector_store %arg12[%c1_102, %c0_103, %c0_104], %378 {strides = array<i32>} : memref<2x8x32xf32, #tpu.memory_space<vmem>>, vector<1x8x32xf32>,
    %c1_105 = arith.constant 1 : index
    %c0_106 = arith.constant 0 : index
    %c0_107 = arith.constant 0 : index
    %379 = vector.load %arg13[%c1_105, %c0_106, %c0_107] : memref<2x8x32xf32, #tpu.memory_space<vmem>>, vector<1x8x32xf32>
    %380 = vector.shape_cast %379 : vector<1x8x32xf32> to vector<8x32xf32>
    %381 = vector.shape_cast %367 : vector<8x32xf32> to vector<1x8x32xf32>
    tpu.vector_store %arg13[%c1_105, %c0_106, %c0_107], %381 {strides = array<i32>} : memref<2x8x32xf32, #tpu.memory_space<vmem>>, vector<1x8x32xf32>,
    %c0_108 = arith.constant 0 : index
    %c0_109 = arith.constant 0 : index
    %382 = vector.load %arg9[%c0_108, %c0_109] : memref<32x1xf32, #tpu.memory_space<vmem>>, vector<32x1xf32>
    %cst_110 = arith.constant dense<0.000000e+00> : vector<8x1xf32>
    %383 = tpu.matmul %369, %382, %cst_110 {dimension_numbers = #tpu.dot_dimension_numbers<[1], [0], [0], [1], [0, 0, 1, 1], [], []>} : vector<8x32xf32>, vector<32x1xf32>, vector<8x1xf32> -> vector<8x1xf32>
    %c0_111 = arith.constant 0 : index
    %c0_112 = arith.constant 0 : index
    %384 = vector.load %arg10[%c0_111, %c0_112] : memref<1x1xf32, #tpu.memory_space<vmem>>, vector<1x1xf32>
    %385 = vector.broadcast %384 : vector<1x1xf32> to vector<8x1xf32>
    %386 = arith.addf %383, %385 : vector<8x1xf32>
    %c0_113 = arith.constant 0 : index
    %c0_114 = arith.constant 0 : index
    %387 = vector.load %arg11[%c0_113, %c0_114] : memref<8x1xf32, #tpu.memory_space<vmem>>, vector<8x1xf32>
    tpu.vector_store %arg11[%c0_113, %c0_114], %386 {strides = array<i32>} : memref<8x1xf32, #tpu.memory_space<vmem>>, vector<8x1xf32>,
    return
  }
}

</mosaic_0001>

<llo_original>
// kernel: tpu_custom_call.1
$region0: #{tpu_custom_call.1}
  #allocation0 [shape = 'u32[]', space=smem, size = 0x4, offset = 0x4, fixed_abs, tag = 'smem constant byte address 0x4 - core index']
  #allocation1 [shape = 'u32[144,128]{1,0:T(1,128)}', space=vmem, size = 0x12000, scoped, tag = 'internal scratch']
  #allocation2 [shape = 'f32[1,1]{1,0:T(1,128)S(1)}', space=vmem, size = 0x200, scoped, tag = 'scoped memory for tpu_custom_call.1']
  %s0 = inlined_call_operand.vmem [shape: f32[64,16], index: 0, kind: input, shape index: {}]
  %s1 = inlined_call_operand.hbm [shape: f32[2,8,32], index: 1, kind: input, shape index: {}]
  %s2 = inlined_call_operand.hbm [shape: f32[2,8,32], index: 2, kind: input, shape index: {}]
  %s3 = inlined_call_operand.hbm [shape: f32[16,128], index: 3, kind: input, shape index: {}]
  %s4 = inlined_call_operand.vmem [shape: f32[32,128], index: 4, kind: input, shape index: {}]
  %s5 = inlined_call_operand.vmem [shape: f32[1,128], index: 5, kind: input, shape index: {}]
  %s6 = inlined_call_operand.vmem [shape: f32[32,128], index: 6, kind: input, shape index: {}]
  %s7 = inlined_call_operand.vmem [shape: f32[32,128], index: 7, kind: input, shape index: {}]
  %s8 = inlined_call_operand.vmem [shape: f32[1,128], index: 8, kind: input, shape index: {}]
  %s9 = inlined_call_operand.vmem [shape: f32[32,1], index: 9, kind: input, shape index: {}]
  %s10 = inlined_call_operand.<no memory space> [shape: f32[1,1], index: 10, kind: input, shape index: {}]
  %s11 = inlined_call_operand.vmem [shape: f32[8,1], index: 11, kind: output, shape index: {0}]
  %s12 = inlined_call_operand.hbm [shape: f32[2,8,32], index: 12, kind: output, shape index: {1}]
  %s13 = inlined_call_operand.hbm [shape: f32[2,8,32], index: 13, kind: output, shape index: {2}]
  %14 = xla_tuple %s11, %s12, %s13
  %s15 = sld [smem:[#allocation0]]
  $region82: #{tpu_custom_call.1} parent=0
    _
  %s17 = ssub.s32 1, %s15
  %s18 = scalar_select 0, %s17, %s15
  %v19 = vstv %s10
  %20 = vst [vmem:[#allocation2] sm:$0x1] %v19
  $region1: #{tpu_custom_call.1} parent=0
    #allocation3 [shape = 'u8[8192]{0}', space=vmem, size = 0x2000, scoped, tag = 'input window, operand 1, single buffered']
    #allocation4 [shape = 's32[1]{0}', space=sflag, size = 0x4, scoped, tag = 'scoped memory for tpu_custom_call.1']
    #allocation5 [shape = 's32[1]{0}', space=sflag, size = 0x4, scoped, tag = 'scoped memory for tpu_custom_call.1']
    #allocation6 [shape = 'u8[8192]{0}', space=vmem, size = 0x2000, scoped, tag = 'input window, operand 2, single buffered']
    #allocation7 [shape = 's32[1]{0}', space=sflag, size = 0x4, scoped, tag = 'scoped memory for tpu_custom_call.1']
    #allocation8 [shape = 'u8[8192]{0}', space=vmem, size = 0x2000, scoped, tag = 'input window, operand 3, single buffered']
    #allocation9 [shape = 'u8[8192]{0}', space=vmem, size = 0x2000, scoped, tag = 'output window, operand 1, single buffered']
    #allocation10 [shape = 'u8[8192]{0}', space=vmem, size = 0x2000, scoped, tag = 'output window, operand 2, single buffered']
    #allocation11 [shape = 's32[1]{0}', space=sflag, size = 0x4, scoped, tag = 'scoped memory for tpu_custom_call.1']
    %21 = vsyncpa [#allocation4], 0
    %22 = vsyncpa [#allocation7], 0
    %23 = vsyncpa [#allocation5], 0
    %24 = vsyncpa [#allocation11], 0
    // Predicated region
    $region2: #{tpu_custom_call.1} parent=1 // pred_check
      _
    $region3: #{tpu_custom_call.1} parent=1 // pred_check_branch
      %26 = sbr.rel (0) target = $region5
    $region4: #{tpu_custom_call.1} parent=1 // pred_region
      _
    $region5: #{tpu_custom_call.1} parent=1 // pred_fallthru
      _
    // Predicated region
    $region6: #{tpu_custom_call.1} parent=1 // pred_check
      _
    $region7: #{tpu_custom_call.1} parent=1 // pred_check_branch
      %28 = sbr.rel (0) target = $region9
    $region8: #{tpu_custom_call.1} parent=1 // pred_region
      %s30 = ssub.s32 256, 256
      %31 = vsyncadd [#allocation4], %s30
      %s32 = sshll.u32 [#allocation3], 4
      %s33 = int_to_ptr.vmem [resolvable:$true] %s32
      %38 = dma.hbm_to_vmem [thread:$0]  %s1, 256, %s33, [#allocation4], 128, 128, 8
    $region9: #{tpu_custom_call.1} parent=1 // pred_fallthru
      _
    // Predicated region
    $region10: #{tpu_custom_call.1} parent=1 // pred_check
      _
    $region11: #{tpu_custom_call.1} parent=1 // pred_check_branch
      %40 = sbr.rel (0) target = $region13
    $region12: #{tpu_custom_call.1} parent=1 // pred_region
      %s42 = ssub.s32 256, 256
      %43 = vsyncadd [#allocation7], %s42
      %s44 = sshll.u32 [#allocation6], 4
      %s45 = int_to_ptr.vmem [resolvable:$true] %s44
      %50 = dma.hbm_to_vmem [thread:$0]  %s2, 256, %s45, [#allocation7], 128, 128, 8
    $region13: #{tpu_custom_call.1} parent=1 // pred_fallthru
      _
    // Predicated region
    $region14: #{tpu_custom_call.1} parent=1 // pred_check
      _
    $region15: #{tpu_custom_call.1} parent=1 // pred_check_branch
      %52 = sbr.rel (0) target = $region17
    $region16: #{tpu_custom_call.1} parent=1 // pred_region
      %s54 = ssub.s32 256, 256
      %55 = vsyncadd [#allocation7], %s54
      %s56 = sshll.u32 [#allocation8], 4
      %s57 = int_to_ptr.vmem [resolvable:$true] %s56
      %62 = dma.hbm_to_vmem [thread:$0]  %s3, 256, %s57, [#allocation7], 128, 128, 8
    $region17: #{tpu_custom_call.1} parent=1 // pred_fallthru
      _
    // Predicated region
    $region18: #{tpu_custom_call.1} parent=1 // pred_check
      _
    $region19: #{tpu_custom_call.1} parent=1 // pred_check_branch
      %64 = sbr.rel (0) target = $region21
    $region20: #{tpu_custom_call.1} parent=1 // pred_region
      _
    $region21: #{tpu_custom_call.1} parent=1 // pred_fallthru
      _
    // Predicated region
    $region22: #{tpu_custom_call.1} parent=1 // pred_check
      _
    $region23: #{tpu_custom_call.1} parent=1 // pred_check_branch
      %66 = sbr.rel (0) target = $region25
    $region24: #{tpu_custom_call.1} parent=1 // pred_region
      _
    $region25: #{tpu_custom_call.1} parent=1 // pred_fallthru
      _
    // Predicated region
    $region26: #{tpu_custom_call.1} parent=1 // pred_check
      _
    $region27: #{tpu_custom_call.1} parent=1 // pred_check_branch
      %68 = sbr.rel (0) target = $region29
    $region28: #{tpu_custom_call.1} parent=1 // pred_region
      _
    $region29: #{tpu_custom_call.1} parent=1 // pred_fallthru
      _
    // Predicated region
    $region30: #{tpu_custom_call.1} parent=1 // pred_check
      _
    $region31: #{tpu_custom_call.1} parent=1 // pred_check_branch
      %70 = sbr.rel (0) target = $region33
    $region32: #{tpu_custom_call.1} parent=1 // pred_region
      _
    $region33: #{tpu_custom_call.1} parent=1 // pred_fallthru
      _
    // Predicated region
    $region34: #{tpu_custom_call.1} parent=1 // pred_check
      _
    $region35: #{tpu_custom_call.1} parent=1 // pred_check_branch
      %72 = sbr.rel (0) target = $region37
    $region36: #{tpu_custom_call.1} parent=1 // pred_region
      _
    $region37: #{tpu_custom_call.1} parent=1 // pred_fallthru
      _
    // Predicated region
    $region38: #{tpu_custom_call.1} parent=1 // pred_check
      _
    $region39: #{tpu_custom_call.1} parent=1 // pred_check_branch
      %74 = sbr.rel (0) target = $region41
    $region40: #{tpu_custom_call.1} parent=1 // pred_region
      _
    $region41: #{tpu_custom_call.1} parent=1 // pred_fallthru
      _
    // Predicated region
    $region42: #{tpu_custom_call.1} parent=1 // pred_check
      _
    $region43: #{tpu_custom_call.1} parent=1 // pred_check_branch
      %76 = sbr.rel (0) target = $region45
    $region44: #{tpu_custom_call.1} parent=1 // pred_region
      _
    $region45: #{tpu_custom_call.1} parent=1 // pred_fallthru
      _
    // Predicated region
    $region46: #{tpu_custom_call.1} parent=1 // pred_check
      _
    $region47: #{tpu_custom_call.1} parent=1 // pred_check_branch
      %78 = sbr.rel (0) target = $region49
    $region48: #{tpu_custom_call.1} parent=1 // pred_region
      %79 = dma.done [#allocation4], 256
    $region49: #{tpu_custom_call.1} parent=1 // pred_fallthru
      _
    // Predicated region
    $region50: #{tpu_custom_call.1} parent=1 // pred_check
      _
    $region51: #{tpu_custom_call.1} parent=1 // pred_check_branch
      %81 = sbr.rel (0) target = $region53
    $region52: #{tpu_custom_call.1} parent=1 // pred_region
      %82 = dma.done [#allocation7], 256
    $region53: #{tpu_custom_call.1} parent=1 // pred_fallthru
      _
    // Predicated region
    $region54: #{tpu_custom_call.1} parent=1 // pred_check
      _
    $region55: #{tpu_custom_call.1} parent=1 // pred_check_branch
      %84 = sbr.rel (0) target = $region57
    $region56: #{tpu_custom_call.1} parent=1 // pred_region
      %85 = dma.done [#allocation7], 256
    $region57: #{tpu_custom_call.1} parent=1 // pred_fallthru
      _
    %v86 = vld [vmem:[#allocation8] sm:$0xff]
    %v87 = vld [vmem:[#allocation8 + $0x8] sm:$0xff]
    %v88 = vld [vmem:[%s6] sm:$0xff]
    %v89 = vld [vmem:[%s6 + $0x8] sm:$0xff]
    %v90 = vld [vmem:[%s6 + $0x10] sm:$0xff]
    %v91 = vld [vmem:[%s6 + $0x18] sm:$0xff]
    %v92 = vld [vmem:[%s4] sm:$0xff]
    %v93 = vld [vmem:[%s4 + $0x8] sm:$0xff]
    %v94 = vld [vmem:[%s4 + $0x10] sm:$0xff]
    %v95 = vld [vmem:[%s4 + $0x18] sm:$0xff]
    %v96 = vld [vmem:[%s7] sm:$0xff]
    %v97 = vld [vmem:[%s7 + $0x8] sm:$0xff]
    %v98 = vld [vmem:[%s7 + $0x10] sm:$0xff]
    %v99 = vld [vmem:[%s7 + $0x18] sm:$0xff]
    %v100 = vld [vmem:[%s5] sm:$0x1]
    %v101 = vld [vmem:[%s8] sm:$0x1]
    %v102 = vld [vmem:[%s0] sm:$0xff]
    %v103 = vld [vmem:[%s0 + $0x8] sm:$0xff]
    %v104 = vld [vmem:[%s0 + $0x10] sm:$0xff]
    %v105 = vld [vmem:[%s0 + $0x18] sm:$0xff]
    %v106 = vld [vmem:[%s0 + $0x20] sm:$0xff]
    %v107 = vld [vmem:[%s0 + $0x28] sm:$0xff]
    %v108 = vld [vmem:[%s0 + $0x30] sm:$0xff]
    %v109 = vld [vmem:[%s0 + $0x38] sm:$0xff]
    %v111 = vlaneseq
    %v112 = vshrl.u32 %v111, 7
    %v113 = vsub.s32 0, %v112
    %v114 = vrot.slane %v100, %v113
    %vm116 = vcmask 130048
    %v118 = vsel %vm116, %v102, 0
    %v121 = vsel %vm116, %v103, 0
    %v124 = vsel %vm116, %v104, 0
    %v127 = vsel %vm116, %v105, 0
    %v130 = vsel %vm116, %v106, 0
    %v133 = vsel %vm116, %v107, 0
    %v136 = vsel %vm116, %v108, 0
    %v139 = vsel %vm116, %v109, 0
    %141 = vmatprep.subr.mxu0 0.0
    %142 = vmatpush1.msra.mxu0 0.0
    %143 = vmatprep.subr.mxu0 0.0
    %144 = vmatpush1.msra.mxu0 0.0
    %145 = vmatprep.subr.mxu0 0.0
    %146 = vmatpush1.msra.mxu0 0.0
    %147 = vmatprep.subr.mxu0 0.0
    %148 = vmatpush1.msra.mxu0 0.0
    %149 = vmatprep.subr.mxu0 0.0
    %150 = vmatpush1.msra.mxu0 0.0
    %151 = vmatprep.subr.mxu0 0.0
    %152 = vmatpush1.msra.mxu0 0.0
    %153 = vmatprep.subr.mxu0 0.0
    %154 = vmatpush1.msra.mxu0 0.0
    %155 = vmatprep.subr.mxu0 0.0
    %156 = vmatpush1.msra.mxu0 0.0
    %157 = vmatprep.subr.mxu0 0.0
    %158 = vmatpush1.msra.mxu0 0.0
    %159 = vmatprep.subr.mxu0 0.0
    %160 = vmatpush1.msra.mxu0 0.0
    %161 = vmatprep.subr.mxu0 0.0
    %162 = vmatpush1.msra.mxu0 0.0
    %163 = vmatprep.subr.mxu0 0.0
    %164 = vmatpush1.msra.mxu0 0.0
    %165 = vmatprep.subr.mxu0 0.0
    %166 = vmatpush1.msra.mxu0 0.0
    %167 = vmatprep.subr.mxu0 0.0
    %168 = vmatpush1.msra.mxu0 0.0
    %169 = vmatprep.subr.mxu0 0.0
    %170 = vmatpush1.msra.mxu0 %v87
    %171 = vmatprep.subr.mxu0 0.0
    %172 = vmatpush1.msra.mxu0 %v86
    %173 = vmatprep.subr.mxu0 0.0
    %174 = vmatpush2.msra.mxu0 0.0
    %175 = vmatprep.subr.mxu0 0.0
    %176 = vmatpush2.msra.mxu0 0.0
    %177 = vmatprep.subr.mxu0 0.0
    %178 = vmatpush2.msra.mxu0 0.0
    %179 = vmatprep.subr.mxu0 0.0
    %180 = vmatpush2.msra.mxu0 0.0
    %181 = vmatprep.subr.mxu0 0.0
    %182 = vmatpush2.msra.mxu0 0.0
    %183 = vmatprep.subr.mxu0 0.0
    %184 = vmatpush2.msra.mxu0 0.0
    %185 = vmatprep.subr.mxu0 0.0
    %186 = vmatpush2.msra.mxu0 0.0
    %187 = vmatprep.subr.mxu0 0.0
    %188 = vmatpush2.msra.mxu0 0.0
    %189 = vmatprep.subr.mxu0 0.0
    %190 = vmatpush2.msra.mxu0 0.0
    %191 = vmatprep.subr.mxu0 0.0
    %192 = vmatpush2.msra.mxu0 0.0
    %193 = vmatprep.subr.mxu0 0.0
    %194 = vmatpush2.msra.mxu0 0.0
    %195 = vmatprep.subr.mxu0 0.0
    %196 = vmatpush2.msra.mxu0 0.0
    %197 = vmatprep.subr.mxu0 0.0
    %198 = vmatpush2.msra.mxu0 0.0
    %199 = vmatprep.subr.mxu0 0.0
    %200 = vmatpush2.msra.mxu0 0.0
    %201 = vmatprep.subr.mxu0 0.0
    %202 = vmatpush2.msra.mxu0 0.0
    %203 = vmatprep.subr.mxu0 0.0
    %204 = vmatpush2.msra.mxu0 0.0
    %205 = vmatprep.mubr.f32.mxu0 0.0
    %206 = vmatmul.mubr.f32.gmra.mxu0 %v118
    %v207 = vpop.f32.mrf.mxu0
    %v208 = vadd.f32 %v114, %v207
    %v209 = vpop.f32.mrf.mxu0
    %210 = vmatprep.mubr.f32.mxu0 0.0
    %211 = vmatmul.mubr.f32.gmra.mxu0 %v121
    %v212 = vpop.f32.mrf.mxu0
    %v213 = vadd.f32 %v114, %v212
    %v214 = vpop.f32.mrf.mxu0
    %215 = vmatprep.mubr.f32.mxu0 0.0
    %216 = vmatmul.mubr.f32.gmra.mxu0 %v124
    %v217 = vpop.f32.mrf.mxu0
    %v218 = vadd.f32 %v114, %v217
    %v219 = vpop.f32.mrf.mxu0
    %220 = vmatprep.mubr.f32.mxu0 0.0
    %221 = vmatmul.mubr.f32.gmra.mxu0 %v127
    %v222 = vpop.f32.mrf.mxu0
    %v223 = vadd.f32 %v114, %v222
    %v224 = vpop.f32.mrf.mxu0
    %225 = vmatprep.mubr.f32.mxu0 0.0
    %226 = vmatmul.mubr.f32.gmra.mxu0 %v130
    %v227 = vpop.f32.mrf.mxu0
    %v228 = vadd.f32 %v114, %v227
    %v229 = vpop.f32.mrf.mxu0
    %230 = vmatprep.mubr.f32.mxu0 0.0
    %231 = vmatmul.mubr.f32.gmra.mxu0 %v133
    %v232 = vpop.f32.mrf.mxu0
    %v233 = vadd.f32 %v114, %v232
    %v234 = vpop.f32.mrf.mxu0
    %235 = vmatprep.mubr.f32.mxu0 0.0
    %236 = vmatmul.mubr.f32.gmra.mxu0 %v136
    %v237 = vpop.f32.mrf.mxu0
    %v238 = vadd.f32 %v114, %v237
    %v239 = vpop.f32.mrf.mxu0
    %240 = vmatprep.mubr.f32.mxu0 0.0
    %241 = vmatmul.mubr.f32.gmra.mxu0 %v139
    %v242 = vpop.f32.mrf.mxu0
    %v243 = vadd.f32 %v114, %v242
    %v244 = vpop.f32.mrf.mxu0
    %245 = vdwg.mxu0
    %v246 = vld [vmem:[#allocation3] sm:$0xff]
    %s247 = scalar_lea.vmem [#allocation3], 8
    %v248 = vld [vmem:[%s247] sm:$0xff]
    %v249 = vld [vmem:[#allocation6] sm:$0xff]
    %s250 = scalar_lea.vmem [#allocation6], 8
    %v251 = vld [vmem:[%s250] sm:$0xff]
    %vm252 = vcmask 261120
    %v254 = vsel %vm252, %v246, 0
    %256 = vmatprep.subr.mxu0 0.0
    %257 = vmatpush1.msra.mxu0 0.0
    %258 = vmatprep.subr.mxu0 0.0
    %259 = vmatpush1.msra.mxu0 0.0
    %260 = vmatprep.subr.mxu0 0.0
    %261 = vmatpush1.msra.mxu0 0.0
    %262 = vmatprep.subr.mxu0 0.0
    %263 = vmatpush1.msra.mxu0 0.0
    %264 = vmatprep.subr.mxu0 0.0
    %265 = vmatpush1.msra.mxu0 0.0
    %266 = vmatprep.subr.mxu0 0.0
    %267 = vmatpush1.msra.mxu0 0.0
    %268 = vmatprep.subr.mxu0 0.0
    %269 = vmatpush1.msra.mxu0 0.0
    %270 = vmatprep.subr.mxu0 0.0
    %271 = vmatpush1.msra.mxu0 0.0
    %272 = vmatprep.subr.mxu0 0.0
    %273 = vmatpush1.msra.mxu0 0.0
    %274 = vmatprep.subr.mxu0 0.0
    %275 = vmatpush1.msra.mxu0 0.0
    %276 = vmatprep.subr.mxu0 0.0
    %277 = vmatpush1.msra.mxu0 0.0
    %278 = vmatprep.subr.mxu0 0.0
    %279 = vmatpush1.msra.mxu0 0.0
    %280 = vmatprep.subr.mxu0 0.0
    %281 = vmatpush1.msra.mxu0 %v95
    %282 = vmatprep.subr.mxu0 0.0
    %283 = vmatpush1.msra.mxu0 %v94
    %284 = vmatprep.subr.mxu0 0.0
    %285 = vmatpush1.msra.mxu0 %v93
    %286 = vmatprep.subr.mxu0 0.0
    %287 = vmatpush1.msra.mxu0 %v92
    %288 = vmatprep.subr.mxu0 0.0
    %289 = vmatpush2.msra.mxu0 0.0
    %290 = vmatprep.subr.mxu0 0.0
    %291 = vmatpush2.msra.mxu0 0.0
    %292 = vmatprep.subr.mxu0 0.0
    %293 = vmatpush2.msra.mxu0 0.0
    %294 = vmatprep.subr.mxu0 0.0
    %295 = vmatpush2.msra.mxu0 0.0
    %296 = vmatprep.subr.mxu0 0.0
    %297 = vmatpush2.msra.mxu0 0.0
    %298 = vmatprep.subr.mxu0 0.0
    %299 = vmatpush2.msra.mxu0 0.0
    %300 = vmatprep.subr.mxu0 0.0
    %301 = vmatpush2.msra.mxu0 0.0
    %302 = vmatprep.subr.mxu0 0.0
    %303 = vmatpush2.msra.mxu0 0.0
    %304 = vmatprep.subr.mxu0 0.0
    %305 = vmatpush2.msra.mxu0 0.0
    %306 = vmatprep.subr.mxu0 0.0
    %307 = vmatpush2.msra.mxu0 0.0
    %308 = vmatprep.subr.mxu0 0.0
    %309 = vmatpush2.msra.mxu0 0.0
    %310 = vmatprep.subr.mxu0 0.0
    %311 = vmatpush2.msra.mxu0 0.0
    %312 = vmatprep.subr.mxu0 0.0
    %313 = vmatpush2.msra.mxu0 0.0
    %314 = vmatprep.subr.mxu0 0.0
    %315 = vmatpush2.msra.mxu0 0.0
    %316 = vmatprep.subr.mxu0 0.0
    %317 = vmatpush2.msra.mxu0 0.0
    %318 = vmatprep.subr.mxu0 0.0
    %319 = vmatpush2.msra.mxu0 0.0
    %320 = vmatprep.mubr.f32.mxu0 0.0
    %321 = vmatmul.mubr.f32.gmra.mxu0 %v254
    %v322 = vpop.f32.mrf.mxu0
    %v323 = vadd.f32 %v208, %v322
    %v324 = vpop.f32.mrf.mxu0
    %325 = vdwg.mxu0
    %v326 = vmul.f32 %v323, 0.5
    %v327 = vtanh.pop %v326
    %v328 = vadd.f32 %v327, 1.0
    %v329 = vmul.f32 %v328, 0.5
    %v330 = vtanh.pop %v323
    %332 = vrot.lane.b32.xlu0 %v249, 32
    %v333 = vpop.permute.xlu0 %332
    %v335 = vmul.f32 %v329, %v333
    %337 = vrot.lane.b32.xlu0 %v330, 32
    %v338 = vpop.permute.xlu0 %337
    %v340 = vmul.f32 %v329, %v338
    %342 = vrot.lane.b32.xlu0 %v340, 32
    %v343 = vpop.permute.xlu0 %342
    %v345 = vadd.f32 %v335, %v343
    %v346 = vtanh.pop %v345
    %348 = vrot.lane.b32.xlu0 %v346, 32
    %v349 = vpop.permute.xlu0 %348
    %v351 = vmul.f32 %v329, %v349
    %353 = vrot.lane.b32.xlu0 %v351, 64
    %v354 = vpop.permute.xlu0 %353
    %v355 = vsel %vm252, %v354, 0
    %357 = vmatprep.subr.mxu0 0.0
    %358 = vmatpush1.msra.mxu0 0.0
    %359 = vmatprep.subr.mxu0 0.0
    %360 = vmatpush1.msra.mxu0 0.0
    %361 = vmatprep.subr.mxu0 0.0
    %362 = vmatpush1.msra.mxu0 0.0
    %363 = vmatprep.subr.mxu0 0.0
    %364 = vmatpush1.msra.mxu0 0.0
    %365 = vmatprep.subr.mxu0 0.0
    %366 = vmatpush1.msra.mxu0 0.0
    %367 = vmatprep.subr.mxu0 0.0
    %368 = vmatpush1.msra.mxu0 0.0
    %369 = vmatprep.subr.mxu0 0.0
    %370 = vmatpush1.msra.mxu0 0.0
    %371 = vmatprep.subr.mxu0 0.0
    %372 = vmatpush1.msra.mxu0 0.0
    %373 = vmatprep.subr.mxu0 0.0
    %374 = vmatpush1.msra.mxu0 0.0
    %375 = vmatprep.subr.mxu0 0.0
    %376 = vmatpush1.msra.mxu0 0.0
    %377 = vmatprep.subr.mxu0 0.0
    %378 = vmatpush1.msra.mxu0 0.0
    %379 = vmatprep.subr.mxu0 0.0
    %380 = vmatpush1.msra.mxu0 0.0
    %381 = vmatprep.subr.mxu0 0.0
    %382 = vmatpush1.msra.mxu0 %v95
    %383 = vmatprep.subr.mxu0 0.0
    %384 = vmatpush1.msra.mxu0 %v94
    %385 = vmatprep.subr.mxu0 0.0
    %386 = vmatpush1.msra.mxu0 %v93
    %387 = vmatprep.subr.mxu0 0.0
    %388 = vmatpush1.msra.mxu0 %v92
    %389 = vmatprep.subr.mxu0 0.0
    %390 = vmatpush2.msra.mxu0 0.0
    %391 = vmatprep.subr.mxu0 0.0
    %392 = vmatpush2.msra.mxu0 0.0
    %393 = vmatprep.subr.mxu0 0.0
    %394 = vmatpush2.msra.mxu0 0.0
    %395 = vmatprep.subr.mxu0 0.0
    %396 = vmatpush2.msra.mxu0 0.0
    %397 = vmatprep.subr.mxu0 0.0
    %398 = vmatpush2.msra.mxu0 0.0
    %399 = vmatprep.subr.mxu0 0.0
    %400 = vmatpush2.msra.mxu0 0.0
    %401 = vmatprep.subr.mxu0 0.0
    %402 = vmatpush2.msra.mxu0 0.0
    %403 = vmatprep.subr.mxu0 0.0
    %404 = vmatpush2.msra.mxu0 0.0
    %405 = vmatprep.subr.mxu0 0.0
    %406 = vmatpush2.msra.mxu0 0.0
    %407 = vmatprep.subr.mxu0 0.0
    %408 = vmatpush2.msra.mxu0 0.0
    %409 = vmatprep.subr.mxu0 0.0
    %410 = vmatpush2.msra.mxu0 0.0
    %411 = vmatprep.subr.mxu0 0.0
    %412 = vmatpush2.msra.mxu0 0.0
    %413 = vmatprep.subr.mxu0 0.0
    %414 = vmatpush2.msra.mxu0 0.0
    %415 = vmatprep.subr.mxu0 0.0
    %416 = vmatpush2.msra.mxu0 0.0
    %417 = vmatprep.subr.mxu0 0.0
    %418 = vmatpush2.msra.mxu0 0.0
    %419 = vmatprep.subr.mxu0 0.0
    %420 = vmatpush2.msra.mxu0 0.0
    %421 = vmatprep.mubr.f32.mxu0 0.0
    %422 = vmatmul.mubr.f32.gmra.mxu0 %v355
    %v423 = vpop.f32.mrf.mxu0
    %v424 = vadd.f32 %v213, %v423
    %v425 = vpop.f32.mrf.mxu0
    %426 = vdwg.mxu0
    %v427 = vmul.f32 %v424, 0.5
    %v428 = vtanh.pop %v427
    %v429 = vadd.f32 %v428, 1.0
    %v430 = vmul.f32 %v429, 0.5
    %v431 = vtanh.pop %v424
    %v432 = vmul.f32 %v430, %v345
    %434 = vrot.lane.b32.xlu0 %v431, 32
    %v435 = vpop.permute.xlu0 %434
    %v437 = vmul.f32 %v430, %v435
    %439 = vrot.lane.b32.xlu0 %v437, 32
    %v440 = vpop.permute.xlu0 %439
    %v442 = vadd.f32 %v432, %v440
    %v443 = vtanh.pop %v442
    %445 = vrot.lane.b32.xlu0 %v443, 32
    %v446 = vpop.permute.xlu0 %445
    %v448 = vmul.f32 %v430, %v446
    %449 = vmatprep.subr.mxu0 0.0
    %450 = vmatpush1.msra.mxu0 0.0
    %451 = vmatprep.subr.mxu0 0.0
    %452 = vmatpush1.msra.mxu0 0.0
    %453 = vmatprep.subr.mxu0 0.0
    %454 = vmatpush1.msra.mxu0 0.0
    %455 = vmatprep.subr.mxu0 0.0
    %456 = vmatpush1.msra.mxu0 0.0
    %457 = vmatprep.subr.mxu0 0.0
    %458 = vmatpush1.msra.mxu0 0.0
    %459 = vmatprep.subr.mxu0 0.0
    %460 = vmatpush1.msra.mxu0 0.0
    %461 = vmatprep.subr.mxu0 0.0
    %462 = vmatpush1.msra.mxu0 0.0
    %463 = vmatprep.subr.mxu0 0.0
    %464 = vmatpush1.msra.mxu0 0.0
    %465 = vmatprep.subr.mxu0 0.0
    %466 = vmatpush1.msra.mxu0 0.0
    %467 = vmatprep.subr.mxu0 0.0
    %468 = vmatpush1.msra.mxu0 0.0
    %469 = vmatprep.subr.mxu0 0.0
    %470 = vmatpush1.msra.mxu0 0.0
    %471 = vmatprep.subr.mxu0 0.0
    %472 = vmatpush1.msra.mxu0 0.0
    %473 = vmatprep.subr.mxu0 0.0
    %474 = vmatpush1.msra.mxu0 %v91
    %475 = vmatprep.subr.mxu0 0.0
    %476 = vmatpush1.msra.mxu0 %v90
    %477 = vmatprep.subr.mxu0 0.0
    %478 = vmatpush1.msra.mxu0 %v89
    %479 = vmatprep.subr.mxu0 0.0
    %480 = vmatpush1.msra.mxu0 %v88
    %481 = vmatprep.subr.mxu0 0.0
    %482 = vmatpush2.msra.mxu0 0.0
    %483 = vmatprep.subr.mxu0 0.0
    %484 = vmatpush2.msra.mxu0 0.0
    %485 = vmatprep.subr.mxu0 0.0
    %486 = vmatpush2.msra.mxu0 0.0
    %487 = vmatprep.subr.mxu0 0.0
    %488 = vmatpush2.msra.mxu0 0.0
    %489 = vmatprep.subr.mxu0 0.0
    %490 = vmatpush2.msra.mxu0 0.0
    %491 = vmatprep.subr.mxu0 0.0
    %492 = vmatpush2.msra.mxu0 0.0
    %493 = vmatprep.subr.mxu0 0.0
    %494 = vmatpush2.msra.mxu0 0.0
    %495 = vmatprep.subr.mxu0 0.0
    %496 = vmatpush2.msra.mxu0 0.0
    %497 = vmatprep.subr.mxu0 0.0
    %498 = vmatpush2.msra.mxu0 0.0
    %499 = vmatprep.subr.mxu0 0.0
    %500 = vmatpush2.msra.mxu0 0.0
    %501 = vmatprep.subr.mxu0 0.0
    %502 = vmatpush2.msra.mxu0 0.0
    %503 = vmatprep.subr.mxu0 0.0
    %504 = vmatpush2.msra.mxu0 0.0
    %505 = vmatprep.subr.mxu0 0.0
    %506 = vmatpush2.msra.mxu0 0.0
    %507 = vmatprep.subr.mxu0 0.0
    %508 = vmatpush2.msra.mxu0 0.0
    %509 = vmatprep.subr.mxu0 0.0
    %510 = vmatpush2.msra.mxu0 0.0
    %511 = vmatprep.subr.mxu0 0.0
    %512 = vmatpush2.msra.mxu0 0.0
    %513 = vmatprep.mubr.f32.mxu0 0.0
    %514 = vmatmul.mubr.f32.gmra.mxu0 %v355
    %v515 = vpop.f32.mrf.mxu0
    %v516 = vadd.f32 0.0, %v515
    %v517 = vpop.f32.mrf.mxu0
    %518 = vdwg.mxu0
    %v520 = vsel %vm252, %v248, 0
    %522 = vmatprep.subr.mxu0 0.0
    %523 = vmatpush1.msra.mxu0 0.0
    %524 = vmatprep.subr.mxu0 0.0
    %525 = vmatpush1.msra.mxu0 0.0
    %526 = vmatprep.subr.mxu0 0.0
    %527 = vmatpush1.msra.mxu0 0.0
    %528 = vmatprep.subr.mxu0 0.0
    %529 = vmatpush1.msra.mxu0 0.0
    %530 = vmatprep.subr.mxu0 0.0
    %531 = vmatpush1.msra.mxu0 0.0
    %532 = vmatprep.subr.mxu0 0.0
    %533 = vmatpush1.msra.mxu0 0.0
    %534 = vmatprep.subr.mxu0 0.0
    %535 = vmatpush1.msra.mxu0 0.0
    %536 = vmatprep.subr.mxu0 0.0
    %537 = vmatpush1.msra.mxu0 0.0
    %538 = vmatprep.subr.mxu0 0.0
    %539 = vmatpush1.msra.mxu0 0.0
    %540 = vmatprep.subr.mxu0 0.0
    %541 = vmatpush1.msra.mxu0 0.0
    %542 = vmatprep.subr.mxu0 0.0
    %543 = vmatpush1.msra.mxu0 0.0
    %544 = vmatprep.subr.mxu0 0.0
    %545 = vmatpush1.msra.mxu0 0.0
    %546 = vmatprep.subr.mxu0 0.0
    %547 = vmatpush1.msra.mxu0 %v99
    %548 = vmatprep.subr.mxu0 0.0
    %549 = vmatpush1.msra.mxu0 %v98
    %550 = vmatprep.subr.mxu0 0.0
    %551 = vmatpush1.msra.mxu0 %v97
    %552 = vmatprep.subr.mxu0 0.0
    %553 = vmatpush1.msra.mxu0 %v96
    %554 = vmatprep.subr.mxu0 0.0
    %555 = vmatpush2.msra.mxu0 0.0
    %556 = vmatprep.subr.mxu0 0.0
    %557 = vmatpush2.msra.mxu0 0.0
    %558 = vmatprep.subr.mxu0 0.0
    %559 = vmatpush2.msra.mxu0 0.0
    %560 = vmatprep.subr.mxu0 0.0
    %561 = vmatpush2.msra.mxu0 0.0
    %562 = vmatprep.subr.mxu0 0.0
    %563 = vmatpush2.msra.mxu0 0.0
    %564 = vmatprep.subr.mxu0 0.0
    %565 = vmatpush2.msra.mxu0 0.0
    %566 = vmatprep.subr.mxu0 0.0
    %567 = vmatpush2.msra.mxu0 0.0
    %568 = vmatprep.subr.mxu0 0.0
    %569 = vmatpush2.msra.mxu0 0.0
    %570 = vmatprep.subr.mxu0 0.0
    %571 = vmatpush2.msra.mxu0 0.0
    %572 = vmatprep.subr.mxu0 0.0
    %573 = vmatpush2.msra.mxu0 0.0
    %574 = vmatprep.subr.mxu0 0.0
    %575 = vmatpush2.msra.mxu0 0.0
    %576 = vmatprep.subr.mxu0 0.0
    %577 = vmatpush2.msra.mxu0 0.0
    %578 = vmatprep.subr.mxu0 0.0
    %579 = vmatpush2.msra.mxu0 0.0
    %580 = vmatprep.subr.mxu0 0.0
    %581 = vmatpush2.msra.mxu0 0.0
    %582 = vmatprep.subr.mxu0 0.0
    %583 = vmatpush2.msra.mxu0 0.0
    %584 = vmatprep.subr.mxu0 0.0
    %585 = vmatpush2.msra.mxu0 0.0
    %586 = vmatprep.mubr.f32.mxu0 0.0
    %587 = vmatmul.mubr.f32.gmra.mxu0 %v520
    %v588 = vpop.f32.mrf.mxu0
    %v589 = vadd.f32 %v516, %v588
    %v590 = vpop.f32.mrf.mxu0
    %591 = vdwg.mxu0
    %v593 = vlaneseq
    %v594 = vshrl.u32 %v593, 7
    %v595 = vsub.s32 0, %v594
    %v596 = vrot.slane %v101, %v595
    %v598 = vadd.f32 %v589, %v596
    %v599 = vmul.f32 %v598, 0.5
    %v600 = vtanh.pop %v599
    %v601 = vadd.f32 %v600, 1.0
    %v602 = vmul.f32 %v601, 0.5
    %v603 = vtanh.pop %v598
    %605 = vrot.lane.b32.xlu0 %v251, 32
    %v606 = vpop.permute.xlu0 %605
    %v608 = vmul.f32 %v602, %v606
    %610 = vrot.lane.b32.xlu0 %v603, 32
    %v611 = vpop.permute.xlu0 %610
    %v613 = vmul.f32 %v602, %v611
    %615 = vrot.lane.b32.xlu0 %v613, 32
    %v616 = vpop.permute.xlu0 %615
    %v618 = vadd.f32 %v608, %v616
    %v619 = vtanh.pop %v618
    %621 = vrot.lane.b32.xlu0 %v619, 32
    %v622 = vpop.permute.xlu0 %621
    %v624 = vmul.f32 %v602, %v622
    %626 = vrot.lane.b32.xlu0 %v448, 64
    %v627 = vpop.permute.xlu0 %626
    %v628 = vsel %vm252, %v627, 0
    %630 = vmatprep.subr.mxu0 0.0
    %631 = vmatpush1.msra.mxu0 0.0
    %632 = vmatprep.subr.mxu0 0.0
    %633 = vmatpush1.msra.mxu0 0.0
    %634 = vmatprep.subr.mxu0 0.0
    %635 = vmatpush1.msra.mxu0 0.0
    %636 = vmatprep.subr.mxu0 0.0
    %637 = vmatpush1.msra.mxu0 0.0
    %638 = vmatprep.subr.mxu0 0.0
    %639 = vmatpush1.msra.mxu0 0.0
    %640 = vmatprep.subr.mxu0 0.0
    %641 = vmatpush1.msra.mxu0 0.0
    %642 = vmatprep.subr.mxu0 0.0
    %643 = vmatpush1.msra.mxu0 0.0
    %644 = vmatprep.subr.mxu0 0.0
    %645 = vmatpush1.msra.mxu0 0.0
    %646 = vmatprep.subr.mxu0 0.0
    %647 = vmatpush1.msra.mxu0 0.0
    %648 = vmatprep.subr.mxu0 0.0
    %649 = vmatpush1.msra.mxu0 0.0
    %650 = vmatprep.subr.mxu0 0.0
    %651 = vmatpush1.msra.mxu0 0.0
    %652 = vmatprep.subr.mxu0 0.0
    %653 = vmatpush1.msra.mxu0 0.0
    %654 = vmatprep.subr.mxu0 0.0
    %655 = vmatpush1.msra.mxu0 %v95
    %656 = vmatprep.subr.mxu0 0.0
    %657 = vmatpush1.msra.mxu0 %v94
    %658 = vmatprep.subr.mxu0 0.0
    %659 = vmatpush1.msra.mxu0 %v93
    %660 = vmatprep.subr.mxu0 0.0
    %661 = vmatpush1.msra.mxu0 %v92
    %662 = vmatprep.subr.mxu0 0.0
    %663 = vmatpush2.msra.mxu0 0.0
    %664 = vmatprep.subr.mxu0 0.0
    %665 = vmatpush2.msra.mxu0 0.0
    %666 = vmatprep.subr.mxu0 0.0
    %667 = vmatpush2.msra.mxu0 0.0
    %668 = vmatprep.subr.mxu0 0.0
    %669 = vmatpush2.msra.mxu0 0.0
    %670 = vmatprep.subr.mxu0 0.0
    %671 = vmatpush2.msra.mxu0 0.0
    %672 = vmatprep.subr.mxu0 0.0
    %673 = vmatpush2.msra.mxu0 0.0
    %674 = vmatprep.subr.mxu0 0.0
    %675 = vmatpush2.msra.mxu0 0.0
    %676 = vmatprep.subr.mxu0 0.0
    %677 = vmatpush2.msra.mxu0 0.0
    %678 = vmatprep.subr.mxu0 0.0
    %679 = vmatpush2.msra.mxu0 0.0
    %680 = vmatprep.subr.mxu0 0.0
    %681 = vmatpush2.msra.mxu0 0.0
    %682 = vmatprep.subr.mxu0 0.0
    %683 = vmatpush2.msra.mxu0 0.0
    %684 = vmatprep.subr.mxu0 0.0
    %685 = vmatpush2.msra.mxu0 0.0
    %686 = vmatprep.subr.mxu0 0.0
    %687 = vmatpush2.msra.mxu0 0.0
    %688 = vmatprep.subr.mxu0 0.0
    %689 = vmatpush2.msra.mxu0 0.0
    %690 = vmatprep.subr.mxu0 0.0
    %691 = vmatpush2.msra.mxu0 0.0
    %692 = vmatprep.subr.mxu0 0.0
    %693 = vmatpush2.msra.mxu0 0.0
    %694 = vmatprep.mubr.f32.mxu0 0.0
    %695 = vmatmul.mubr.f32.gmra.mxu0 %v628
    %v696 = vpop.f32.mrf.mxu0
    %v697 = vadd.f32 %v218, %v696
    %v698 = vpop.f32.mrf.mxu0
    %699 = vdwg.mxu0
    %v700 = vmul.f32 %v697, 0.5
    %v701 = vtanh.pop %v700
    %v702 = vadd.f32 %v701, 1.0
    %v703 = vmul.f32 %v702, 0.5
    %v704 = vtanh.pop %v697
    %v705 = vmul.f32 %v703, %v442
    %707 = vrot.lane.b32.xlu0 %v704, 32
    %v708 = vpop.permute.xlu0 %707
    %v710 = vmul.f32 %v703, %v708
    %712 = vrot.lane.b32.xlu0 %v710, 32
    %v713 = vpop.permute.xlu0 %712
    %v715 = vadd.f32 %v705, %v713
    %v716 = vtanh.pop %v715
    %718 = vrot.lane.b32.xlu0 %v716, 32
    %v719 = vpop.permute.xlu0 %718
    %v721 = vmul.f32 %v703, %v719
    %722 = vmatprep.subr.mxu0 0.0
    %723 = vmatpush1.msra.mxu0 0.0
    %724 = vmatprep.subr.mxu0 0.0
    %725 = vmatpush1.msra.mxu0 0.0
    %726 = vmatprep.subr.mxu0 0.0
    %727 = vmatpush1.msra.mxu0 0.0
    %728 = vmatprep.subr.mxu0 0.0
    %729 = vmatpush1.msra.mxu0 0.0
    %730 = vmatprep.subr.mxu0 0.0
    %731 = vmatpush1.msra.mxu0 0.0
    %732 = vmatprep.subr.mxu0 0.0
    %733 = vmatpush1.msra.mxu0 0.0
    %734 = vmatprep.subr.mxu0 0.0
    %735 = vmatpush1.msra.mxu0 0.0
    %736 = vmatprep.subr.mxu0 0.0
    %737 = vmatpush1.msra.mxu0 0.0
    %738 = vmatprep.subr.mxu0 0.0
    %739 = vmatpush1.msra.mxu0 0.0
    %740 = vmatprep.subr.mxu0 0.0
    %741 = vmatpush1.msra.mxu0 0.0
    %742 = vmatprep.subr.mxu0 0.0
    %743 = vmatpush1.msra.mxu0 0.0
    %744 = vmatprep.subr.mxu0 0.0
    %745 = vmatpush1.msra.mxu0 0.0
    %746 = vmatprep.subr.mxu0 0.0
    %747 = vmatpush1.msra.mxu0 %v91
    %748 = vmatprep.subr.mxu0 0.0
    %749 = vmatpush1.msra.mxu0 %v90
    %750 = vmatprep.subr.mxu0 0.0
    %751 = vmatpush1.msra.mxu0 %v89
    %752 = vmatprep.subr.mxu0 0.0
    %753 = vmatpush1.msra.mxu0 %v88
    %754 = vmatprep.subr.mxu0 0.0
    %755 = vmatpush2.msra.mxu0 0.0
    %756 = vmatprep.subr.mxu0 0.0
    %757 = vmatpush2.msra.mxu0 0.0
    %758 = vmatprep.subr.mxu0 0.0
    %759 = vmatpush2.msra.mxu0 0.0
    %760 = vmatprep.subr.mxu0 0.0
    %761 = vmatpush2.msra.mxu0 0.0
    %762 = vmatprep.subr.mxu0 0.0
    %763 = vmatpush2.msra.mxu0 0.0
    %764 = vmatprep.subr.mxu0 0.0
    %765 = vmatpush2.msra.mxu0 0.0
    %766 = vmatprep.subr.mxu0 0.0
    %767 = vmatpush2.msra.mxu0 0.0
    %768 = vmatprep.subr.mxu0 0.0
    %769 = vmatpush2.msra.mxu0 0.0
    %770 = vmatprep.subr.mxu0 0.0
    %771 = vmatpush2.msra.mxu0 0.0
    %772 = vmatprep.subr.mxu0 0.0
    %773 = vmatpush2.msra.mxu0 0.0
    %774 = vmatprep.subr.mxu0 0.0
    %775 = vmatpush2.msra.mxu0 0.0
    %776 = vmatprep.subr.mxu0 0.0
    %777 = vmatpush2.msra.mxu0 0.0
    %778 = vmatprep.subr.mxu0 0.0
    %779 = vmatpush2.msra.mxu0 0.0
    %780 = vmatprep.subr.mxu0 0.0
    %781 = vmatpush2.msra.mxu0 0.0
    %782 = vmatprep.subr.mxu0 0.0
    %783 = vmatpush2.msra.mxu0 0.0
    %784 = vmatprep.subr.mxu0 0.0
    %785 = vmatpush2.msra.mxu0 0.0
    %786 = vmatprep.mubr.f32.mxu0 0.0
    %787 = vmatmul.mubr.f32.gmra.mxu0 %v628
    %v788 = vpop.f32.mrf.mxu0
    %v789 = vadd.f32 0.0, %v788
    %v790 = vpop.f32.mrf.mxu0
    %791 = vdwg.mxu0
    %793 = vrot.lane.b32.xlu0 %v624, 64
    %v794 = vpop.permute.xlu0 %793
    %v795 = vsel %vm252, %v794, 0
    %797 = vmatprep.subr.mxu0 0.0
    %798 = vmatpush1.msra.mxu0 0.0
    %799 = vmatprep.subr.mxu0 0.0
    %800 = vmatpush1.msra.mxu0 0.0
    %801 = vmatprep.subr.mxu0 0.0
    %802 = vmatpush1.msra.mxu0 0.0
    %803 = vmatprep.subr.mxu0 0.0
    %804 = vmatpush1.msra.mxu0 0.0
    %805 = vmatprep.subr.mxu0 0.0
    %806 = vmatpush1.msra.mxu0 0.0
    %807 = vmatprep.subr.mxu0 0.0
    %808 = vmatpush1.msra.mxu0 0.0
    %809 = vmatprep.subr.mxu0 0.0
    %810 = vmatpush1.msra.mxu0 0.0
    %811 = vmatprep.subr.mxu0 0.0
    %812 = vmatpush1.msra.mxu0 0.0
    %813 = vmatprep.subr.mxu0 0.0
    %814 = vmatpush1.msra.mxu0 0.0
    %815 = vmatprep.subr.mxu0 0.0
    %816 = vmatpush1.msra.mxu0 0.0
    %817 = vmatprep.subr.mxu0 0.0
    %818 = vmatpush1.msra.mxu0 0.0
    %819 = vmatprep.subr.mxu0 0.0
    %820 = vmatpush1.msra.mxu0 0.0
    %821 = vmatprep.subr.mxu0 0.0
    %822 = vmatpush1.msra.mxu0 %v99
    %823 = vmatprep.subr.mxu0 0.0
    %824 = vmatpush1.msra.mxu0 %v98
    %825 = vmatprep.subr.mxu0 0.0
    %826 = vmatpush1.msra.mxu0 %v97
    %827 = vmatprep.subr.mxu0 0.0
    %828 = vmatpush1.msra.mxu0 %v96
    %829 = vmatprep.subr.mxu0 0.0
    %830 = vmatpush2.msra.mxu0 0.0
    %831 = vmatprep.subr.mxu0 0.0
    %832 = vmatpush2.msra.mxu0 0.0
    %833 = vmatprep.subr.mxu0 0.0
    %834 = vmatpush2.msra.mxu0 0.0
    %835 = vmatprep.subr.mxu0 0.0
    %836 = vmatpush2.msra.mxu0 0.0
    %837 = vmatprep.subr.mxu0 0.0
    %838 = vmatpush2.msra.mxu0 0.0
    %839 = vmatprep.subr.mxu0 0.0
    %840 = vmatpush2.msra.mxu0 0.0
    %841 = vmatprep.subr.mxu0 0.0
    %842 = vmatpush2.msra.mxu0 0.0
    %843 = vmatprep.subr.mxu0 0.0
    %844 = vmatpush2.msra.mxu0 0.0
    %845 = vmatprep.subr.mxu0 0.0
    %846 = vmatpush2.msra.mxu0 0.0
    %847 = vmatprep.subr.mxu0 0.0
    %848 = vmatpush2.msra.mxu0 0.0
    %849 = vmatprep.subr.mxu0 0.0
    %850 = vmatpush2.msra.mxu0 0.0
    %851 = vmatprep.subr.mxu0 0.0
    %852 = vmatpush2.msra.mxu0 0.0
    %853 = vmatprep.subr.mxu0 0.0
    %854 = vmatpush2.msra.mxu0 0.0
    %855 = vmatprep.subr.mxu0 0.0
    %856 = vmatpush2.msra.mxu0 0.0
    %857 = vmatprep.subr.mxu0 0.0
    %858 = vmatpush2.msra.mxu0 0.0
    %859 = vmatprep.subr.mxu0 0.0
    %860 = vmatpush2.msra.mxu0 0.0
    %861 = vmatprep.mubr.f32.mxu0 0.0
    %862 = vmatmul.mubr.f32.gmra.mxu0 %v795
    %v863 = vpop.f32.mrf.mxu0
    %v864 = vadd.f32 %v789, %v863
    %v865 = vpop.f32.mrf.mxu0
    %866 = vdwg.mxu0
    %v867 = vadd.f32 %v864, %v596
    %v868 = vmul.f32 %v867, 0.5
    %v869 = vtanh.pop %v868
    %v870 = vadd.f32 %v869, 1.0
    %v871 = vmul.f32 %v870, 0.5
    %v872 = vtanh.pop %v867
    %v873 = vmul.f32 %v871, %v618
    %875 = vrot.lane.b32.xlu0 %v872, 32
    %v876 = vpop.permute.xlu0 %875
    %v878 = vmul.f32 %v871, %v876
    %880 = vrot.lane.b32.xlu0 %v878, 32
    %v881 = vpop.permute.xlu0 %880
    %v883 = vadd.f32 %v873, %v881
    %v884 = vtanh.pop %v883
    %886 = vrot.lane.b32.xlu0 %v884, 32
    %v887 = vpop.permute.xlu0 %886
    %v889 = vmul.f32 %v871, %v887
    %891 = vrot.lane.b32.xlu0 %v721, 64
    %v892 = vpop.permute.xlu0 %891
    %v893 = vsel %vm252, %v892, 0
    %895 = vmatprep.subr.mxu0 0.0
    %896 = vmatpush1.msra.mxu0 0.0
    %897 = vmatprep.subr.mxu0 0.0
    %898 = vmatpush1.msra.mxu0 0.0
    %899 = vmatprep.subr.mxu0 0.0
    %900 = vmatpush1.msra.mxu0 0.0
    %901 = vmatprep.subr.mxu0 0.0
    %902 = vmatpush1.msra.mxu0 0.0
    %903 = vmatprep.subr.mxu0 0.0
    %904 = vmatpush1.msra.mxu0 0.0
    %905 = vmatprep.subr.mxu0 0.0
    %906 = vmatpush1.msra.mxu0 0.0
    %907 = vmatprep.subr.mxu0 0.0
    %908 = vmatpush1.msra.mxu0 0.0
    %909 = vmatprep.subr.mxu0 0.0
    %910 = vmatpush1.msra.mxu0 0.0
    %911 = vmatprep.subr.mxu0 0.0
    %912 = vmatpush1.msra.mxu0 0.0
    %913 = vmatprep.subr.mxu0 0.0
    %914 = vmatpush1.msra.mxu0 0.0
    %915 = vmatprep.subr.mxu0 0.0
    %916 = vmatpush1.msra.mxu0 0.0
    %917 = vmatprep.subr.mxu0 0.0
    %918 = vmatpush1.msra.mxu0 0.0
    %919 = vmatprep.subr.mxu0 0.0
    %920 = vmatpush1.msra.mxu0 %v95
    %921 = vmatprep.subr.mxu0 0.0
    %922 = vmatpush1.msra.mxu0 %v94
    %923 = vmatprep.subr.mxu0 0.0
    %924 = vmatpush1.msra.mxu0 %v93
    %925 = vmatprep.subr.mxu0 0.0
    %926 = vmatpush1.msra.mxu0 %v92
    %927 = vmatprep.subr.mxu0 0.0
    %928 = vmatpush2.msra.mxu0 0.0
    %929 = vmatprep.subr.mxu0 0.0
    %930 = vmatpush2.msra.mxu0 0.0
    %931 = vmatprep.subr.mxu0 0.0
    %932 = vmatpush2.msra.mxu0 0.0
    %933 = vmatprep.subr.mxu0 0.0
    %934 = vmatpush2.msra.mxu0 0.0
    %935 = vmatprep.subr.mxu0 0.0
    %936 = vmatpush2.msra.mxu0 0.0
    %937 = vmatprep.subr.mxu0 0.0
    %938 = vmatpush2.msra.mxu0 0.0
    %939 = vmatprep.subr.mxu0 0.0
    %940 = vmatpush2.msra.mxu0 0.0
    %941 = vmatprep.subr.mxu0 0.0
    %942 = vmatpush2.msra.mxu0 0.0
    %943 = vmatprep.subr.mxu0 0.0
    %944 = vmatpush2.msra.mxu0 0.0
    %945 = vmatprep.subr.mxu0 0.0
    %946 = vmatpush2.msra.mxu0 0.0
    %947 = vmatprep.subr.mxu0 0.0
    %948 = vmatpush2.msra.mxu0 0.0
    %949 = vmatprep.subr.mxu0 0.0
    %950 = vmatpush2.msra.mxu0 0.0
    %951 = vmatprep.subr.mxu0 0.0
    %952 = vmatpush2.msra.mxu0 0.0
    %953 = vmatprep.subr.mxu0 0.0
    %954 = vmatpush2.msra.mxu0 0.0
    %955 = vmatprep.subr.mxu0 0.0
    %956 = vmatpush2.msra.mxu0 0.0
    %957 = vmatprep.subr.mxu0 0.0
    %958 = vmatpush2.msra.mxu0 0.0
    %959 = vmatprep.mubr.f32.mxu0 0.0
    %960 = vmatmul.mubr.f32.gmra.mxu0 %v893
    %v961 = vpop.f32.mrf.mxu0
    %v962 = vadd.f32 %v223, %v961
    %v963 = vpop.f32.mrf.mxu0
    %964 = vdwg.mxu0
    %v965 = vmul.f32 %v962, 0.5
    %v966 = vtanh.pop %v965
    %v967 = vadd.f32 %v966, 1.0
    %v968 = vmul.f32 %v967, 0.5
    %v969 = vtanh.pop %v962
    %v970 = vmul.f32 %v968, %v715
    %972 = vrot.lane.b32.xlu0 %v969, 32
    %v973 = vpop.permute.xlu0 %972
    %v975 = vmul.f32 %v968, %v973
    %977 = vrot.lane.b32.xlu0 %v975, 32
    %v978 = vpop.permute.xlu0 %977
    %v980 = vadd.f32 %v970, %v978
    %v981 = vtanh.pop %v980
    %983 = vrot.lane.b32.xlu0 %v981, 32
    %v984 = vpop.permute.xlu0 %983
    %v986 = vmul.f32 %v968, %v984
    %987 = vmatprep.subr.mxu0 0.0
    %988 = vmatpush1.msra.mxu0 0.0
    %989 = vmatprep.subr.mxu0 0.0
    %990 = vmatpush1.msra.mxu0 0.0
    %991 = vmatprep.subr.mxu0 0.0
    %992 = vmatpush1.msra.mxu0 0.0
    %993 = vmatprep.subr.mxu0 0.0
    %994 = vmatpush1.msra.mxu0 0.0
    %995 = vmatprep.subr.mxu0 0.0
    %996 = vmatpush1.msra.mxu0 0.0
    %997 = vmatprep.subr.mxu0 0.0
    %998 = vmatpush1.msra.mxu0 0.0
    %999 = vmatprep.subr.mxu0 0.0
    %1000 = vmatpush1.msra.mxu0 0.0
    %1001 = vmatprep.subr.mxu0 0.0
    %1002 = vmatpush1.msra.mxu0 0.0
    %1003 = vmatprep.subr.mxu0 0.0
    %1004 = vmatpush1.msra.mxu0 0.0
    %1005 = vmatprep.subr.mxu0 0.0
    %1006 = vmatpush1.msra.mxu0 0.0
    %1007 = vmatprep.subr.mxu0 0.0
    %1008 = vmatpush1.msra.mxu0 0.0
    %1009 = vmatprep.subr.mxu0 0.0
    %1010 = vmatpush1.msra.mxu0 0.0
    %1011 = vmatprep.subr.mxu0 0.0
    %1012 = vmatpush1.msra.mxu0 %v91
    %1013 = vmatprep.subr.mxu0 0.0
    %1014 = vmatpush1.msra.mxu0 %v90
    %1015 = vmatprep.subr.mxu0 0.0
    %1016 = vmatpush1.msra.mxu0 %v89
    %1017 = vmatprep.subr.mxu0 0.0
    %1018 = vmatpush1.msra.mxu0 %v88
    %1019 = vmatprep.subr.mxu0 0.0
    %1020 = vmatpush2.msra.mxu0 0.0
    %1021 = vmatprep.subr.mxu0 0.0
    %1022 = vmatpush2.msra.mxu0 0.0
    %1023 = vmatprep.subr.mxu0 0.0
    %1024 = vmatpush2.msra.mxu0 0.0
    %1025 = vmatprep.subr.mxu0 0.0
    %1026 = vmatpush2.msra.mxu0 0.0
    %1027 = vmatprep.subr.mxu0 0.0
    %1028 = vmatpush2.msra.mxu0 0.0
    %1029 = vmatprep.subr.mxu0 0.0
    %1030 = vmatpush2.msra.mxu0 0.0
    %1031 = vmatprep.subr.mxu0 0.0
    %1032 = vmatpush2.msra.mxu0 0.0
    %1033 = vmatprep.subr.mxu0 0.0
    %1034 = vmatpush2.msra.mxu0 0.0
    %1035 = vmatprep.subr.mxu0 0.0
    %1036 = vmatpush2.msra.mxu0 0.0
    %1037 = vmatprep.subr.mxu0 0.0
    %1038 = vmatpush2.msra.mxu0 0.0
    %1039 = vmatprep.subr.mxu0 0.0
    %1040 = vmatpush2.msra.mxu0 0.0
    %1041 = vmatprep.subr.mxu0 0.0
    %1042 = vmatpush2.msra.mxu0 0.0
    %1043 = vmatprep.subr.mxu0 0.0
    %1044 = vmatpush2.msra.mxu0 0.0
    %1045 = vmatprep.subr.mxu0 0.0
    %1046 = vmatpush2.msra.mxu0 0.0
    %1047 = vmatprep.subr.mxu0 0.0
    %1048 = vmatpush2.msra.mxu0 0.0
    %1049 = vmatprep.subr.mxu0 0.0
    %1050 = vmatpush2.msra.mxu0 0.0
    %1051 = vmatprep.mubr.f32.mxu0 0.0
    %1052 = vmatmul.mubr.f32.gmra.mxu0 %v893
    %v1053 = vpop.f32.mrf.mxu0
    %v1054 = vadd.f32 0.0, %v1053
    %v1055 = vpop.f32.mrf.mxu0
    %1056 = vdwg.mxu0
    %1058 = vrot.lane.b32.xlu0 %v889, 64
    %v1059 = vpop.permute.xlu0 %1058
    %v1060 = vsel %vm252, %v1059, 0
    %1062 = vmatprep.subr.mxu0 0.0
    %1063 = vmatpush1.msra.mxu0 0.0
    %1064 = vmatprep.subr.mxu0 0.0
    %1065 = vmatpush1.msra.mxu0 0.0
    %1066 = vmatprep.subr.mxu0 0.0
    %1067 = vmatpush1.msra.mxu0 0.0
    %1068 = vmatprep.subr.mxu0 0.0
    %1069 = vmatpush1.msra.mxu0 0.0
    %1070 = vmatprep.subr.mxu0 0.0
    %1071 = vmatpush1.msra.mxu0 0.0
    %1072 = vmatprep.subr.mxu0 0.0
    %1073 = vmatpush1.msra.mxu0 0.0
    %1074 = vmatprep.subr.mxu0 0.0
    %1075 = vmatpush1.msra.mxu0 0.0
    %1076 = vmatprep.subr.mxu0 0.0
    %1077 = vmatpush1.msra.mxu0 0.0
    %1078 = vmatprep.subr.mxu0 0.0
    %1079 = vmatpush1.msra.mxu0 0.0
    %1080 = vmatprep.subr.mxu0 0.0
    %1081 = vmatpush1.msra.mxu0 0.0
    %1082 = vmatprep.subr.mxu0 0.0
    %1083 = vmatpush1.msra.mxu0 0.0
    %1084 = vmatprep.subr.mxu0 0.0
    %1085 = vmatpush1.msra.mxu0 0.0
    %1086 = vmatprep.subr.mxu0 0.0
    %1087 = vmatpush1.msra.mxu0 %v99
    %1088 = vmatprep.subr.mxu0 0.0
    %1089 = vmatpush1.msra.mxu0 %v98
    %1090 = vmatprep.subr.mxu0 0.0
    %1091 = vmatpush1.msra.mxu0 %v97
    %1092 = vmatprep.subr.mxu0 0.0
    %1093 = vmatpush1.msra.mxu0 %v96
    %1094 = vmatprep.subr.mxu0 0.0
    %1095 = vmatpush2.msra.mxu0 0.0
    %1096 = vmatprep.subr.mxu0 0.0
    %1097 = vmatpush2.msra.mxu0 0.0
    %1098 = vmatprep.subr.mxu0 0.0
    %1099 = vmatpush2.msra.mxu0 0.0
    %1100 = vmatprep.subr.mxu0 0.0
    %1101 = vmatpush2.msra.mxu0 0.0
    %1102 = vmatprep.subr.mxu0 0.0
    %1103 = vmatpush2.msra.mxu0 0.0
    %1104 = vmatprep.subr.mxu0 0.0
    %1105 = vmatpush2.msra.mxu0 0.0
    %1106 = vmatprep.subr.mxu0 0.0
    %1107 = vmatpush2.msra.mxu0 0.0
    %1108 = vmatprep.subr.mxu0 0.0
    %1109 = vmatpush2.msra.mxu0 0.0
    %1110 = vmatprep.subr.mxu0 0.0
    %1111 = vmatpush2.msra.mxu0 0.0
    %1112 = vmatprep.subr.mxu0 0.0
    %1113 = vmatpush2.msra.mxu0 0.0
    %1114 = vmatprep.subr.mxu0 0.0
    %1115 = vmatpush2.msra.mxu0 0.0
    %1116 = vmatprep.subr.mxu0 0.0
    %1117 = vmatpush2.msra.mxu0 0.0
    %1118 = vmatprep.subr.mxu0 0.0
    %1119 = vmatpush2.msra.mxu0 0.0
    %1120 = vmatprep.subr.mxu0 0.0
    %1121 = vmatpush2.msra.mxu0 0.0
    %1122 = vmatprep.subr.mxu0 0.0
    %1123 = vmatpush2.msra.mxu0 0.0
    %1124 = vmatprep.subr.mxu0 0.0
    %1125 = vmatpush2.msra.mxu0 0.0
    %1126 = vmatprep.mubr.f32.mxu0 0.0
    %1127 = vmatmul.mubr.f32.gmra.mxu0 %v1060
    %v1128 = vpop.f32.mrf.mxu0
    %v1129 = vadd.f32 %v1054, %v1128
    %v1130 = vpop.f32.mrf.mxu0
    %1131 = vdwg.mxu0
    %v1132 = vadd.f32 %v1129, %v596
    %v1133 = vmul.f32 %v1132, 0.5
    %v1134 = vtanh.pop %v1133
    %v1135 = vadd.f32 %v1134, 1.0
    %v1136 = vmul.f32 %v1135, 0.5
    %v1137 = vtanh.pop %v1132
    %v1138 = vmul.f32 %v1136, %v883
    %1140 = vrot.lane.b32.xlu0 %v1137, 32
    %v1141 = vpop.permute.xlu0 %1140
    %v1143 = vmul.f32 %v1136, %v1141
    %1145 = vrot.lane.b32.xlu0 %v1143, 32
    %v1146 = vpop.permute.xlu0 %1145
    %v1148 = vadd.f32 %v1138, %v1146
    %v1149 = vtanh.pop %v1148
    %1151 = vrot.lane.b32.xlu0 %v1149, 32
    %v1152 = vpop.permute.xlu0 %1151
    %v1154 = vmul.f32 %v1136, %v1152
    %1156 = vrot.lane.b32.xlu0 %v986, 64
    %v1157 = vpop.permute.xlu0 %1156
    %v1158 = vsel %vm252, %v1157, 0
    %1160 = vmatprep.subr.mxu0 0.0
    %1161 = vmatpush1.msra.mxu0 0.0
    %1162 = vmatprep.subr.mxu0 0.0
    %1163 = vmatpush1.msra.mxu0 0.0
    %1164 = vmatprep.subr.mxu0 0.0
    %1165 = vmatpush1.msra.mxu0 0.0
    %1166 = vmatprep.subr.mxu0 0.0
    %1167 = vmatpush1.msra.mxu0 0.0
    %1168 = vmatprep.subr.mxu0 0.0
    %1169 = vmatpush1.msra.mxu0 0.0
    %1170 = vmatprep.subr.mxu0 0.0
    %1171 = vmatpush1.msra.mxu0 0.0
    %1172 = vmatprep.subr.mxu0 0.0
    %1173 = vmatpush1.msra.mxu0 0.0
    %1174 = vmatprep.subr.mxu0 0.0
    %1175 = vmatpush1.msra.mxu0 0.0
    %1176 = vmatprep.subr.mxu0 0.0
    %1177 = vmatpush1.msra.mxu0 0.0
    %1178 = vmatprep.subr.mxu0 0.0
    %1179 = vmatpush1.msra.mxu0 0.0
    %1180 = vmatprep.subr.mxu0 0.0
    %1181 = vmatpush1.msra.mxu0 0.0
    %1182 = vmatprep.subr.mxu0 0.0
    %1183 = vmatpush1.msra.mxu0 0.0
    %1184 = vmatprep.subr.mxu0 0.0
    %1185 = vmatpush1.msra.mxu0 %v95
    %1186 = vmatprep.subr.mxu0 0.0
    %1187 = vmatpush1.msra.mxu0 %v94
    %1188 = vmatprep.subr.mxu0 0.0
    %1189 = vmatpush1.msra.mxu0 %v93
    %1190 = vmatprep.subr.mxu0 0.0
    %1191 = vmatpush1.msra.mxu0 %v92
    %1192 = vmatprep.subr.mxu0 0.0
    %1193 = vmatpush2.msra.mxu0 0.0
    %1194 = vmatprep.subr.mxu0 0.0
    %1195 = vmatpush2.msra.mxu0 0.0
    %1196 = vmatprep.subr.mxu0 0.0
    %1197 = vmatpush2.msra.mxu0 0.0
    %1198 = vmatprep.subr.mxu0 0.0
    %1199 = vmatpush2.msra.mxu0 0.0
    %1200 = vmatprep.subr.mxu0 0.0
    %1201 = vmatpush2.msra.mxu0 0.0
    %1202 = vmatprep.subr.mxu0 0.0
    %1203 = vmatpush2.msra.mxu0 0.0
    %1204 = vmatprep.subr.mxu0 0.0
    %1205 = vmatpush2.msra.mxu0 0.0
    %1206 = vmatprep.subr.mxu0 0.0
    %1207 = vmatpush2.msra.mxu0 0.0
    %1208 = vmatprep.subr.mxu0 0.0
    %1209 = vmatpush2.msra.mxu0 0.0
    %1210 = vmatprep.subr.mxu0 0.0
    %1211 = vmatpush2.msra.mxu0 0.0
    %1212 = vmatprep.subr.mxu0 0.0
    %1213 = vmatpush2.msra.mxu0 0.0
    %1214 = vmatprep.subr.mxu0 0.0
    %1215 = vmatpush2.msra.mxu0 0.0
    %1216 = vmatprep.subr.mxu0 0.0
    %1217 = vmatpush2.msra.mxu0 0.0
    %1218 = vmatprep.subr.mxu0 0.0
    %1219 = vmatpush2.msra.mxu0 0.0
    %1220 = vmatprep.subr.mxu0 0.0
    %1221 = vmatpush2.msra.mxu0 0.0
    %1222 = vmatprep.subr.mxu0 0.0
    %1223 = vmatpush2.msra.mxu0 0.0
    %1224 = vmatprep.mubr.f32.mxu0 0.0
    %1225 = vmatmul.mubr.f32.gmra.mxu0 %v1158
    %v1226 = vpop.f32.mrf.mxu0
    %v1227 = vadd.f32 %v228, %v1226
    %v1228 = vpop.f32.mrf.mxu0
    %1229 = vdwg.mxu0
    %v1230 = vmul.f32 %v1227, 0.5
    %v1231 = vtanh.pop %v1230
    %v1232 = vadd.f32 %v1231, 1.0
    %v1233 = vmul.f32 %v1232, 0.5
    %v1234 = vtanh.pop %v1227
    %v1235 = vmul.f32 %v1233, %v980
    %1237 = vrot.lane.b32.xlu0 %v1234, 32
    %v1238 = vpop.permute.xlu0 %1237
    %v1240 = vmul.f32 %v1233, %v1238
    %1242 = vrot.lane.b32.xlu0 %v1240, 32
    %v1243 = vpop.permute.xlu0 %1242
    %v1245 = vadd.f32 %v1235, %v1243
    %v1246 = vtanh.pop %v1245
    %1248 = vrot.lane.b32.xlu0 %v1246, 32
    %v1249 = vpop.permute.xlu0 %1248
    %v1251 = vmul.f32 %v1233, %v1249
    %1252 = vmatprep.subr.mxu0 0.0
    %1253 = vmatpush1.msra.mxu0 0.0
    %1254 = vmatprep.subr.mxu0 0.0
    %1255 = vmatpush1.msra.mxu0 0.0
    %1256 = vmatprep.subr.mxu0 0.0
    %1257 = vmatpush1.msra.mxu0 0.0
    %1258 = vmatprep.subr.mxu0 0.0
    %1259 = vmatpush1.msra.mxu0 0.0
    %1260 = vmatprep.subr.mxu0 0.0
    %1261 = vmatpush1.msra.mxu0 0.0
    %1262 = vmatprep.subr.mxu0 0.0
    %1263 = vmatpush1.msra.mxu0 0.0
    %1264 = vmatprep.subr.mxu0 0.0
    %1265 = vmatpush1.msra.mxu0 0.0
    %1266 = vmatprep.subr.mxu0 0.0
    %1267 = vmatpush1.msra.mxu0 0.0
    %1268 = vmatprep.subr.mxu0 0.0
    %1269 = vmatpush1.msra.mxu0 0.0
    %1270 = vmatprep.subr.mxu0 0.0
    %1271 = vmatpush1.msra.mxu0 0.0
    %1272 = vmatprep.subr.mxu0 0.0
    %1273 = vmatpush1.msra.mxu0 0.0
    %1274 = vmatprep.subr.mxu0 0.0
    %1275 = vmatpush1.msra.mxu0 0.0
    %1276 = vmatprep.subr.mxu0 0.0
    %1277 = vmatpush1.msra.mxu0 %v91
    %1278 = vmatprep.subr.mxu0 0.0
    %1279 = vmatpush1.msra.mxu0 %v90
    %1280 = vmatprep.subr.mxu0 0.0
    %1281 = vmatpush1.msra.mxu0 %v89
    %1282 = vmatprep.subr.mxu0 0.0
    %1283 = vmatpush1.msra.mxu0 %v88
    %1284 = vmatprep.subr.mxu0 0.0
    %1285 = vmatpush2.msra.mxu0 0.0
    %1286 = vmatprep.subr.mxu0 0.0
    %1287 = vmatpush2.msra.mxu0 0.0
    %1288 = vmatprep.subr.mxu0 0.0
    %1289 = vmatpush2.msra.mxu0 0.0
    %1290 = vmatprep.subr.mxu0 0.0
    %1291 = vmatpush2.msra.mxu0 0.0
    %1292 = vmatprep.subr.mxu0 0.0
    %1293 = vmatpush2.msra.mxu0 0.0
    %1294 = vmatprep.subr.mxu0 0.0
    %1295 = vmatpush2.msra.mxu0 0.0
    %1296 = vmatprep.subr.mxu0 0.0
    %1297 = vmatpush2.msra.mxu0 0.0
    %1298 = vmatprep.subr.mxu0 0.0
    %1299 = vmatpush2.msra.mxu0 0.0
    %1300 = vmatprep.subr.mxu0 0.0
    %1301 = vmatpush2.msra.mxu0 0.0
    %1302 = vmatprep.subr.mxu0 0.0
    %1303 = vmatpush2.msra.mxu0 0.0
    %1304 = vmatprep.subr.mxu0 0.0
    %1305 = vmatpush2.msra.mxu0 0.0
    %1306 = vmatprep.subr.mxu0 0.0
    %1307 = vmatpush2.msra.mxu0 0.0
    %1308 = vmatprep.subr.mxu0 0.0
    %1309 = vmatpush2.msra.mxu0 0.0
    %1310 = vmatprep.subr.mxu0 0.0
    %1311 = vmatpush2.msra.mxu0 0.0
    %1312 = vmatprep.subr.mxu0 0.0
    %1313 = vmatpush2.msra.mxu0 0.0
    %1314 = vmatprep.subr.mxu0 0.0
    %1315 = vmatpush2.msra.mxu0 0.0
    %1316 = vmatprep.mubr.f32.mxu0 0.0
    %1317 = vmatmul.mubr.f32.gmra.mxu0 %v1158
    %v1318 = vpop.f32.mrf.mxu0
    %v1319 = vadd.f32 0.0, %v1318
    %v1320 = vpop.f32.mrf.mxu0
    %1321 = vdwg.mxu0
    %1323 = vrot.lane.b32.xlu0 %v1154, 64
    %v1324 = vpop.permute.xlu0 %1323
    %v1325 = vsel %vm252, %v1324, 0
    %1327 = vmatprep.subr.mxu0 0.0
    %1328 = vmatpush1.msra.mxu0 0.0
    %1329 = vmatprep.subr.mxu0 0.0
    %1330 = vmatpush1.msra.mxu0 0.0
    %1331 = vmatprep.subr.mxu0 0.0
    %1332 = vmatpush1.msra.mxu0 0.0
    %1333 = vmatprep.subr.mxu0 0.0
    %1334 = vmatpush1.msra.mxu0 0.0
    %1335 = vmatprep.subr.mxu0 0.0
    %1336 = vmatpush1.msra.mxu0 0.0
    %1337 = vmatprep.subr.mxu0 0.0
    %1338 = vmatpush1.msra.mxu0 0.0
    %1339 = vmatprep.subr.mxu0 0.0
    %1340 = vmatpush1.msra.mxu0 0.0
    %1341 = vmatprep.subr.mxu0 0.0
    %1342 = vmatpush1.msra.mxu0 0.0
    %1343 = vmatprep.subr.mxu0 0.0
    %1344 = vmatpush1.msra.mxu0 0.0
    %1345 = vmatprep.subr.mxu0 0.0
    %1346 = vmatpush1.msra.mxu0 0.0
    %1347 = vmatprep.subr.mxu0 0.0
    %1348 = vmatpush1.msra.mxu0 0.0
    %1349 = vmatprep.subr.mxu0 0.0
    %1350 = vmatpush1.msra.mxu0 0.0
    %1351 = vmatprep.subr.mxu0 0.0
    %1352 = vmatpush1.msra.mxu0 %v99
    %1353 = vmatprep.subr.mxu0 0.0
    %1354 = vmatpush1.msra.mxu0 %v98
    %1355 = vmatprep.subr.mxu0 0.0
    %1356 = vmatpush1.msra.mxu0 %v97
    %1357 = vmatprep.subr.mxu0 0.0
    %1358 = vmatpush1.msra.mxu0 %v96
    %1359 = vmatprep.subr.mxu0 0.0
    %1360 = vmatpush2.msra.mxu0 0.0
    %1361 = vmatprep.subr.mxu0 0.0
    %1362 = vmatpush2.msra.mxu0 0.0
    %1363 = vmatprep.subr.mxu0 0.0
    %1364 = vmatpush2.msra.mxu0 0.0
    %1365 = vmatprep.subr.mxu0 0.0
    %1366 = vmatpush2.msra.mxu0 0.0
    %1367 = vmatprep.subr.mxu0 0.0
    %1368 = vmatpush2.msra.mxu0 0.0
    %1369 = vmatprep.subr.mxu0 0.0
    %1370 = vmatpush2.msra.mxu0 0.0
    %1371 = vmatprep.subr.mxu0 0.0
    %1372 = vmatpush2.msra.mxu0 0.0
    %1373 = vmatprep.subr.mxu0 0.0
    %1374 = vmatpush2.msra.mxu0 0.0
    %1375 = vmatprep.subr.mxu0 0.0
    %1376 = vmatpush2.msra.mxu0 0.0
    %1377 = vmatprep.subr.mxu0 0.0
    %1378 = vmatpush2.msra.mxu0 0.0
    %1379 = vmatprep.subr.mxu0 0.0
    %1380 = vmatpush2.msra.mxu0 0.0
    %1381 = vmatprep.subr.mxu0 0.0
    %1382 = vmatpush2.msra.mxu0 0.0
    %1383 = vmatprep.subr.mxu0 0.0
    %1384 = vmatpush2.msra.mxu0 0.0
    %1385 = vmatprep.subr.mxu0 0.0
    %1386 = vmatpush2.msra.mxu0 0.0
    %1387 = vmatprep.subr.mxu0 0.0
    %1388 = vmatpush2.msra.mxu0 0.0
    %1389 = vmatprep.subr.mxu0 0.0
    %1390 = vmatpush2.msra.mxu0 0.0
    %1391 = vmatprep.mubr.f32.mxu0 0.0
    %1392 = vmatmul.mubr.f32.gmra.mxu0 %v1325
    %v1393 = vpop.f32.mrf.mxu0
    %v1394 = vadd.f32 %v1319, %v1393
    %v1395 = vpop.f32.mrf.mxu0
    %1396 = vdwg.mxu0
    %v1397 = vadd.f32 %v1394, %v596
    %v1398 = vmul.f32 %v1397, 0.5
    %v1399 = vtanh.pop %v1398
    %v1400 = vadd.f32 %v1399, 1.0
    %v1401 = vmul.f32 %v1400, 0.5
    %v1402 = vtanh.pop %v1397
    %v1403 = vmul.f32 %v1401, %v1148
    %1405 = vrot.lane.b32.xlu0 %v1402, 32
    %v1406 = vpop.permute.xlu0 %1405
    %v1408 = vmul.f32 %v1401, %v1406
    %1410 = vrot.lane.b32.xlu0 %v1408, 32
    %v1411 = vpop.permute.xlu0 %1410
    %v1413 = vadd.f32 %v1403, %v1411
    %v1414 = vtanh.pop %v1413
    %1416 = vrot.lane.b32.xlu0 %v1414, 32
    %v1417 = vpop.permute.xlu0 %1416
    %v1419 = vmul.f32 %v1401, %v1417
    %1421 = vrot.lane.b32.xlu0 %v1251, 64
    %v1422 = vpop.permute.xlu0 %1421
    %v1423 = vsel %vm252, %v1422, 0
    %1425 = vmatprep.subr.mxu0 0.0
    %1426 = vmatpush1.msra.mxu0 0.0
    %1427 = vmatprep.subr.mxu0 0.0
    %1428 = vmatpush1.msra.mxu0 0.0
    %1429 = vmatprep.subr.mxu0 0.0
    %1430 = vmatpush1.msra.mxu0 0.0
    %1431 = vmatprep.subr.mxu0 0.0
    %1432 = vmatpush1.msra.mxu0 0.0
    %1433 = vmatprep.subr.mxu0 0.0
    %1434 = vmatpush1.msra.mxu0 0.0
    %1435 = vmatprep.subr.mxu0 0.0
    %1436 = vmatpush1.msra.mxu0 0.0
    %1437 = vmatprep.subr.mxu0 0.0
    %1438 = vmatpush1.msra.mxu0 0.0
    %1439 = vmatprep.subr.mxu0 0.0
    %1440 = vmatpush1.msra.mxu0 0.0
    %1441 = vmatprep.subr.mxu0 0.0
    %1442 = vmatpush1.msra.mxu0 0.0
    %1443 = vmatprep.subr.mxu0 0.0
    %1444 = vmatpush1.msra.mxu0 0.0
    %1445 = vmatprep.subr.mxu0 0.0
    %1446 = vmatpush1.msra.mxu0 0.0
    %1447 = vmatprep.subr.mxu0 0.0
    %1448 = vmatpush1.msra.mxu0 0.0
    %1449 = vmatprep.subr.mxu0 0.0
    %1450 = vmatpush1.msra.mxu0 %v95
    %1451 = vmatprep.subr.mxu0 0.0
    %1452 = vmatpush1.msra.mxu0 %v94
    %1453 = vmatprep.subr.mxu0 0.0
    %1454 = vmatpush1.msra.mxu0 %v93
    %1455 = vmatprep.subr.mxu0 0.0
    %1456 = vmatpush1.msra.mxu0 %v92
    %1457 = vmatprep.subr.mxu0 0.0
    %1458 = vmatpush2.msra.mxu0 0.0
    %1459 = vmatprep.subr.mxu0 0.0
    %1460 = vmatpush2.msra.mxu0 0.0
    %1461 = vmatprep.subr.mxu0 0.0
    %1462 = vmatpush2.msra.mxu0 0.0
    %1463 = vmatprep.subr.mxu0 0.0
    %1464 = vmatpush2.msra.mxu0 0.0
    %1465 = vmatprep.subr.mxu0 0.0
    %1466 = vmatpush2.msra.mxu0 0.0
    %1467 = vmatprep.subr.mxu0 0.0
    %1468 = vmatpush2.msra.mxu0 0.0
    %1469 = vmatprep.subr.mxu0 0.0
    %1470 = vmatpush2.msra.mxu0 0.0
    %1471 = vmatprep.subr.mxu0 0.0
    %1472 = vmatpush2.msra.mxu0 0.0
    %1473 = vmatprep.subr.mxu0 0.0
    %1474 = vmatpush2.msra.mxu0 0.0
    %1475 = vmatprep.subr.mxu0 0.0
    %1476 = vmatpush2.msra.mxu0 0.0
    %1477 = vmatprep.subr.mxu0 0.0
    %1478 = vmatpush2.msra.mxu0 0.0
    %1479 = vmatprep.subr.mxu0 0.0
    %1480 = vmatpush2.msra.mxu0 0.0
    %1481 = vmatprep.subr.mxu0 0.0
    %1482 = vmatpush2.msra.mxu0 0.0
    %1483 = vmatprep.subr.mxu0 0.0
    %1484 = vmatpush2.msra.mxu0 0.0
    %1485 = vmatprep.subr.mxu0 0.0
    %1486 = vmatpush2.msra.mxu0 0.0
    %1487 = vmatprep.subr.mxu0 0.0
    %1488 = vmatpush2.msra.mxu0 0.0
    %1489 = vmatprep.mubr.f32.mxu0 0.0
    %1490 = vmatmul.mubr.f32.gmra.mxu0 %v1423
    %v1491 = vpop.f32.mrf.mxu0
    %v1492 = vadd.f32 %v233, %v1491
    %v1493 = vpop.f32.mrf.mxu0
    %1494 = vdwg.mxu0
    %v1495 = vmul.f32 %v1492, 0.5
    %v1496 = vtanh.pop %v1495
    %v1497 = vadd.f32 %v1496, 1.0
    %v1498 = vmul.f32 %v1497, 0.5
    %v1499 = vtanh.pop %v1492
    %v1500 = vmul.f32 %v1498, %v1245
    %1502 = vrot.lane.b32.xlu0 %v1499, 32
    %v1503 = vpop.permute.xlu0 %1502
    %v1505 = vmul.f32 %v1498, %v1503
    %1507 = vrot.lane.b32.xlu0 %v1505, 32
    %v1508 = vpop.permute.xlu0 %1507
    %v1510 = vadd.f32 %v1500, %v1508
    %v1511 = vtanh.pop %v1510
    %1513 = vrot.lane.b32.xlu0 %v1511, 32
    %v1514 = vpop.permute.xlu0 %1513
    %v1516 = vmul.f32 %v1498, %v1514
    %1517 = vmatprep.subr.mxu0 0.0
    %1518 = vmatpush1.msra.mxu0 0.0
    %1519 = vmatprep.subr.mxu0 0.0
    %1520 = vmatpush1.msra.mxu0 0.0
    %1521 = vmatprep.subr.mxu0 0.0
    %1522 = vmatpush1.msra.mxu0 0.0
    %1523 = vmatprep.subr.mxu0 0.0
    %1524 = vmatpush1.msra.mxu0 0.0
    %1525 = vmatprep.subr.mxu0 0.0
    %1526 = vmatpush1.msra.mxu0 0.0
    %1527 = vmatprep.subr.mxu0 0.0
    %1528 = vmatpush1.msra.mxu0 0.0
    %1529 = vmatprep.subr.mxu0 0.0
    %1530 = vmatpush1.msra.mxu0 0.0
    %1531 = vmatprep.subr.mxu0 0.0
    %1532 = vmatpush1.msra.mxu0 0.0
    %1533 = vmatprep.subr.mxu0 0.0
    %1534 = vmatpush1.msra.mxu0 0.0
    %1535 = vmatprep.subr.mxu0 0.0
    %1536 = vmatpush1.msra.mxu0 0.0
    %1537 = vmatprep.subr.mxu0 0.0
    %1538 = vmatpush1.msra.mxu0 0.0
    %1539 = vmatprep.subr.mxu0 0.0
    %1540 = vmatpush1.msra.mxu0 0.0
    %1541 = vmatprep.subr.mxu0 0.0
    %1542 = vmatpush1.msra.mxu0 %v91
    %1543 = vmatprep.subr.mxu0 0.0
    %1544 = vmatpush1.msra.mxu0 %v90
    %1545 = vmatprep.subr.mxu0 0.0
    %1546 = vmatpush1.msra.mxu0 %v89
    %1547 = vmatprep.subr.mxu0 0.0
    %1548 = vmatpush1.msra.mxu0 %v88
    %1549 = vmatprep.subr.mxu0 0.0
    %1550 = vmatpush2.msra.mxu0 0.0
    %1551 = vmatprep.subr.mxu0 0.0
    %1552 = vmatpush2.msra.mxu0 0.0
    %1553 = vmatprep.subr.mxu0 0.0
    %1554 = vmatpush2.msra.mxu0 0.0
    %1555 = vmatprep.subr.mxu0 0.0
    %1556 = vmatpush2.msra.mxu0 0.0
    %1557 = vmatprep.subr.mxu0 0.0
    %1558 = vmatpush2.msra.mxu0 0.0
    %1559 = vmatprep.subr.mxu0 0.0
    %1560 = vmatpush2.msra.mxu0 0.0
    %1561 = vmatprep.subr.mxu0 0.0
    %1562 = vmatpush2.msra.mxu0 0.0
    %1563 = vmatprep.subr.mxu0 0.0
    %1564 = vmatpush2.msra.mxu0 0.0
    %1565 = vmatprep.subr.mxu0 0.0
    %1566 = vmatpush2.msra.mxu0 0.0
    %1567 = vmatprep.subr.mxu0 0.0
    %1568 = vmatpush2.msra.mxu0 0.0
    %1569 = vmatprep.subr.mxu0 0.0
    %1570 = vmatpush2.msra.mxu0 0.0
    %1571 = vmatprep.subr.mxu0 0.0
    %1572 = vmatpush2.msra.mxu0 0.0
    %1573 = vmatprep.subr.mxu0 0.0
    %1574 = vmatpush2.msra.mxu0 0.0
    %1575 = vmatprep.subr.mxu0 0.0
    %1576 = vmatpush2.msra.mxu0 0.0
    %1577 = vmatprep.subr.mxu0 0.0
    %1578 = vmatpush2.msra.mxu0 0.0
    %1579 = vmatprep.subr.mxu0 0.0
    %1580 = vmatpush2.msra.mxu0 0.0
    %1581 = vmatprep.mubr.f32.mxu0 0.0
    %1582 = vmatmul.mubr.f32.gmra.mxu0 %v1423
    %v1583 = vpop.f32.mrf.mxu0
    %v1584 = vadd.f32 0.0, %v1583
    %v1585 = vpop.f32.mrf.mxu0
    %1586 = vdwg.mxu0
    %1588 = vrot.lane.b32.xlu0 %v1419, 64
    %v1589 = vpop.permute.xlu0 %1588
    %v1590 = vsel %vm252, %v1589, 0
    %1592 = vmatprep.subr.mxu0 0.0
    %1593 = vmatpush1.msra.mxu0 0.0
    %1594 = vmatprep.subr.mxu0 0.0
    %1595 = vmatpush1.msra.mxu0 0.0
    %1596 = vmatprep.subr.mxu0 0.0
    %1597 = vmatpush1.msra.mxu0 0.0
    %1598 = vmatprep.subr.mxu0 0.0
    %1599 = vmatpush1.msra.mxu0 0.0
    %1600 = vmatprep.subr.mxu0 0.0
    %1601 = vmatpush1.msra.mxu0 0.0
    %1602 = vmatprep.subr.mxu0 0.0
    %1603 = vmatpush1.msra.mxu0 0.0
    %1604 = vmatprep.subr.mxu0 0.0
    %1605 = vmatpush1.msra.mxu0 0.0
    %1606 = vmatprep.subr.mxu0 0.0
    %1607 = vmatpush1.msra.mxu0 0.0
    %1608 = vmatprep.subr.mxu0 0.0
    %1609 = vmatpush1.msra.mxu0 0.0
    %1610 = vmatprep.subr.mxu0 0.0
    %1611 = vmatpush1.msra.mxu0 0.0
    %1612 = vmatprep.subr.mxu0 0.0
    %1613 = vmatpush1.msra.mxu0 0.0
    %1614 = vmatprep.subr.mxu0 0.0
    %1615 = vmatpush1.msra.mxu0 0.0
    %1616 = vmatprep.subr.mxu0 0.0
    %1617 = vmatpush1.msra.mxu0 %v99
    %1618 = vmatprep.subr.mxu0 0.0
    %1619 = vmatpush1.msra.mxu0 %v98
    %1620 = vmatprep.subr.mxu0 0.0
    %1621 = vmatpush1.msra.mxu0 %v97
    %1622 = vmatprep.subr.mxu0 0.0
    %1623 = vmatpush1.msra.mxu0 %v96
    %1624 = vmatprep.subr.mxu0 0.0
    %1625 = vmatpush2.msra.mxu0 0.0
    %1626 = vmatprep.subr.mxu0 0.0
    %1627 = vmatpush2.msra.mxu0 0.0
    %1628 = vmatprep.subr.mxu0 0.0
    %1629 = vmatpush2.msra.mxu0 0.0
    %1630 = vmatprep.subr.mxu0 0.0
    %1631 = vmatpush2.msra.mxu0 0.0
    %1632 = vmatprep.subr.mxu0 0.0
    %1633 = vmatpush2.msra.mxu0 0.0
    %1634 = vmatprep.subr.mxu0 0.0
    %1635 = vmatpush2.msra.mxu0 0.0
    %1636 = vmatprep.subr.mxu0 0.0
    %1637 = vmatpush2.msra.mxu0 0.0
    %1638 = vmatprep.subr.mxu0 0.0
    %1639 = vmatpush2.msra.mxu0 0.0
    %1640 = vmatprep.subr.mxu0 0.0
    %1641 = vmatpush2.msra.mxu0 0.0
    %1642 = vmatprep.subr.mxu0 0.0
    %1643 = vmatpush2.msra.mxu0 0.0
    %1644 = vmatprep.subr.mxu0 0.0
    %1645 = vmatpush2.msra.mxu0 0.0
    %1646 = vmatprep.subr.mxu0 0.0
    %1647 = vmatpush2.msra.mxu0 0.0
    %1648 = vmatprep.subr.mxu0 0.0
    %1649 = vmatpush2.msra.mxu0 0.0
    %1650 = vmatprep.subr.mxu0 0.0
    %1651 = vmatpush2.msra.mxu0 0.0
    %1652 = vmatprep.subr.mxu0 0.0
    %1653 = vmatpush2.msra.mxu0 0.0
    %1654 = vmatprep.subr.mxu0 0.0
    %1655 = vmatpush2.msra.mxu0 0.0
    %1656 = vmatprep.mubr.f32.mxu0 0.0
    %1657 = vmatmul.mubr.f32.gmra.mxu0 %v1590
    %v1658 = vpop.f32.mrf.mxu0
    %v1659 = vadd.f32 %v1584, %v1658
    %v1660 = vpop.f32.mrf.mxu0
    %1661 = vdwg.mxu0
    %v1662 = vadd.f32 %v1659, %v596
    %v1663 = vmul.f32 %v1662, 0.5
    %v1664 = vtanh.pop %v1663
    %v1665 = vadd.f32 %v1664, 1.0
    %v1666 = vmul.f32 %v1665, 0.5
    %v1667 = vtanh.pop %v1662
    %v1668 = vmul.f32 %v1666, %v1413
    %1670 = vrot.lane.b32.xlu0 %v1667, 32
    %v1671 = vpop.permute.xlu0 %1670
    %v1673 = vmul.f32 %v1666, %v1671
    %1675 = vrot.lane.b32.xlu0 %v1673, 32
    %v1676 = vpop.permute.xlu0 %1675
    %v1678 = vadd.f32 %v1668, %v1676
    %v1679 = vtanh.pop %v1678
    %1681 = vrot.lane.b32.xlu0 %v1679, 32
    %v1682 = vpop.permute.xlu0 %1681
    %v1684 = vmul.f32 %v1666, %v1682
    %1686 = vrot.lane.b32.xlu0 %v1516, 64
    %v1687 = vpop.permute.xlu0 %1686
    %v1688 = vsel %vm252, %v1687, 0
    %1690 = vmatprep.subr.mxu0 0.0
    %1691 = vmatpush1.msra.mxu0 0.0
    %1692 = vmatprep.subr.mxu0 0.0
    %1693 = vmatpush1.msra.mxu0 0.0
    %1694 = vmatprep.subr.mxu0 0.0
    %1695 = vmatpush1.msra.mxu0 0.0
    %1696 = vmatprep.subr.mxu0 0.0
    %1697 = vmatpush1.msra.mxu0 0.0
    %1698 = vmatprep.subr.mxu0 0.0
    %1699 = vmatpush1.msra.mxu0 0.0
    %1700 = vmatprep.subr.mxu0 0.0
    %1701 = vmatpush1.msra.mxu0 0.0
    %1702 = vmatprep.subr.mxu0 0.0
    %1703 = vmatpush1.msra.mxu0 0.0
    %1704 = vmatprep.subr.mxu0 0.0
    %1705 = vmatpush1.msra.mxu0 0.0
    %1706 = vmatprep.subr.mxu0 0.0
    %1707 = vmatpush1.msra.mxu0 0.0
    %1708 = vmatprep.subr.mxu0 0.0
    %1709 = vmatpush1.msra.mxu0 0.0
    %1710 = vmatprep.subr.mxu0 0.0
    %1711 = vmatpush1.msra.mxu0 0.0
    %1712 = vmatprep.subr.mxu0 0.0
    %1713 = vmatpush1.msra.mxu0 0.0
    %1714 = vmatprep.subr.mxu0 0.0
    %1715 = vmatpush1.msra.mxu0 %v95
    %1716 = vmatprep.subr.mxu0 0.0
    %1717 = vmatpush1.msra.mxu0 %v94
    %1718 = vmatprep.subr.mxu0 0.0
    %1719 = vmatpush1.msra.mxu0 %v93
    %1720 = vmatprep.subr.mxu0 0.0
    %1721 = vmatpush1.msra.mxu0 %v92
    %1722 = vmatprep.subr.mxu0 0.0
    %1723 = vmatpush2.msra.mxu0 0.0
    %1724 = vmatprep.subr.mxu0 0.0
    %1725 = vmatpush2.msra.mxu0 0.0
    %1726 = vmatprep.subr.mxu0 0.0
    %1727 = vmatpush2.msra.mxu0 0.0
    %1728 = vmatprep.subr.mxu0 0.0
    %1729 = vmatpush2.msra.mxu0 0.0
    %1730 = vmatprep.subr.mxu0 0.0
    %1731 = vmatpush2.msra.mxu0 0.0
    %1732 = vmatprep.subr.mxu0 0.0
    %1733 = vmatpush2.msra.mxu0 0.0
    %1734 = vmatprep.subr.mxu0 0.0
    %1735 = vmatpush2.msra.mxu0 0.0
    %1736 = vmatprep.subr.mxu0 0.0
    %1737 = vmatpush2.msra.mxu0 0.0
    %1738 = vmatprep.subr.mxu0 0.0
    %1739 = vmatpush2.msra.mxu0 0.0
    %1740 = vmatprep.subr.mxu0 0.0
    %1741 = vmatpush2.msra.mxu0 0.0
    %1742 = vmatprep.subr.mxu0 0.0
    %1743 = vmatpush2.msra.mxu0 0.0
    %1744 = vmatprep.subr.mxu0 0.0
    %1745 = vmatpush2.msra.mxu0 0.0
    %1746 = vmatprep.subr.mxu0 0.0
    %1747 = vmatpush2.msra.mxu0 0.0
    %1748 = vmatprep.subr.mxu0 0.0
    %1749 = vmatpush2.msra.mxu0 0.0
    %1750 = vmatprep.subr.mxu0 0.0
    %1751 = vmatpush2.msra.mxu0 0.0
    %1752 = vmatprep.subr.mxu0 0.0
    %1753 = vmatpush2.msra.mxu0 0.0
    %1754 = vmatprep.mubr.f32.mxu0 0.0
    %1755 = vmatmul.mubr.f32.gmra.mxu0 %v1688
    %v1756 = vpop.f32.mrf.mxu0
    %v1757 = vadd.f32 %v238, %v1756
    %v1758 = vpop.f32.mrf.mxu0
    %1759 = vdwg.mxu0
    %v1760 = vmul.f32 %v1757, 0.5
    %v1761 = vtanh.pop %v1760
    %v1762 = vadd.f32 %v1761, 1.0
    %v1763 = vmul.f32 %v1762, 0.5
    %v1764 = vtanh.pop %v1757
    %v1765 = vmul.f32 %v1763, %v1510
    %1767 = vrot.lane.b32.xlu0 %v1764, 32
    %v1768 = vpop.permute.xlu0 %1767
    %v1770 = vmul.f32 %v1763, %v1768
    %1772 = vrot.lane.b32.xlu0 %v1770, 32
    %v1773 = vpop.permute.xlu0 %1772
    %v1775 = vadd.f32 %v1765, %v1773
    %v1776 = vtanh.pop %v1775
    %1778 = vrot.lane.b32.xlu0 %v1776, 32
    %v1779 = vpop.permute.xlu0 %1778
    %v1781 = vmul.f32 %v1763, %v1779
    %1782 = vmatprep.subr.mxu0 0.0
    %1783 = vmatpush1.msra.mxu0 0.0
    %1784 = vmatprep.subr.mxu0 0.0
    %1785 = vmatpush1.msra.mxu0 0.0
    %1786 = vmatprep.subr.mxu0 0.0
    %1787 = vmatpush1.msra.mxu0 0.0
    %1788 = vmatprep.subr.mxu0 0.0
    %1789 = vmatpush1.msra.mxu0 0.0
    %1790 = vmatprep.subr.mxu0 0.0
    %1791 = vmatpush1.msra.mxu0 0.0
    %1792 = vmatprep.subr.mxu0 0.0
    %1793 = vmatpush1.msra.mxu0 0.0
    %1794 = vmatprep.subr.mxu0 0.0
    %1795 = vmatpush1.msra.mxu0 0.0
    %1796 = vmatprep.subr.mxu0 0.0
    %1797 = vmatpush1.msra.mxu0 0.0
    %1798 = vmatprep.subr.mxu0 0.0
    %1799 = vmatpush1.msra.mxu0 0.0
    %1800 = vmatprep.subr.mxu0 0.0
    %1801 = vmatpush1.msra.mxu0 0.0
    %1802 = vmatprep.subr.mxu0 0.0
    %1803 = vmatpush1.msra.mxu0 0.0
    %1804 = vmatprep.subr.mxu0 0.0
    %1805 = vmatpush1.msra.mxu0 0.0
    %1806 = vmatprep.subr.mxu0 0.0
    %1807 = vmatpush1.msra.mxu0 %v91
    %1808 = vmatprep.subr.mxu0 0.0
    %1809 = vmatpush1.msra.mxu0 %v90
    %1810 = vmatprep.subr.mxu0 0.0
    %1811 = vmatpush1.msra.mxu0 %v89
    %1812 = vmatprep.subr.mxu0 0.0
    %1813 = vmatpush1.msra.mxu0 %v88
    %1814 = vmatprep.subr.mxu0 0.0
    %1815 = vmatpush2.msra.mxu0 0.0
    %1816 = vmatprep.subr.mxu0 0.0
    %1817 = vmatpush2.msra.mxu0 0.0
    %1818 = vmatprep.subr.mxu0 0.0
    %1819 = vmatpush2.msra.mxu0 0.0
    %1820 = vmatprep.subr.mxu0 0.0
    %1821 = vmatpush2.msra.mxu0 0.0
    %1822 = vmatprep.subr.mxu0 0.0
    %1823 = vmatpush2.msra.mxu0 0.0
    %1824 = vmatprep.subr.mxu0 0.0
    %1825 = vmatpush2.msra.mxu0 0.0
    %1826 = vmatprep.subr.mxu0 0.0
    %1827 = vmatpush2.msra.mxu0 0.0
    %1828 = vmatprep.subr.mxu0 0.0
    %1829 = vmatpush2.msra.mxu0 0.0
    %1830 = vmatprep.subr.mxu0 0.0
    %1831 = vmatpush2.msra.mxu0 0.0
    %1832 = vmatprep.subr.mxu0 0.0
    %1833 = vmatpush2.msra.mxu0 0.0
    %1834 = vmatprep.subr.mxu0 0.0
    %1835 = vmatpush2.msra.mxu0 0.0
    %1836 = vmatprep.subr.mxu0 0.0
    %1837 = vmatpush2.msra.mxu0 0.0
    %1838 = vmatprep.subr.mxu0 0.0
    %1839 = vmatpush2.msra.mxu0 0.0
    %1840 = vmatprep.subr.mxu0 0.0
    %1841 = vmatpush2.msra.mxu0 0.0
    %1842 = vmatprep.subr.mxu0 0.0
    %1843 = vmatpush2.msra.mxu0 0.0
    %1844 = vmatprep.subr.mxu0 0.0
    %1845 = vmatpush2.msra.mxu0 0.0
    %1846 = vmatprep.mubr.f32.mxu0 0.0
    %1847 = vmatmul.mubr.f32.gmra.mxu0 %v1688
    %v1848 = vpop.f32.mrf.mxu0
    %v1849 = vadd.f32 0.0, %v1848
    %v1850 = vpop.f32.mrf.mxu0
    %1851 = vdwg.mxu0
    %1853 = vrot.lane.b32.xlu0 %v1684, 64
    %v1854 = vpop.permute.xlu0 %1853
    %v1855 = vsel %vm252, %v1854, 0
    %1857 = vmatprep.subr.mxu0 0.0
    %1858 = vmatpush1.msra.mxu0 0.0
    %1859 = vmatprep.subr.mxu0 0.0
    %1860 = vmatpush1.msra.mxu0 0.0
    %1861 = vmatprep.subr.mxu0 0.0
    %1862 = vmatpush1.msra.mxu0 0.0
    %1863 = vmatprep.subr.mxu0 0.0
    %1864 = vmatpush1.msra.mxu0 0.0
    %1865 = vmatprep.subr.mxu0 0.0
    %1866 = vmatpush1.msra.mxu0 0.0
    %1867 = vmatprep.subr.mxu0 0.0
    %1868 = vmatpush1.msra.mxu0 0.0
    %1869 = vmatprep.subr.mxu0 0.0
    %1870 = vmatpush1.msra.mxu0 0.0
    %1871 = vmatprep.subr.mxu0 0.0
    %1872 = vmatpush1.msra.mxu0 0.0
    %1873 = vmatprep.subr.mxu0 0.0
    %1874 = vmatpush1.msra.mxu0 0.0
    %1875 = vmatprep.subr.mxu0 0.0
    %1876 = vmatpush1.msra.mxu0 0.0
    %1877 = vmatprep.subr.mxu0 0.0
    %1878 = vmatpush1.msra.mxu0 0.0
    %1879 = vmatprep.subr.mxu0 0.0
    %1880 = vmatpush1.msra.mxu0 0.0
    %1881 = vmatprep.subr.mxu0 0.0
    %1882 = vmatpush1.msra.mxu0 %v99
    %1883 = vmatprep.subr.mxu0 0.0
    %1884 = vmatpush1.msra.mxu0 %v98
    %1885 = vmatprep.subr.mxu0 0.0
    %1886 = vmatpush1.msra.mxu0 %v97
    %1887 = vmatprep.subr.mxu0 0.0
    %1888 = vmatpush1.msra.mxu0 %v96
    %1889 = vmatprep.subr.mxu0 0.0
    %1890 = vmatpush2.msra.mxu0 0.0
    %1891 = vmatprep.subr.mxu0 0.0
    %1892 = vmatpush2.msra.mxu0 0.0
    %1893 = vmatprep.subr.mxu0 0.0
    %1894 = vmatpush2.msra.mxu0 0.0
    %1895 = vmatprep.subr.mxu0 0.0
    %1896 = vmatpush2.msra.mxu0 0.0
    %1897 = vmatprep.subr.mxu0 0.0
    %1898 = vmatpush2.msra.mxu0 0.0
    %1899 = vmatprep.subr.mxu0 0.0
    %1900 = vmatpush2.msra.mxu0 0.0
    %1901 = vmatprep.subr.mxu0 0.0
    %1902 = vmatpush2.msra.mxu0 0.0
    %1903 = vmatprep.subr.mxu0 0.0
    %1904 = vmatpush2.msra.mxu0 0.0
    %1905 = vmatprep.subr.mxu0 0.0
    %1906 = vmatpush2.msra.mxu0 0.0
    %1907 = vmatprep.subr.mxu0 0.0
    %1908 = vmatpush2.msra.mxu0 0.0
    %1909 = vmatprep.subr.mxu0 0.0
    %1910 = vmatpush2.msra.mxu0 0.0
    %1911 = vmatprep.subr.mxu0 0.0
    %1912 = vmatpush2.msra.mxu0 0.0
    %1913 = vmatprep.subr.mxu0 0.0
    %1914 = vmatpush2.msra.mxu0 0.0
    %1915 = vmatprep.subr.mxu0 0.0
    %1916 = vmatpush2.msra.mxu0 0.0
    %1917 = vmatprep.subr.mxu0 0.0
    %1918 = vmatpush2.msra.mxu0 0.0
    %1919 = vmatprep.subr.mxu0 0.0
    %1920 = vmatpush2.msra.mxu0 0.0
    %1921 = vmatprep.mubr.f32.mxu0 0.0
    %1922 = vmatmul.mubr.f32.gmra.mxu0 %v1855
    %v1923 = vpop.f32.mrf.mxu0
    %v1924 = vadd.f32 %v1849, %v1923
    %v1925 = vpop.f32.mrf.mxu0
    %1926 = vdwg.mxu0
    %v1927 = vadd.f32 %v1924, %v596
    %v1928 = vmul.f32 %v1927, 0.5
    %v1929 = vtanh.pop %v1928
    %v1930 = vadd.f32 %v1929, 1.0
    %v1931 = vmul.f32 %v1930, 0.5
    %v1932 = vtanh.pop %v1927
    %v1933 = vmul.f32 %v1931, %v1678
    %1935 = vrot.lane.b32.xlu0 %v1932, 32
    %v1936 = vpop.permute.xlu0 %1935
    %v1938 = vmul.f32 %v1931, %v1936
    %1940 = vrot.lane.b32.xlu0 %v1938, 32
    %v1941 = vpop.permute.xlu0 %1940
    %v1943 = vadd.f32 %v1933, %v1941
    %v1944 = vtanh.pop %v1943
    %1946 = vrot.lane.b32.xlu0 %v1944, 32
    %v1947 = vpop.permute.xlu0 %1946
    %v1949 = vmul.f32 %v1931, %v1947
    %1951 = vrot.lane.b32.xlu0 %v1781, 64
    %v1952 = vpop.permute.xlu0 %1951
    %v1953 = vsel %vm252, %v1952, 0
    %1955 = vmatprep.subr.mxu0 0.0
    %1956 = vmatpush1.msra.mxu0 0.0
    %1957 = vmatprep.subr.mxu0 0.0
    %1958 = vmatpush1.msra.mxu0 0.0
    %1959 = vmatprep.subr.mxu0 0.0
    %1960 = vmatpush1.msra.mxu0 0.0
    %1961 = vmatprep.subr.mxu0 0.0
    %1962 = vmatpush1.msra.mxu0 0.0
    %1963 = vmatprep.subr.mxu0 0.0
    %1964 = vmatpush1.msra.mxu0 0.0
    %1965 = vmatprep.subr.mxu0 0.0
    %1966 = vmatpush1.msra.mxu0 0.0
    %1967 = vmatprep.subr.mxu0 0.0
    %1968 = vmatpush1.msra.mxu0 0.0
    %1969 = vmatprep.subr.mxu0 0.0
    %1970 = vmatpush1.msra.mxu0 0.0
    %1971 = vmatprep.subr.mxu0 0.0
    %1972 = vmatpush1.msra.mxu0 0.0
    %1973 = vmatprep.subr.mxu0 0.0
    %1974 = vmatpush1.msra.mxu0 0.0
    %1975 = vmatprep.subr.mxu0 0.0
    %1976 = vmatpush1.msra.mxu0 0.0
    %1977 = vmatprep.subr.mxu0 0.0
    %1978 = vmatpush1.msra.mxu0 0.0
    %1979 = vmatprep.subr.mxu0 0.0
    %1980 = vmatpush1.msra.mxu0 %v95
    %1981 = vmatprep.subr.mxu0 0.0
    %1982 = vmatpush1.msra.mxu0 %v94
    %1983 = vmatprep.subr.mxu0 0.0
    %1984 = vmatpush1.msra.mxu0 %v93
    %1985 = vmatprep.subr.mxu0 0.0
    %1986 = vmatpush1.msra.mxu0 %v92
    %1987 = vmatprep.subr.mxu0 0.0
    %1988 = vmatpush2.msra.mxu0 0.0
    %1989 = vmatprep.subr.mxu0 0.0
    %1990 = vmatpush2.msra.mxu0 0.0
    %1991 = vmatprep.subr.mxu0 0.0
    %1992 = vmatpush2.msra.mxu0 0.0
    %1993 = vmatprep.subr.mxu0 0.0
    %1994 = vmatpush2.msra.mxu0 0.0
    %1995 = vmatprep.subr.mxu0 0.0
    %1996 = vmatpush2.msra.mxu0 0.0
    %1997 = vmatprep.subr.mxu0 0.0
    %1998 = vmatpush2.msra.mxu0 0.0
    %1999 = vmatprep.subr.mxu0 0.0
    %2000 = vmatpush2.msra.mxu0 0.0
    %2001 = vmatprep.subr.mxu0 0.0
    %2002 = vmatpush2.msra.mxu0 0.0
    %2003 = vmatprep.subr.mxu0 0.0
    %2004 = vmatpush2.msra.mxu0 0.0
    %2005 = vmatprep.subr.mxu0 0.0
    %2006 = vmatpush2.msra.mxu0 0.0
    %2007 = vmatprep.subr.mxu0 0.0
    %2008 = vmatpush2.msra.mxu0 0.0
    %2009 = vmatprep.subr.mxu0 0.0
    %2010 = vmatpush2.msra.mxu0 0.0
    %2011 = vmatprep.subr.mxu0 0.0
    %2012 = vmatpush2.msra.mxu0 0.0
    %2013 = vmatprep.subr.mxu0 0.0
    %2014 = vmatpush2.msra.mxu0 0.0
    %2015 = vmatprep.subr.mxu0 0.0
    %2016 = vmatpush2.msra.mxu0 0.0
    %2017 = vmatprep.subr.mxu0 0.0
    %2018 = vmatpush2.msra.mxu0 0.0
    %2019 = vmatprep.mubr.f32.mxu0 0.0
    %2020 = vmatmul.mubr.f32.gmra.mxu0 %v1953
    %v2021 = vpop.f32.mrf.mxu0
    %v2022 = vadd.f32 %v243, %v2021
    %v2023 = vpop.f32.mrf.mxu0
    %2024 = vdwg.mxu0
    %v2025 = vmul.f32 %v2022, 0.5
    %v2026 = vtanh.pop %v2025
    %v2027 = vadd.f32 %v2026, 1.0
    %v2028 = vmul.f32 %v2027, 0.5
    %v2029 = vtanh.pop %v2022
    %v2030 = vmul.f32 %v2028, %v1775
    %2032 = vrot.lane.b32.xlu0 %v2029, 32
    %v2033 = vpop.permute.xlu0 %2032
    %v2035 = vmul.f32 %v2028, %v2033
    %2037 = vrot.lane.b32.xlu0 %v2035, 32
    %v2038 = vpop.permute.xlu0 %2037
    %v2040 = vadd.f32 %v2030, %v2038
    %v2041 = vtanh.pop %v2040
    %2043 = vrot.lane.b32.xlu0 %v2041, 32
    %v2044 = vpop.permute.xlu0 %2043
    %v2046 = vmul.f32 %v2028, %v2044
    %2047 = vmatprep.subr.mxu0 0.0
    %2048 = vmatpush1.msra.mxu0 0.0
    %2049 = vmatprep.subr.mxu0 0.0
    %2050 = vmatpush1.msra.mxu0 0.0
    %2051 = vmatprep.subr.mxu0 0.0
    %2052 = vmatpush1.msra.mxu0 0.0
    %2053 = vmatprep.subr.mxu0 0.0
    %2054 = vmatpush1.msra.mxu0 0.0
    %2055 = vmatprep.subr.mxu0 0.0
    %2056 = vmatpush1.msra.mxu0 0.0
    %2057 = vmatprep.subr.mxu0 0.0
    %2058 = vmatpush1.msra.mxu0 0.0
    %2059 = vmatprep.subr.mxu0 0.0
    %2060 = vmatpush1.msra.mxu0 0.0
    %2061 = vmatprep.subr.mxu0 0.0
    %2062 = vmatpush1.msra.mxu0 0.0
    %2063 = vmatprep.subr.mxu0 0.0
    %2064 = vmatpush1.msra.mxu0 0.0
    %2065 = vmatprep.subr.mxu0 0.0
    %2066 = vmatpush1.msra.mxu0 0.0
    %2067 = vmatprep.subr.mxu0 0.0
    %2068 = vmatpush1.msra.mxu0 0.0
    %2069 = vmatprep.subr.mxu0 0.0
    %2070 = vmatpush1.msra.mxu0 0.0
    %2071 = vmatprep.subr.mxu0 0.0
    %2072 = vmatpush1.msra.mxu0 %v91
    %2073 = vmatprep.subr.mxu0 0.0
    %2074 = vmatpush1.msra.mxu0 %v90
    %2075 = vmatprep.subr.mxu0 0.0
    %2076 = vmatpush1.msra.mxu0 %v89
    %2077 = vmatprep.subr.mxu0 0.0
    %2078 = vmatpush1.msra.mxu0 %v88
    %2079 = vmatprep.subr.mxu0 0.0
    %2080 = vmatpush2.msra.mxu0 0.0
    %2081 = vmatprep.subr.mxu0 0.0
    %2082 = vmatpush2.msra.mxu0 0.0
    %2083 = vmatprep.subr.mxu0 0.0
    %2084 = vmatpush2.msra.mxu0 0.0
    %2085 = vmatprep.subr.mxu0 0.0
    %2086 = vmatpush2.msra.mxu0 0.0
    %2087 = vmatprep.subr.mxu0 0.0
    %2088 = vmatpush2.msra.mxu0 0.0
    %2089 = vmatprep.subr.mxu0 0.0
    %2090 = vmatpush2.msra.mxu0 0.0
    %2091 = vmatprep.subr.mxu0 0.0
    %2092 = vmatpush2.msra.mxu0 0.0
    %2093 = vmatprep.subr.mxu0 0.0
    %2094 = vmatpush2.msra.mxu0 0.0
    %2095 = vmatprep.subr.mxu0 0.0
    %2096 = vmatpush2.msra.mxu0 0.0
    %2097 = vmatprep.subr.mxu0 0.0
    %2098 = vmatpush2.msra.mxu0 0.0
    %2099 = vmatprep.subr.mxu0 0.0
    %2100 = vmatpush2.msra.mxu0 0.0
    %2101 = vmatprep.subr.mxu0 0.0
    %2102 = vmatpush2.msra.mxu0 0.0
    %2103 = vmatprep.subr.mxu0 0.0
    %2104 = vmatpush2.msra.mxu0 0.0
    %2105 = vmatprep.subr.mxu0 0.0
    %2106 = vmatpush2.msra.mxu0 0.0
    %2107 = vmatprep.subr.mxu0 0.0
    %2108 = vmatpush2.msra.mxu0 0.0
    %2109 = vmatprep.subr.mxu0 0.0
    %2110 = vmatpush2.msra.mxu0 0.0
    %2111 = vmatprep.mubr.f32.mxu0 0.0
    %2112 = vmatmul.mubr.f32.gmra.mxu0 %v1953
    %v2113 = vpop.f32.mrf.mxu0
    %v2114 = vadd.f32 0.0, %v2113
    %v2115 = vpop.f32.mrf.mxu0
    %2116 = vdwg.mxu0
    %2118 = vrot.lane.b32.xlu0 %v1949, 64
    %v2119 = vpop.permute.xlu0 %2118
    %v2120 = vsel %vm252, %v2119, 0
    %2122 = vmatprep.subr.mxu0 0.0
    %2123 = vmatpush1.msra.mxu0 0.0
    %2124 = vmatprep.subr.mxu0 0.0
    %2125 = vmatpush1.msra.mxu0 0.0
    %2126 = vmatprep.subr.mxu0 0.0
    %2127 = vmatpush1.msra.mxu0 0.0
    %2128 = vmatprep.subr.mxu0 0.0
    %2129 = vmatpush1.msra.mxu0 0.0
    %2130 = vmatprep.subr.mxu0 0.0
    %2131 = vmatpush1.msra.mxu0 0.0
    %2132 = vmatprep.subr.mxu0 0.0
    %2133 = vmatpush1.msra.mxu0 0.0
    %2134 = vmatprep.subr.mxu0 0.0
    %2135 = vmatpush1.msra.mxu0 0.0
    %2136 = vmatprep.subr.mxu0 0.0
    %2137 = vmatpush1.msra.mxu0 0.0
    %2138 = vmatprep.subr.mxu0 0.0
    %2139 = vmatpush1.msra.mxu0 0.0
    %2140 = vmatprep.subr.mxu0 0.0
    %2141 = vmatpush1.msra.mxu0 0.0
    %2142 = vmatprep.subr.mxu0 0.0
    %2143 = vmatpush1.msra.mxu0 0.0
    %2144 = vmatprep.subr.mxu0 0.0
    %2145 = vmatpush1.msra.mxu0 0.0
    %2146 = vmatprep.subr.mxu0 0.0
    %2147 = vmatpush1.msra.mxu0 %v99
    %2148 = vmatprep.subr.mxu0 0.0
    %2149 = vmatpush1.msra.mxu0 %v98
    %2150 = vmatprep.subr.mxu0 0.0
    %2151 = vmatpush1.msra.mxu0 %v97
    %2152 = vmatprep.subr.mxu0 0.0
    %2153 = vmatpush1.msra.mxu0 %v96
    %2154 = vmatprep.subr.mxu0 0.0
    %2155 = vmatpush2.msra.mxu0 0.0
    %2156 = vmatprep.subr.mxu0 0.0
    %2157 = vmatpush2.msra.mxu0 0.0
    %2158 = vmatprep.subr.mxu0 0.0
    %2159 = vmatpush2.msra.mxu0 0.0
    %2160 = vmatprep.subr.mxu0 0.0
    %2161 = vmatpush2.msra.mxu0 0.0
    %2162 = vmatprep.subr.mxu0 0.0
    %2163 = vmatpush2.msra.mxu0 0.0
    %2164 = vmatprep.subr.mxu0 0.0
    %2165 = vmatpush2.msra.mxu0 0.0
    %2166 = vmatprep.subr.mxu0 0.0
    %2167 = vmatpush2.msra.mxu0 0.0
    %2168 = vmatprep.subr.mxu0 0.0
    %2169 = vmatpush2.msra.mxu0 0.0
    %2170 = vmatprep.subr.mxu0 0.0
    %2171 = vmatpush2.msra.mxu0 0.0
    %2172 = vmatprep.subr.mxu0 0.0
    %2173 = vmatpush2.msra.mxu0 0.0
    %2174 = vmatprep.subr.mxu0 0.0
    %2175 = vmatpush2.msra.mxu0 0.0
    %2176 = vmatprep.subr.mxu0 0.0
    %2177 = vmatpush2.msra.mxu0 0.0
    %2178 = vmatprep.subr.mxu0 0.0
    %2179 = vmatpush2.msra.mxu0 0.0
    %2180 = vmatprep.subr.mxu0 0.0
    %2181 = vmatpush2.msra.mxu0 0.0
    %2182 = vmatprep.subr.mxu0 0.0
    %2183 = vmatpush2.msra.mxu0 0.0
    %2184 = vmatprep.subr.mxu0 0.0
    %2185 = vmatpush2.msra.mxu0 0.0
    %2186 = vmatprep.mubr.f32.mxu0 0.0
    %2187 = vmatmul.mubr.f32.gmra.mxu0 %v2120
    %v2188 = vpop.f32.mrf.mxu0
    %v2189 = vadd.f32 %v2114, %v2188
    %v2190 = vpop.f32.mrf.mxu0
    %2191 = vdwg.mxu0
    %v2192 = vadd.f32 %v2189, %v596
    %v2193 = vmul.f32 %v2192, 0.5
    %v2194 = vtanh.pop %v2193
    %v2195 = vadd.f32 %v2194, 1.0
    %v2196 = vmul.f32 %v2195, 0.5
    %v2197 = vtanh.pop %v2192
    %v2198 = vmul.f32 %v2196, %v1943
    %2200 = vrot.lane.b32.xlu0 %v2197, 32
    %v2201 = vpop.permute.xlu0 %2200
    %v2203 = vmul.f32 %v2196, %v2201
    %2205 = vrot.lane.b32.xlu0 %v2203, 32
    %v2206 = vpop.permute.xlu0 %2205
    %v2208 = vadd.f32 %v2198, %v2206
    %v2209 = vtanh.pop %v2208
    %2211 = vrot.lane.b32.xlu0 %v2209, 32
    %v2212 = vpop.permute.xlu0 %2211
    %v2214 = vmul.f32 %v2196, %v2212
    %2216 = vrot.lane.b32.xlu0 %v2046, 64
    %v2217 = vpop.permute.xlu0 %2216
    %v2218 = vsel %vm252, %v2217, 0
    %2220 = vmatprep.subr.mxu0 0.0
    %2221 = vmatpush1.msra.mxu0 0.0
    %2222 = vmatprep.subr.mxu0 0.0
    %2223 = vmatpush1.msra.mxu0 0.0
    %2224 = vmatprep.subr.mxu0 0.0
    %2225 = vmatpush1.msra.mxu0 0.0
    %2226 = vmatprep.subr.mxu0 0.0
    %2227 = vmatpush1.msra.mxu0 0.0
    %2228 = vmatprep.subr.mxu0 0.0
    %2229 = vmatpush1.msra.mxu0 0.0
    %2230 = vmatprep.subr.mxu0 0.0
    %2231 = vmatpush1.msra.mxu0 0.0
    %2232 = vmatprep.subr.mxu0 0.0
    %2233 = vmatpush1.msra.mxu0 0.0
    %2234 = vmatprep.subr.mxu0 0.0
    %2235 = vmatpush1.msra.mxu0 0.0
    %2236 = vmatprep.subr.mxu0 0.0
    %2237 = vmatpush1.msra.mxu0 0.0
    %2238 = vmatprep.subr.mxu0 0.0
    %2239 = vmatpush1.msra.mxu0 0.0
    %2240 = vmatprep.subr.mxu0 0.0
    %2241 = vmatpush1.msra.mxu0 0.0
    %2242 = vmatprep.subr.mxu0 0.0
    %2243 = vmatpush1.msra.mxu0 0.0
    %2244 = vmatprep.subr.mxu0 0.0
    %2245 = vmatpush1.msra.mxu0 %v91
    %2246 = vmatprep.subr.mxu0 0.0
    %2247 = vmatpush1.msra.mxu0 %v90
    %2248 = vmatprep.subr.mxu0 0.0
    %2249 = vmatpush1.msra.mxu0 %v89
    %2250 = vmatprep.subr.mxu0 0.0
    %2251 = vmatpush1.msra.mxu0 %v88
    %2252 = vmatprep.subr.mxu0 0.0
    %2253 = vmatpush2.msra.mxu0 0.0
    %2254 = vmatprep.subr.mxu0 0.0
    %2255 = vmatpush2.msra.mxu0 0.0
    %2256 = vmatprep.subr.mxu0 0.0
    %2257 = vmatpush2.msra.mxu0 0.0
    %2258 = vmatprep.subr.mxu0 0.0
    %2259 = vmatpush2.msra.mxu0 0.0
    %2260 = vmatprep.subr.mxu0 0.0
    %2261 = vmatpush2.msra.mxu0 0.0
    %2262 = vmatprep.subr.mxu0 0.0
    %2263 = vmatpush2.msra.mxu0 0.0
    %2264 = vmatprep.subr.mxu0 0.0
    %2265 = vmatpush2.msra.mxu0 0.0
    %2266 = vmatprep.subr.mxu0 0.0
    %2267 = vmatpush2.msra.mxu0 0.0
    %2268 = vmatprep.subr.mxu0 0.0
    %2269 = vmatpush2.msra.mxu0 0.0
    %2270 = vmatprep.subr.mxu0 0.0
    %2271 = vmatpush2.msra.mxu0 0.0
    %2272 = vmatprep.subr.mxu0 0.0
    %2273 = vmatpush2.msra.mxu0 0.0
    %2274 = vmatprep.subr.mxu0 0.0
    %2275 = vmatpush2.msra.mxu0 0.0
    %2276 = vmatprep.subr.mxu0 0.0
    %2277 = vmatpush2.msra.mxu0 0.0
    %2278 = vmatprep.subr.mxu0 0.0
    %2279 = vmatpush2.msra.mxu0 0.0
    %2280 = vmatprep.subr.mxu0 0.0
    %2281 = vmatpush2.msra.mxu0 0.0
    %2282 = vmatprep.subr.mxu0 0.0
    %2283 = vmatpush2.msra.mxu0 0.0
    %2284 = vmatprep.mubr.f32.mxu0 0.0
    %2285 = vmatmul.mubr.f32.gmra.mxu0 %v2218
    %v2286 = vpop.f32.mrf.mxu0
    %v2287 = vadd.f32 0.0, %v2286
    %v2288 = vpop.f32.mrf.mxu0
    %2289 = vdwg.mxu0
    %2291 = vrot.lane.b32.xlu0 %v2214, 64
    %v2292 = vpop.permute.xlu0 %2291
    %v2293 = vsel %vm252, %v2292, 0
    %2295 = vmatprep.subr.mxu0 0.0
    %2296 = vmatpush1.msra.mxu0 0.0
    %2297 = vmatprep.subr.mxu0 0.0
    %2298 = vmatpush1.msra.mxu0 0.0
    %2299 = vmatprep.subr.mxu0 0.0
    %2300 = vmatpush1.msra.mxu0 0.0
    %2301 = vmatprep.subr.mxu0 0.0
    %2302 = vmatpush1.msra.mxu0 0.0
    %2303 = vmatprep.subr.mxu0 0.0
    %2304 = vmatpush1.msra.mxu0 0.0
    %2305 = vmatprep.subr.mxu0 0.0
    %2306 = vmatpush1.msra.mxu0 0.0
    %2307 = vmatprep.subr.mxu0 0.0
    %2308 = vmatpush1.msra.mxu0 0.0
    %2309 = vmatprep.subr.mxu0 0.0
    %2310 = vmatpush1.msra.mxu0 0.0
    %2311 = vmatprep.subr.mxu0 0.0
    %2312 = vmatpush1.msra.mxu0 0.0
    %2313 = vmatprep.subr.mxu0 0.0
    %2314 = vmatpush1.msra.mxu0 0.0
    %2315 = vmatprep.subr.mxu0 0.0
    %2316 = vmatpush1.msra.mxu0 0.0
    %2317 = vmatprep.subr.mxu0 0.0
    %2318 = vmatpush1.msra.mxu0 0.0
    %2319 = vmatprep.subr.mxu0 0.0
    %2320 = vmatpush1.msra.mxu0 %v99
    %2321 = vmatprep.subr.mxu0 0.0
    %2322 = vmatpush1.msra.mxu0 %v98
    %2323 = vmatprep.subr.mxu0 0.0
    %2324 = vmatpush1.msra.mxu0 %v97
    %2325 = vmatprep.subr.mxu0 0.0
    %2326 = vmatpush1.msra.mxu0 %v96
    %2327 = vmatprep.subr.mxu0 0.0
    %2328 = vmatpush2.msra.mxu0 0.0
    %2329 = vmatprep.subr.mxu0 0.0
    %2330 = vmatpush2.msra.mxu0 0.0
    %2331 = vmatprep.subr.mxu0 0.0
    %2332 = vmatpush2.msra.mxu0 0.0
    %2333 = vmatprep.subr.mxu0 0.0
    %2334 = vmatpush2.msra.mxu0 0.0
    %2335 = vmatprep.subr.mxu0 0.0
    %2336 = vmatpush2.msra.mxu0 0.0
    %2337 = vmatprep.subr.mxu0 0.0
    %2338 = vmatpush2.msra.mxu0 0.0
    %2339 = vmatprep.subr.mxu0 0.0
    %2340 = vmatpush2.msra.mxu0 0.0
    %2341 = vmatprep.subr.mxu0 0.0
    %2342 = vmatpush2.msra.mxu0 0.0
    %2343 = vmatprep.subr.mxu0 0.0
    %2344 = vmatpush2.msra.mxu0 0.0
    %2345 = vmatprep.subr.mxu0 0.0
    %2346 = vmatpush2.msra.mxu0 0.0
    %2347 = vmatprep.subr.mxu0 0.0
    %2348 = vmatpush2.msra.mxu0 0.0
    %2349 = vmatprep.subr.mxu0 0.0
    %2350 = vmatpush2.msra.mxu0 0.0
    %2351 = vmatprep.subr.mxu0 0.0
    %2352 = vmatpush2.msra.mxu0 0.0
    %2353 = vmatprep.subr.mxu0 0.0
    %2354 = vmatpush2.msra.mxu0 0.0
    %2355 = vmatprep.subr.mxu0 0.0
    %2356 = vmatpush2.msra.mxu0 0.0
    %2357 = vmatprep.subr.mxu0 0.0
    %2358 = vmatpush2.msra.mxu0 0.0
    %2359 = vmatprep.mubr.f32.mxu0 0.0
    %2360 = vmatmul.mubr.f32.gmra.mxu0 %v2293
    %v2361 = vpop.f32.mrf.mxu0
    %v2362 = vadd.f32 %v2287, %v2361
    %v2363 = vpop.f32.mrf.mxu0
    %2364 = vdwg.mxu0
    %v2365 = vadd.f32 %v2362, %v596
    %v2366 = vmul.f32 %v2365, 0.5
    %v2367 = vtanh.pop %v2366
    %v2368 = vadd.f32 %v2367, 1.0
    %v2369 = vmul.f32 %v2368, 0.5
    %v2370 = vtanh.pop %v2365
    %v2371 = vmul.f32 %v2369, %v2208
    %2373 = vrot.lane.b32.xlu0 %v2370, 32
    %v2374 = vpop.permute.xlu0 %2373
    %v2376 = vmul.f32 %v2369, %v2374
    %2378 = vrot.lane.b32.xlu0 %v2376, 32
    %v2379 = vpop.permute.xlu0 %2378
    %v2381 = vadd.f32 %v2371, %v2379
    %v2382 = vtanh.pop %v2381
    %2384 = vrot.lane.b32.xlu0 %v2382, 32
    %v2385 = vpop.permute.xlu0 %2384
    %v2387 = vmul.f32 %v2369, %v2385
    %2389 = vst.msk [vmem:[#allocation9] sm:$0xff] %vm252, %v2217
    %2391 = vrot.lane.b32.xlu0 %v2040, 96
    %v2392 = vpop.permute.xlu0 %2391
    %2394 = vst.msk [vmem:[#allocation10] sm:$0xff] %vm252, %v2392
    %2396 = vrot.lane.b32.xlu0 %v2387, 64
    %v2397 = vpop.permute.xlu0 %2396
    %s2399 = scalar_lea.vmem [#allocation9], 8
    %2400 = vst.msk [vmem:[%s2399] sm:$0xff] %vm252, %v2397
    %2402 = vrot.lane.b32.xlu0 %v2381, 96
    %v2403 = vpop.permute.xlu0 %2402
    %s2405 = scalar_lea.vmem [#allocation10], 8
    %2406 = vst.msk [vmem:[%s2405] sm:$0xff] %vm252, %v2403
    %v2407 = vld [vmem:[%s9] sm:$0xff]
    %v2408 = vld [vmem:[%s9 + $0x8] sm:$0xff]
    %v2409 = vld [vmem:[%s9 + $0x10] sm:$0xff]
    %v2410 = vld [vmem:[%s9 + $0x18] sm:$0xff]
    %v2411 = vld [vmem:[#allocation2] sm:$0x1]
    %v2413 = vlaneseq
    %v2414 = vshrl.u32 %v2413, 7
    %v2415 = vsub.s32 0, %v2414
    %v2416 = vrot.slane %v2411, %v2415
    %v2418 = vsel %vm252, %v2397, 0
    %2420 = vmatprep.subr.mxu0 0.0
    %2421 = vmatpush1.msra.mxu0 0.0
    %2422 = vmatprep.subr.mxu0 0.0
    %2423 = vmatpush1.msra.mxu0 0.0
    %2424 = vmatprep.subr.mxu0 0.0
    %2425 = vmatpush1.msra.mxu0 0.0
    %2426 = vmatprep.subr.mxu0 0.0
    %2427 = vmatpush1.msra.mxu0 0.0
    %2428 = vmatprep.subr.mxu0 0.0
    %2429 = vmatpush1.msra.mxu0 0.0
    %2430 = vmatprep.subr.mxu0 0.0
    %2431 = vmatpush1.msra.mxu0 0.0
    %2432 = vmatprep.subr.mxu0 0.0
    %2433 = vmatpush1.msra.mxu0 0.0
    %2434 = vmatprep.subr.mxu0 0.0
    %2435 = vmatpush1.msra.mxu0 0.0
    %2436 = vmatprep.subr.mxu0 0.0
    %2437 = vmatpush1.msra.mxu0 0.0
    %2438 = vmatprep.subr.mxu0 0.0
    %2439 = vmatpush1.msra.mxu0 0.0
    %2440 = vmatprep.subr.mxu0 0.0
    %2441 = vmatpush1.msra.mxu0 0.0
    %2442 = vmatprep.subr.mxu0 0.0
    %2443 = vmatpush1.msra.mxu0 0.0
    %2444 = vmatprep.subr.mxu0 0.0
    %2445 = vmatpush1.msra.mxu0 %v2410
    %2446 = vmatprep.subr.mxu0 0.0
    %2447 = vmatpush1.msra.mxu0 %v2409
    %2448 = vmatprep.subr.mxu0 0.0
    %2449 = vmatpush1.msra.mxu0 %v2408
    %2450 = vmatprep.subr.mxu0 0.0
    %2451 = vmatpush1.msra.mxu0 %v2407
    %2452 = vmatprep.subr.mxu0 0.0
    %2453 = vmatpush2.msra.mxu0 0.0
    %2454 = vmatprep.subr.mxu0 0.0
    %2455 = vmatpush2.msra.mxu0 0.0
    %2456 = vmatprep.subr.mxu0 0.0
    %2457 = vmatpush2.msra.mxu0 0.0
    %2458 = vmatprep.subr.mxu0 0.0
    %2459 = vmatpush2.msra.mxu0 0.0
    %2460 = vmatprep.subr.mxu0 0.0
    %2461 = vmatpush2.msra.mxu0 0.0
    %2462 = vmatprep.subr.mxu0 0.0
    %2463 = vmatpush2.msra.mxu0 0.0
    %2464 = vmatprep.subr.mxu0 0.0
    %2465 = vmatpush2.msra.mxu0 0.0
    %2466 = vmatprep.subr.mxu0 0.0
    %2467 = vmatpush2.msra.mxu0 0.0
    %2468 = vmatprep.subr.mxu0 0.0
    %2469 = vmatpush2.msra.mxu0 0.0
    %2470 = vmatprep.subr.mxu0 0.0
    %2471 = vmatpush2.msra.mxu0 0.0
    %2472 = vmatprep.subr.mxu0 0.0
    %2473 = vmatpush2.msra.mxu0 0.0
    %2474 = vmatprep.subr.mxu0 0.0
    %2475 = vmatpush2.msra.mxu0 0.0
    %2476 = vmatprep.subr.mxu0 0.0
    %2477 = vmatpush2.msra.mxu0 0.0
    %2478 = vmatprep.subr.mxu0 0.0
    %2479 = vmatpush2.msra.mxu0 0.0
    %2480 = vmatprep.subr.mxu0 0.0
    %2481 = vmatpush2.msra.mxu0 0.0
    %2482 = vmatprep.subr.mxu0 0.0
    %2483 = vmatpush2.msra.mxu0 0.0
    %2484 = vmatprep.mubr.f32.mxu0 0.0
    %2485 = vmatmul.mubr.f32.gmra.mxu0 %v2418
    %v2486 = vpop.f32.mrf.mxu0
    %v2487 = vadd.f32 %v2416, %v2486
    %v2488 = vpop.f32.mrf.mxu0
    %2489 = vdwg.mxu0
    %vm2490 = vcmask 7168
    %2491 = vst.msk [vmem:[%s11] sm:$0xff] %vm2490, %v2487
    // Predicated region
    $region58: #{tpu_custom_call.1} parent=1 // pred_check
      _
    $region59: #{tpu_custom_call.1} parent=1 // pred_check_branch
      %2493 = sbr.rel (0) target = $region61
    $region60: #{tpu_custom_call.1} parent=1 // pred_region
      _
    $region61: #{tpu_custom_call.1} parent=1 // pred_fallthru
      _
    // Predicated region
    $region62: #{tpu_custom_call.1} parent=1 // pred_check
      _
    $region63: #{tpu_custom_call.1} parent=1 // pred_check_branch
      %2495 = sbr.rel (0) target = $region65
    $region64: #{tpu_custom_call.1} parent=1 // pred_region
      %s2497 = ssub.s32 256, 256
      %2498 = vsyncadd [#allocation5], %s2497
      %s2499 = sshll.u32 [#allocation9], 4
      %s2500 = int_to_ptr.vmem [resolvable:$true] %s2499
      %2505 = dma.vmem_to_hbm [thread:$0]  %s2500, 256, %s12, [#allocation5], 128, 128, 8
    $region65: #{tpu_custom_call.1} parent=1 // pred_fallthru
      _
    // Predicated region
    $region66: #{tpu_custom_call.1} parent=1 // pred_check
      _
    $region67: #{tpu_custom_call.1} parent=1 // pred_check_branch
      %2507 = sbr.rel (0) target = $region69
    $region68: #{tpu_custom_call.1} parent=1 // pred_region
      %s2509 = ssub.s32 256, 256
      %2510 = vsyncadd [#allocation11], %s2509
      %s2511 = sshll.u32 [#allocation10], 4
      %s2512 = int_to_ptr.vmem [resolvable:$true] %s2511
      %2517 = dma.vmem_to_hbm [thread:$0]  %s2512, 256, %s13, [#allocation11], 128, 128, 8
    $region69: #{tpu_custom_call.1} parent=1 // pred_fallthru
      _
    // Predicated region
    $region70: #{tpu_custom_call.1} parent=1 // pred_check
      _
    $region71: #{tpu_custom_call.1} parent=1 // pred_check_branch
      %2519 = sbr.rel (0) target = $region73
    $region72: #{tpu_custom_call.1} parent=1 // pred_region
      _
    $region73: #{tpu_custom_call.1} parent=1 // pred_fallthru
      _
    // Predicated region
    $region74: #{tpu_custom_call.1} parent=1 // pred_check
      _
    $region75: #{tpu_custom_call.1} parent=1 // pred_check_branch
      %2521 = sbr.rel (0) target = $region77
    $region76: #{tpu_custom_call.1} parent=1 // pred_region
      %2522 = dma.done [#allocation5], 256
    $region77: #{tpu_custom_call.1} parent=1 // pred_fallthru
      _
    // Predicated region
    $region78: #{tpu_custom_call.1} parent=1 // pred_check
      _
    $region79: #{tpu_custom_call.1} parent=1 // pred_check_branch
      %2524 = sbr.rel (0) target = $region81
    $region80: #{tpu_custom_call.1} parent=1 // pred_region
      %2525 = dma.done [#allocation11], 256
    $region81: #{tpu_custom_call.1} parent=1 // pred_fallthru
      _
    %2526 = vsyncpa [#allocation4], 1
    %2527 = vsyncpa [#allocation7], 1
    %2528 = vsyncpa [#allocation5], 1
    %2529 = vsyncpa [#allocation11], 1

</llo_original>
